<compile_context>
chip_gen: v7x
topology: tpu7x:2x2x1
jax: 0.10.0
libtpu: 0.0.40
codegen_flags: <defaults>
</compile_context>

<pallas_src>
import functools

import jax
import jax.numpy as jnp
from jax.experimental import pallas as pl
from jax.experimental.pallas import tpu as pltpu


def _pointnet_kernel(x_ref, w1_ref, b1_ref, w2_ref, b2_ref, w3_ref, b3_ref,
                     g_ref, x128_ref, *, n_points, tn):
    n_idx = pl.program_id(1)
    last_n = pl.num_programs(1) - 1
    rem = n_points % tn                                     # static Python int

    x = x_ref[0]                                            # (TN, 3) f32

    # conv1(k=1)+bn1: K=3 contraction as 3 VPU broadcast-FMAs (keeps MXU free
    # for conv3, which owns >95% of the FLOPs).
    h1 = (x[:, 0:1] * w1_ref[0:1, :]
          + x[:, 1:2] * w1_ref[1:2, :]
          + x[:, 2:3] * w1_ref[2:3, :]
          + b1_ref[...])
    h1 = jnp.maximum(h1, 0.0)                               # (TN, 64) f32

    # conv2(k=1)+bn2: bf16 inputs, f32 MXU accumulation (single MXU pass instead of
    # a multi-pass f32 emulation); K=64 keeps x128 well inside tolerance.
    h2 = jnp.dot(h1.astype(jnp.bfloat16), w2_ref[...],
                 preferred_element_type=jnp.float32) + b2_ref[...]
    h2 = jnp.maximum(h2, 0.0)                               # (TN, 128) f32

    # extra = GlobalTransformIndentityGlobalV(): identity on its first argument, so
    # 0.9*h2 + 0.1*h2 == h2 (<=1 ulp); the blend is dropped per perf review.
    # TODO(synk): GlobalTransformDepthSep (sizes is not None branch) is not defined
    # in the reference source, so only the identity branch is implemented.
    x128_t = jnp.transpose(h2)                              # (128, TN) — XLU transpose,
                                                            # lets us emit (B,128,N) directly.

    # conv3(k=1)+bn3 issued ONCE (the first bn3(conv3) in the PyTorch forward only
    # feeds the identity `extra` and equals this one since x128 == h2).
    # bf16 inputs, f32 accumulation; b3 added per-column AFTER the max (exact).
    h3 = jnp.dot(h2.astype(jnp.bfloat16), w3_ref[...],
                 preferred_element_type=jnp.float32)        # (TN, 1024)

    # Running max accumulated in the resident (1,1,1024) output block.
    @pl.when(n_idx == 0)
    def _():
        g_ref[0] = jnp.full((1, g_ref.shape[2]), -jnp.inf, jnp.float32)

    if rem == 0:
        g_ref[0] = jnp.maximum(g_ref[0], jnp.max(h3, axis=0, keepdims=True))
        x128_ref[0] = x128_t
    else:
        # Partial last tile: masking runs ONLY on the last grid step, so full tiles
        # never pay the (TN,1024)/-inf and (128,TN)/zero selects on the VALU slot.
        @pl.when(n_idx != last_n)
        def _():
            g_ref[0] = jnp.maximum(g_ref[0], jnp.max(h3, axis=0, keepdims=True))
            x128_ref[0] = x128_t

        @pl.when(n_idx == last_n)
        def _():
            rows = jax.lax.broadcasted_iota(jnp.int32, (tn, 1), 0)
            h3_m = jnp.where(rows < rem, h3, -jnp.inf)
            g_ref[0] = jnp.maximum(g_ref[0], jnp.max(h3_m, axis=0, keepdims=True))
            cols = jax.lax.broadcasted_iota(jnp.int32, (1, tn), 1)
            x128_ref[0] = jnp.where(cols < rem, x128_t, 0.0)

    @pl.when(n_idx == last_n)
    def _():
        g_ref[0] = g_ref[0] + b3_ref[...]                   # per-column bias after max


def pointnetfeat_return2(x_bcn, folded_params, *, tn=2048):
    """x_bcn: (B, 3, N) float32, PyTorch NCW convention. Returns (g (B,1024), x128 (B,128,N))."""
    w1, b1, w2, b2, w3, b3 = folded_params
    B, cin, N = x_bcn.shape
    assert cin == 3
    tn = min(tn, N)
    assert tn == N or tn % 128 == 0, "tn must be a multiple of 128 (or the full N)"
    num_n = pl.cdiv(N, tn)

    # TODO(synk): conv1 could consume the native (B,3,N) layout directly (saves
    # ~24 B/point of HBM traffic); low priority per review, kept as a wrapper transpose.
    x_bnc = jnp.transpose(x_bcn, (0, 2, 1))                 # (B, N, 3)
    w2_bf = w2.astype(jnp.bfloat16)                         # bf16 MXU inputs
    w3_bf = w3.astype(jnp.bfloat16)

    flops = 2 * B * N * (3 * 64 + 64 * 128 + 128 * 1024)
    bytes_accessed = (x_bnc.size * 4 + B * N * 128 * 4 + B * 1024 * 4
                      + w1.size * 4 + b1.size * 4 + w2.size * 2 + b2.size * 4
                      + w3.size * 2 + b3.size * 4)

    kernel = functools.partial(_pointnet_kernel, n_points=N, tn=tn)

    g, x128_bcn = pl.pallas_call(
        kernel,
        out_shape=(
            jax.ShapeDtypeStruct((B, 1, 1024), jnp.float32),
            jax.ShapeDtypeStruct((B, 128, N), jnp.float32),  # channels-first, no wrapper transpose
        ),
        grid_spec=pltpu.PrefetchScalarGridSpec(
            num_scalar_prefetch=0,
            grid=(B, num_n),
            in_specs=[
                pl.BlockSpec((1, tn, cin), lambda b, n: (b, n, 0)),
                pl.BlockSpec((cin, 64), lambda b, n: (0, 0)),
                pl.BlockSpec((1, 64), lambda b, n: (0, 0)),
                pl.BlockSpec((64, 128), lambda b, n: (0, 0)),
                pl.BlockSpec((1, 128), lambda b, n: (0, 0)),
                pl.BlockSpec((128, 1024), lambda b, n: (0, 0)),
                pl.BlockSpec((1, 1024), lambda b, n: (0, 0)),
            ],
            out_specs=[
                pl.BlockSpec((1, 1, 1024), lambda b, n: (b, 0, 0)),
                pl.BlockSpec((1, 128, tn), lambda b, n: (b, 0, n)),
            ],
        ),
        compiler_params=pltpu.CompilerParams(
            dimension_semantics=("parallel", "arbitrary"),
            vmem_limit_bytes=32 * 1024 * 1024),
        cost_estimate=pl.CostEstimate(flops=flops, transcendentals=0,
                                      bytes_accessed=bytes_accessed),
    )(x_bnc, w1, b1, w2_bf, b2, w3_bf, b3)

    g = g.reshape(B, 1024)                                  # x.view(-1, 1024)
    return g, x128_bcn


def _fold_conv_bn(w, b, gamma, beta, mean, var, eps=1e-5):
    """conv1d(k=1) weight (cout, cin), bias (cout,), BN eval-mode params ->
    channels-last folded weight (cin, cout) and bias (1, cout)."""
    s = gamma / jnp.sqrt(var + eps)                         # (cout,)
    w_f = jnp.transpose(w * s[:, None])                     # (cin, cout)
    b_f = (s * (b - mean) + beta)[None, :]                  # (1, cout)
    return w_f.astype(jnp.float32), b_f.astype(jnp.float32)


def init_params(key):
    """Deterministic synthetic parameters matching the PyTorch module shapes."""
    ks = jax.random.split(key, 6)

    def conv(k, cin, cout):
        kw, kb = jax.random.split(k)
        w = jax.random.normal(kw, (cout, cin), jnp.float32) / jnp.sqrt(cin)
        b = 0.05 * jax.random.normal(kb, (cout,), jnp.float32)
        return w, b

    def bn(k, c):
        kg, kb, km, kv = jax.random.split(k, 4)
        gamma = 1.0 + 0.1 * jax.random.normal(kg, (c,), jnp.float32)
        beta = 0.1 * jax.random.normal(kb, (c,), jnp.float32)
        mean = 0.1 * jax.random.normal(km, (c,), jnp.float32)
        var = 1.0 + 0.1 * jnp.abs(jax.random.normal(kv, (c,), jnp.float32))
        return gamma, beta, mean, var

    w1, b1 = conv(ks[0], 3, 64)
    w2, b2 = conv(ks[1], 64, 128)
    w3, b3 = conv(ks[2], 128, 1024)
    bn1 = bn(ks[3], 64)
    bn2 = bn(ks[4], 128)
    bn3 = bn(ks[5], 1024)

    w1f, b1f = _fold_conv_bn(w1, b1, *bn1)
    w2f, b2f = _fold_conv_bn(w2, b2, *bn2)
    w3f, b3f = _fold_conv_bn(w3, b3, *bn3)
    return (w1f, b1f, w2f, b2f, w3f, b3f)


def _reference(x_bcn, folded_params):
    """Pure-JAX full-f32 reference of the forward pass (identity `extra`)."""
    w1, b1, w2, b2, w3, b3 = folded_params
    hp = jax.lax.Precision.HIGHEST
    x = jnp.transpose(x_bcn, (0, 2, 1))                     # (B, N, 3)
    h1 = jax.nn.relu(jnp.dot(x, w1, precision=hp) + b1)
    h2 = jax.nn.relu(jnp.dot(h1, w2, precision=hp) + b2)
    x128 = 0.9 * h2 + 0.1 * h2                              # identical to h2 (<=1 ulp)
    g = jnp.max(jnp.dot(x128, w3, precision=hp) + b3, axis=1)
    return g, jnp.transpose(x128, (0, 2, 1))                # x128 in (B, 128, N)


if __name__ == "__main__":
    key = jax.random.PRNGKey(0)
    k_x, k_p = jax.random.split(key)

    B, N = 2, 512
    x = jax.random.normal(k_x, (B, 3, N), jnp.float32)      # PyTorch-style (B, C=3, N)
    params = init_params(k_p)

    fwd = jax.jit(pointnetfeat_return2, static_argnames=("tn",))
    g, x128 = jax.block_until_ready(fwd(x, params))         # tn defaults to min(2048, N)

    g_ref, x128_ref = _reference(x, params)
    assert g.shape == (B, 1024) and x128.shape == (B, 128, N)
    # x128 path: bf16 conv2 inputs with f32 accumulation (K=64) -> small error.
    assert jnp.allclose(x128, x128_ref, atol=2e-2, rtol=2e-2)
    # g path: bf16 conv3 inputs on top of bf16-derived h2 -> looser tolerance.
    assert jnp.allclose(g, g_ref, atol=3e-2, rtol=3e-2)

    print("KERNEL_OK")
</pallas_src>

<mosaic_0001>
module attributes {stable_mosaic.version = 11 : i64} {
  func.func @_pointnet_kernel(%arg0: i32, %arg1: i32, %arg2: memref<1x512x3xf32, #tpu.memory_space<vmem>>, %arg3: memref<3x64xf32, #tpu.memory_space<vmem>>, %arg4: memref<1x64xf32, #tpu.memory_space<vmem>>, %arg5: memref<64x128xbf16, #tpu.memory_space<vmem>>, %arg6: memref<1x128xf32, #tpu.memory_space<vmem>>, %arg7: memref<128x1024xbf16, #tpu.memory_space<vmem>>, %arg8: memref<1x1024xf32, #tpu.memory_space<vmem>>, %arg9: memref<1x1x1024xf32, #tpu.memory_space<vmem>>, %arg10: memref<1x128x512xf32, #tpu.memory_space<vmem>>) attributes {dimension_semantics = [#tpu.dimension_semantics<parallel>, #tpu.dimension_semantics<arbitrary>], iteration_bounds = array<i64: 2, 1>, scalar_prefetch = 0 : i64, scratch_operands = 0 : i64, tpu.core_type = #tpu.core_type<tc>, window_params = [{transform_indices = @transform_0, window_bounds = array<i64: 1, 512, 3>}, {pipeline_mode = #tpu.pipeline_mode<synchronous>, transform_indices = @transform_1, window_bounds = array<i64: 3, 64>}, {pipeline_mode = #tpu.pipeline_mode<synchronous>, transform_indices = @transform_2, window_bounds = array<i64: 1, 64>}, {pipeline_mode = #tpu.pipeline_mode<synchronous>, transform_indices = @transform_3, window_bounds = array<i64: 64, 128>}, {pipeline_mode = #tpu.pipeline_mode<synchronous>, transform_indices = @transform_4, window_bounds = array<i64: 1, 128>}, {pipeline_mode = #tpu.pipeline_mode<synchronous>, transform_indices = @transform_5, window_bounds = array<i64: 128, 1024>}, {pipeline_mode = #tpu.pipeline_mode<synchronous>, transform_indices = @transform_6, window_bounds = array<i64: 1, 1024>}, {transform_indices = @transform_7, window_bounds = array<i64: 1, 1, 1024>}, {transform_indices = @transform_8, window_bounds = array<i64: 1, 128, 512>}]} {
    %c0 = arith.constant 0 : index
    %c0_0 = arith.constant 0 : index
    %c0_1 = arith.constant 0 : index
    %0 = vector.load %arg2[%c0, %c0_0, %c0_1] : memref<1x512x3xf32, #tpu.memory_space<vmem>>, vector<1x512x3xf32>
    %1 = vector.shape_cast %0 : vector<1x512x3xf32> to vector<512x3xf32>
    %2 = vector.extract_strided_slice %1 {offsets = [0, 0], sizes = [512, 1], strides = [1, 1]} : vector<512x3xf32> to vector<512x1xf32>
    %c0_2 = arith.constant 0 : index
    %c0_3 = arith.constant 0 : index
    %3 = vector.load %arg3[%c0_2, %c0_3] : memref<3x64xf32, #tpu.memory_space<vmem>>, vector<1x64xf32>
    %4 = vector.broadcast %2 : vector<512x1xf32> to vector<512x64xf32>
    %5 = vector.broadcast %3 : vector<1x64xf32> to vector<512x64xf32>
    %6 = arith.mulf %4, %5 : vector<512x64xf32>
    %7 = vector.extract_strided_slice %1 {offsets = [0, 1], sizes = [512, 1], strides = [1, 1]} : vector<512x3xf32> to vector<512x1xf32>
    %c1 = arith.constant 1 : index
    %c0_4 = arith.constant 0 : index
    %8 = vector.load %arg3[%c1, %c0_4] : memref<3x64xf32, #tpu.memory_space<vmem>>, vector<1x64xf32>
    %9 = vector.broadcast %7 : vector<512x1xf32> to vector<512x64xf32>
    %10 = vector.broadcast %8 : vector<1x64xf32> to vector<512x64xf32>
    %11 = arith.mulf %9, %10 : vector<512x64xf32>
    %12 = arith.addf %6, %11 : vector<512x64xf32>
    %13 = vector.extract_strided_slice %1 {offsets = [0, 2], sizes = [512, 1], strides = [1, 1]} : vector<512x3xf32> to vector<512x1xf32>
    %c2 = arith.constant 2 : index
    %c0_5 = arith.constant 0 : index
    %14 = vector.load %arg3[%c2, %c0_5] : memref<3x64xf32, #tpu.memory_space<vmem>>, vector<1x64xf32>
    %15 = vector.broadcast %13 : vector<512x1xf32> to vector<512x64xf32>
    %16 = vector.broadcast %14 : vector<1x64xf32> to vector<512x64xf32>
    %17 = arith.mulf %15, %16 : vector<512x64xf32>
    %18 = arith.addf %12, %17 : vector<512x64xf32>
    %c0_6 = arith.constant 0 : index
    %c0_7 = arith.constant 0 : index
    %19 = vector.load %arg4[%c0_6, %c0_7] : memref<1x64xf32, #tpu.memory_space<vmem>>, vector<1x64xf32>
    %20 = vector.broadcast %19 : vector<1x64xf32> to vector<512x64xf32>
    %21 = arith.addf %18, %20 : vector<512x64xf32>
    %cst = arith.constant 0.000000e+00 : f32
    %22 = vector.broadcast %cst : f32 to vector<512x64xf32>
    %23 = arith.maximumf %21, %22 : vector<512x64xf32>
    %24 = arith.truncf %23 : vector<512x64xf32> to vector<512x64xbf16>
    %c0_8 = arith.constant 0 : index
    %c0_9 = arith.constant 0 : index
    %25 = vector.load %arg5[%c0_8, %c0_9] : memref<64x128xbf16, #tpu.memory_space<vmem>>, vector<64x128xbf16>
    %cst_10 = arith.constant dense<0.000000e+00> : vector<512x128xf32>
    %26 = tpu.matmul %24, %25, %cst_10 {dimension_numbers = #tpu.dot_dimension_numbers<[1], [0], [0], [1], [0, 0, 1, 1], [], []>} : vector<512x64xbf16>, vector<64x128xbf16>, vector<512x128xf32> -> vector<512x128xf32>
    %c0_11 = arith.constant 0 : index
    %c0_12 = arith.constant 0 : index
    %27 = vector.load %arg6[%c0_11, %c0_12] : memref<1x128xf32, #tpu.memory_space<vmem>>, vector<1x128xf32>
    %28 = vector.broadcast %27 : vector<1x128xf32> to vector<512x128xf32>
    %29 = arith.addf %26, %28 : vector<512x128xf32>
    %cst_13 = arith.constant 0.000000e+00 : f32
    %30 = vector.broadcast %cst_13 : f32 to vector<512x128xf32>
    %31 = arith.maximumf %29, %30 : vector<512x128xf32>
    %32 = tpu.transpose %31, [1, 0] : vector<512x128xf32> -> vector<128x512xf32>
    %33 = arith.truncf %31 : vector<512x128xf32> to vector<512x128xbf16>
    %c0_14 = arith.constant 0 : index
    %c0_15 = arith.constant 0 : index
    %34 = vector.load %arg7[%c0_14, %c0_15] : memref<128x1024xbf16, #tpu.memory_space<vmem>>, vector<128x1024xbf16>
    %cst_16 = arith.constant dense<0.000000e+00> : vector<512x1024xf32>
    %35 = tpu.matmul %33, %34, %cst_16 {dimension_numbers = #tpu.dot_dimension_numbers<[1], [0], [0], [1], [0, 0, 1, 1], [], []>} : vector<512x128xbf16>, vector<128x1024xbf16>, vector<512x1024xf32> -> vector<512x1024xf32>
    %c0_i32 = arith.constant 0 : i32
    %36 = arith.cmpi eq, %arg1, %c0_i32 : i32
    %37 = arith.extui %36 : i1 to i32
    %c0_i32_17 = arith.constant 0 : i32
    %38 = arith.cmpi ne, %37, %c0_i32_17 : i32
    scf.if %38 {
      %cst_30 = arith.constant 0xFF800000 : f32
      %53 = vector.broadcast %cst_30 : f32 to vector<1x1024xf32>
      %c0_31 = arith.constant 0 : index
      %c0_32 = arith.constant 0 : index
      %c0_33 = arith.constant 0 : index
      %54 = vector.load %arg9[%c0_31, %c0_32, %c0_33] : memref<1x1x1024xf32, #tpu.memory_space<vmem>>, vector<1x1x1024xf32>
      %55 = vector.shape_cast %54 : vector<1x1x1024xf32> to vector<1x1024xf32>
      %56 = vector.shape_cast %53 : vector<1x1024xf32> to vector<1x1x1024xf32>
      tpu.vector_store %arg9[%c0_31, %c0_32, %c0_33], %56 {strides = array<i32>} : memref<1x1x1024xf32, #tpu.memory_space<vmem>>, vector<1x1x1024xf32>,
    } else {
    }
    %c0_18 = arith.constant 0 : index
    %c0_19 = arith.constant 0 : index
    %c0_20 = arith.constant 0 : index
    %39 = vector.load %arg9[%c0_18, %c0_19, %c0_20] : memref<1x1x1024xf32, #tpu.memory_space<vmem>>, vector<1x1x1024xf32>
    %40 = vector.shape_cast %39 : vector<1x1x1024xf32> to vector<1x1024xf32>
    %cst_21 = arith.constant dense<0xFF800000> : vector<1024xf32>
    %41 = vector.multi_reduction <maximumf>, %35, %cst_21 [0] : vector<512x1024xf32> to vector<1024xf32>
    %42 = vector.shape_cast %41 : vector<1024xf32> to vector<1x1024xf32>
    %43 = arith.maximumf %40, %42 : vector<1x1024xf32>
    %c0_22 = arith.constant 0 : index
    %c0_23 = arith.constant 0 : index
    %c0_24 = arith.constant 0 : index
    %44 = vector.load %arg9[%c0_22, %c0_23, %c0_24] : memref<1x1x1024xf32, #tpu.memory_space<vmem>>, vector<1x1x1024xf32>
    %45 = vector.shape_cast %44 : vector<1x1x1024xf32> to vector<1x1024xf32>
    %46 = vector.shape_cast %43 : vector<1x1024xf32> to vector<1x1x1024xf32>
    tpu.vector_store %arg9[%c0_22, %c0_23, %c0_24], %46 {strides = array<i32>} : memref<1x1x1024xf32, #tpu.memory_space<vmem>>, vector<1x1x1024xf32>,
    %c0_25 = arith.constant 0 : index
    %c0_26 = arith.constant 0 : index
    %c0_27 = arith.constant 0 : index
    %47 = vector.load %arg10[%c0_25, %c0_26, %c0_27] : memref<1x128x512xf32, #tpu.memory_space<vmem>>, vector<1x128x512xf32>
    %48 = vector.shape_cast %47 : vector<1x128x512xf32> to vector<128x512xf32>
    %49 = vector.shape_cast %32 : vector<128x512xf32> to vector<1x128x512xf32>
    tpu.vector_store %arg10[%c0_25, %c0_26, %c0_27], %49 {strides = array<i32>} : memref<1x128x512xf32, #tpu.memory_space<vmem>>, vector<1x128x512xf32>,
    %c0_i32_28 = arith.constant 0 : i32
    %50 = arith.cmpi eq, %arg1, %c0_i32_28 : i32
    %51 = arith.extui %50 : i1 to i32
    %c0_i32_29 = arith.constant 0 : i32
    %52 = arith.cmpi ne, %51, %c0_i32_29 : i32
    scf.if %52 {
      %c0_30 = arith.constant 0 : index
      %c0_31 = arith.constant 0 : index
      %c0_32 = arith.constant 0 : index
      %53 = vector.load %arg9[%c0_30, %c0_31, %c0_32] : memref<1x1x1024xf32, #tpu.memory_space<vmem>>, vector<1x1x1024xf32>
      %54 = vector.shape_cast %53 : vector<1x1x1024xf32> to vector<1x1024xf32>
      %c0_33 = arith.constant 0 : index
      %c0_34 = arith.constant 0 : index
      %55 = vector.load %arg8[%c0_33, %c0_34] : memref<1x1024xf32, #tpu.memory_space<vmem>>, vector<1x1024xf32>
      %56 = arith.addf %54, %55 : vector<1x1024xf32>
      %c0_35 = arith.constant 0 : index
      %c0_36 = arith.constant 0 : index
      %c0_37 = arith.constant 0 : index
      %57 = vector.load %arg9[%c0_35, %c0_36, %c0_37] : memref<1x1x1024xf32, #tpu.memory_space<vmem>>, vector<1x1x1024xf32>
      %58 = vector.shape_cast %57 : vector<1x1x1024xf32> to vector<1x1024xf32>
      %59 = vector.shape_cast %56 : vector<1x1024xf32> to vector<1x1x1024xf32>
      tpu.vector_store %arg9[%c0_35, %c0_36, %c0_37], %59 {strides = array<i32>} : memref<1x1x1024xf32, #tpu.memory_space<vmem>>, vector<1x1x1024xf32>,
    } else {
    }
    return
  }
  func.func @transform_0(%arg0: i32, %arg1: i32) -> (i32, i32, i32) {
    %c0_i32 = arith.constant 0 : i32
    %c0_i32_0 = arith.constant 0 : i32
    return %arg0, %arg1, %c0_i32 : i32, i32, i32
  }
  func.func @transform_1(%arg0: i32, %arg1: i32) -> (i32, i32) {
    %c0_i32 = arith.constant 0 : i32
    %c0_i32_0 = arith.constant 0 : i32
    %c0_i32_1 = arith.constant 0 : i32
    return %c0_i32, %c0_i32_0 : i32, i32
  }
  func.func @transform_2(%arg0: i32, %arg1: i32) -> (i32, i32) {
    %c0_i32 = arith.constant 0 : i32
    %c0_i32_0 = arith.constant 0 : i32
    %c0_i32_1 = arith.constant 0 : i32
    return %c0_i32, %c0_i32_0 : i32, i32
  }
  func.func @transform_3(%arg0: i32, %arg1: i32) -> (i32, i32) {
    %c0_i32 = arith.constant 0 : i32
    %c0_i32_0 = arith.constant 0 : i32
    %c0_i32_1 = arith.constant 0 : i32
    return %c0_i32, %c0_i32_0 : i32, i32
  }
  func.func @transform_4(%arg0: i32, %arg1: i32) -> (i32, i32) {
    %c0_i32 = arith.constant 0 : i32
    %c0_i32_0 = arith.constant 0 : i32
    %c0_i32_1 = arith.constant 0 : i32
    return %c0_i32, %c0_i32_0 : i32, i32
  }
  func.func @transform_5(%arg0: i32, %arg1: i32) -> (i32, i32) {
    %c0_i32 = arith.constant 0 : i32
    %c0_i32_0 = arith.constant 0 : i32
    %c0_i32_1 = arith.constant 0 : i32
    return %c0_i32, %c0_i32_0 : i32, i32
  }
  func.func @transform_6(%arg0: i32, %arg1: i32) -> (i32, i32) {
    %c0_i32 = arith.constant 0 : i32
    %c0_i32_0 = arith.constant 0 : i32
    %c0_i32_1 = arith.constant 0 : i32
    return %c0_i32, %c0_i32_0 : i32, i32
  }
  func.func @transform_7(%arg0: i32, %arg1: i32) -> (i32, i32, i32) {
    %c0_i32 = arith.constant 0 : i32
    %c0_i32_0 = arith.constant 0 : i32
    %c0_i32_1 = arith.constant 0 : i32
    return %arg0, %c0_i32, %c0_i32_0 : i32, i32, i32
  }
  func.func @transform_8(%arg0: i32, %arg1: i32) -> (i32, i32, i32) {
    %c0_i32 = arith.constant 0 : i32
    %c0_i32_0 = arith.constant 0 : i32
    return %arg0, %c0_i32, %arg1 : i32, i32, i32
  }
}

</mosaic_0001>

<llo_original>
// kernel: pointnetfeat_return2.1
$region0: #{pointnetfeat_return2.1}
  #allocation0 [shape = 'u32[]', space=smem, size = 0x4, offset = 0x4, fixed_abs, tag = 'smem constant byte address 0x4 - core index']
  #allocation1 [shape = 'u32[144,128]{1,0:T(1,128)}', space=vmem, size = 0x12000, scoped, tag = 'internal scratch']
  %s0 = inlined_call_operand.vmem [shape: f32[2,512,3], index: 0, kind: input, shape index: {}]
  %s1 = inlined_call_operand.vmem [shape: f32[3,64], index: 1, kind: input, shape index: {}]
  %s2 = inlined_call_operand.vmem [shape: f32[1,64], index: 2, kind: input, shape index: {}]
  %s3 = inlined_call_operand.vmem [shape: bf16[64,128], index: 3, kind: input, shape index: {}]
  %s4 = inlined_call_operand.vmem [shape: f32[1,128], index: 4, kind: input, shape index: {}]
  %s5 = inlined_call_operand.vmem [shape: bf16[128,1024], index: 5, kind: input, shape index: {}]
  %s6 = inlined_call_operand.vmem [shape: f32[1,1024], index: 6, kind: input, shape index: {}]
  %s7 = inlined_call_operand.vmem [shape: f32[2,1,1024], index: 7, kind: output, shape index: {0}]
  %s8 = inlined_call_operand.hbm [shape: f32[2,128,512], index: 8, kind: output, shape index: {1}]
  %9 = xla_tuple %s7, %s8
  %s10 = sld [smem:[#allocation0]]
  $region77: #{pointnetfeat_return2.1} parent=0
    _
  %s12 = ssub.s32 1, %s10
  %s13 = scalar_select 0, %s12, %s10
  $region1: #{pointnetfeat_return2.1} parent=0
    #allocation2 [shape = 'u8[524288]{0}', space=vmem, size = 0x80000, scoped, tag = 'output window, operand 1']
    #allocation3 [shape = 's32[2]{0}', space=sflag, size = 0x8, scoped, tag = 'scoped memory for pointnetfeat_return2.1']
    %14 = vsyncpa [#allocation3], 0
    %s15 = scalar_lea.sflag [#allocation3], 1
    %16 = vsyncpa %s15, 0
    loop: start=0, step=1, limit=4
    $region2: #{pointnetfeat_return2.1} parent=1 // loop_pre_header
      _
    $region3: #{pointnetfeat_return2.1} parent=1 // loop_header
      %s18 = sphi 0, %s22
      %p19 = scmp.ge.s32.totalorder %s18, 4
      %s25 = sphi 0, %s37
      %s26 = sphi 0, %s33
      %s27 = sphi 0, %s25
      %s28 = sphi 0, %s26
      %s29 = sphi 0, %s27
      %s30 = sphi 0, %s28
      %s42 = sphi 0, %s44
      %s45 = sphi 0, %s42
      %s46 = sphi 0, %s45
      %s62 = sphi 0, %s46
      %s66 = sphi 0, %s66
      %s68 = sphi 0, %s66
      %s69 = sphi 0, %s68
      %s83 = sphi 0, %s69
      %s87 = sphi 0, %s87
      %s89 = sphi 0, %s87
      %s90 = sphi 0, %s89
      %s104 = sphi 0, %s90
      %s108 = sphi 0, %s108
      %s110 = sphi 0, %s108
      %s111 = sphi 0, %s110
      %s125 = sphi 0, %s111
      %s129 = sphi 0, %s129
      %s131 = sphi 0, %s129
      %s132 = sphi 0, %s131
      %s146 = sphi 0, %s132
      %s150 = sphi 0, %s150
      %s152 = sphi 0, %s150
      %s153 = sphi 0, %s152
      %s167 = sphi 0, %s153
      %s171 = sphi 0, %s171
      %s173 = sphi 0, %s171
      %s174 = sphi 0, %s173
      %s188 = sphi 0, %s174
      %s194 = sphi 0, %s196
      %s197 = sphi 0, %s194
      %s198 = sphi 0, %s197
      %s214 = sphi 0, %s198
      %s222 = sphi 0, %s224
      %s225 = sphi 0, %s222
      %s226 = sphi 0, %s225
      %s242 = sphi 0, %s226
    $region4: #{pointnetfeat_return2.1} parent=1 // loop_header_branch
      %21 = sbr.rel (%p19) target = $region8
    $region5: #{pointnetfeat_return2.1} parent=1 // loop_body
      %s23 = ssub.s32 %s18, 1
      %s24 = ssub.s32 %s18, 2
      %s31 = sadd.s32 1, %s26
      %p32 = scmp.ge.s32.totalorder %s31, 1
      %s33 = scalar_select %p32, 0, %s31
      %s34 = sadd.s32 1, %s25
      %s35 = scalar_select %p32, %s34, %s25
      %p36 = scmp.ge.s32.totalorder %s35, 2
      %s37 = scalar_select %p36, 0, %s35
      %s38 = ssub.s32 %s25, %s37
      %s39 = ssub.s32 %s26, %s33
      %s40 = sor.u32 %s38, %s39
      %p41 = scmp.eq.s32.totalorder %s40, 0
      %s43 = sadd.s32 %s42, 1
      %s44 = scalar_select %p41, %s42, %s43
      %p47 = pneg %p41
      %p48 = scmp.eq.s32.totalorder %s18, 1
      %p49 = por %p47, %p48
      %p50 = scmp.ne.s32.totalorder %s42, %s45
      %p51 = scmp.eq.s32.totalorder %s18, 0
      %p52 = por %p50, %p51
      %p53 = scmp.ne.s32.totalorder %s42, %s45
      %p54 = scmp.eq.s32.totalorder %s23, 1
      %p55 = por %p53, %p54
      %p56 = scmp.ne.s32.totalorder %s45, %s46
      %p57 = scmp.eq.s32.totalorder %s23, 0
      %p58 = por %p56, %p57
      %p59 = scmp.ne.s32.totalorder %s45, %s46
      %p60 = scmp.eq.s32.totalorder %s24, 1
      %p61 = por %p59, %p60
      %p63 = scmp.ne.s32.totalorder %s46, %s62
      %p64 = scmp.eq.s32.totalorder %s24, 0
      %p65 = por %p63, %p64
      %s67 = sadd.s32 %s66, 1
      %p70 = scmp.eq.s32.totalorder %s18, 1
      %p71 = scmp.ne.s32.totalorder %s66, %s68
      %p72 = scmp.eq.s32.totalorder %s18, 0
      %p73 = por %p71, %p72
      %p74 = scmp.ne.s32.totalorder %s66, %s68
      %p75 = scmp.eq.s32.totalorder %s23, 1
      %p76 = por %p74, %p75
      %p77 = scmp.ne.s32.totalorder %s68, %s69
      %p78 = scmp.eq.s32.totalorder %s23, 0
      %p79 = por %p77, %p78
      %p80 = scmp.ne.s32.totalorder %s68, %s69
      %p81 = scmp.eq.s32.totalorder %s24, 1
      %p82 = por %p80, %p81
      %p84 = scmp.ne.s32.totalorder %s69, %s83
      %p85 = scmp.eq.s32.totalorder %s24, 0
      %p86 = por %p84, %p85
      %s88 = sadd.s32 %s87, 1
      %p91 = scmp.eq.s32.totalorder %s18, 1
      %p92 = scmp.ne.s32.totalorder %s87, %s89
      %p93 = scmp.eq.s32.totalorder %s18, 0
      %p94 = por %p92, %p93
      %p95 = scmp.ne.s32.totalorder %s87, %s89
      %p96 = scmp.eq.s32.totalorder %s23, 1
      %p97 = por %p95, %p96
      %p98 = scmp.ne.s32.totalorder %s89, %s90
      %p99 = scmp.eq.s32.totalorder %s23, 0
      %p100 = por %p98, %p99
      %p101 = scmp.ne.s32.totalorder %s89, %s90
      %p102 = scmp.eq.s32.totalorder %s24, 1
      %p103 = por %p101, %p102
      %p105 = scmp.ne.s32.totalorder %s90, %s104
      %p106 = scmp.eq.s32.totalorder %s24, 0
      %p107 = por %p105, %p106
      %s109 = sadd.s32 %s108, 1
      %p112 = scmp.eq.s32.totalorder %s18, 1
      %p113 = scmp.ne.s32.totalorder %s108, %s110
      %p114 = scmp.eq.s32.totalorder %s18, 0
      %p115 = por %p113, %p114
      %p116 = scmp.ne.s32.totalorder %s108, %s110
      %p117 = scmp.eq.s32.totalorder %s23, 1
      %p118 = por %p116, %p117
      %p119 = scmp.ne.s32.totalorder %s110, %s111
      %p120 = scmp.eq.s32.totalorder %s23, 0
      %p121 = por %p119, %p120
      %p122 = scmp.ne.s32.totalorder %s110, %s111
      %p123 = scmp.eq.s32.totalorder %s24, 1
      %p124 = por %p122, %p123
      %p126 = scmp.ne.s32.totalorder %s111, %s125
      %p127 = scmp.eq.s32.totalorder %s24, 0
      %p128 = por %p126, %p127
      %s130 = sadd.s32 %s129, 1
      %p133 = scmp.eq.s32.totalorder %s18, 1
      %p134 = scmp.ne.s32.totalorder %s129, %s131
      %p135 = scmp.eq.s32.totalorder %s18, 0
      %p136 = por %p134, %p135
      %p137 = scmp.ne.s32.totalorder %s129, %s131
      %p138 = scmp.eq.s32.totalorder %s23, 1
      %p139 = por %p137, %p138
      %p140 = scmp.ne.s32.totalorder %s131, %s132
      %p141 = scmp.eq.s32.totalorder %s23, 0
      %p142 = por %p140, %p141
      %p143 = scmp.ne.s32.totalorder %s131, %s132
      %p144 = scmp.eq.s32.totalorder %s24, 1
      %p145 = por %p143, %p144
      %p147 = scmp.ne.s32.totalorder %s132, %s146
      %p148 = scmp.eq.s32.totalorder %s24, 0
      %p149 = por %p147, %p148
      %s151 = sadd.s32 %s150, 1
      %p154 = scmp.eq.s32.totalorder %s18, 1
      %p155 = scmp.ne.s32.totalorder %s150, %s152
      %p156 = scmp.eq.s32.totalorder %s18, 0
      %p157 = por %p155, %p156
      %p158 = scmp.ne.s32.totalorder %s150, %s152
      %p159 = scmp.eq.s32.totalorder %s23, 1
      %p160 = por %p158, %p159
      %p161 = scmp.ne.s32.totalorder %s152, %s153
      %p162 = scmp.eq.s32.totalorder %s23, 0
      %p163 = por %p161, %p162
      %p164 = scmp.ne.s32.totalorder %s152, %s153
      %p165 = scmp.eq.s32.totalorder %s24, 1
      %p166 = por %p164, %p165
      %p168 = scmp.ne.s32.totalorder %s153, %s167
      %p169 = scmp.eq.s32.totalorder %s24, 0
      %p170 = por %p168, %p169
      %s172 = sadd.s32 %s171, 1
      %p175 = scmp.eq.s32.totalorder %s18, 1
      %p176 = scmp.ne.s32.totalorder %s171, %s173
      %p177 = scmp.eq.s32.totalorder %s18, 0
      %p178 = por %p176, %p177
      %p179 = scmp.ne.s32.totalorder %s171, %s173
      %p180 = scmp.eq.s32.totalorder %s23, 1
      %p181 = por %p179, %p180
      %p182 = scmp.ne.s32.totalorder %s173, %s174
      %p183 = scmp.eq.s32.totalorder %s23, 0
      %p184 = por %p182, %p183
      %p185 = scmp.ne.s32.totalorder %s173, %s174
      %p186 = scmp.eq.s32.totalorder %s24, 1
      %p187 = por %p185, %p186
      %p189 = scmp.ne.s32.totalorder %s174, %s188
      %p190 = scmp.eq.s32.totalorder %s24, 0
      %p191 = por %p189, %p190
      %s192 = ssub.s32 %s25, %s37
      %p193 = scmp.eq.s32.totalorder %s192, 0
      %s195 = sadd.s32 %s194, 1
      %s196 = scalar_select %p193, %s194, %s195
      %p199 = pneg %p193
      %p200 = scmp.eq.s32.totalorder %s18, 1
      %p201 = por %p199, %p200
      %p202 = scmp.ne.s32.totalorder %s194, %s197
      %p203 = scmp.eq.s32.totalorder %s18, 0
      %p204 = por %p202, %p203
      %p205 = scmp.ne.s32.totalorder %s194, %s197
      %p206 = scmp.eq.s32.totalorder %s23, 1
      %p207 = por %p205, %p206
      %p208 = scmp.ne.s32.totalorder %s197, %s198
      %p209 = scmp.eq.s32.totalorder %s23, 0
      %p210 = por %p208, %p209
      %p211 = scmp.ne.s32.totalorder %s197, %s198
      %p212 = scmp.eq.s32.totalorder %s24, 1
      %p213 = por %p211, %p212
      %p215 = scmp.ne.s32.totalorder %s198, %s214
      %p216 = scmp.eq.s32.totalorder %s24, 0
      %p217 = por %p215, %p216
      %s218 = ssub.s32 %s25, %s37
      %s219 = ssub.s32 %s26, %s33
      %s220 = sor.u32 %s218, %s219
      %p221 = scmp.eq.s32.totalorder %s220, 0
      %s223 = sadd.s32 %s222, 1
      %s224 = scalar_select %p221, %s222, %s223
      %p227 = pneg %p221
      %p228 = scmp.eq.s32.totalorder %s18, 1
      %p229 = por %p227, %p228
      %p230 = scmp.ne.s32.totalorder %s222, %s225
      %p231 = scmp.eq.s32.totalorder %s18, 0
      %p232 = por %p230, %p231
      %p233 = scmp.ne.s32.totalorder %s222, %s225
      %p234 = scmp.eq.s32.totalorder %s23, 1
      %p235 = por %p233, %p234
      %p236 = scmp.ne.s32.totalorder %s225, %s226
      %p237 = scmp.eq.s32.totalorder %s23, 0
      %p238 = por %p236, %p237
      %p239 = scmp.ne.s32.totalorder %s225, %s226
      %p240 = scmp.eq.s32.totalorder %s24, 1
      %p241 = por %p239, %p240
      %p243 = scmp.ne.s32.totalorder %s226, %s242
      %p244 = scmp.eq.s32.totalorder %s24, 0
      %p245 = por %p243, %p244
      %p246 = scmp.le.s32.totalorder 1, %s18
      %p247 = scmp.lt.s32.totalorder %s18, 3
      %p248 = pnand %p246, %p247
      %p249 = pneg %p248
      // Predicated region
      $region9: #{pointnetfeat_return2.1} parent=5 // pred_check
        _
      $region10: #{pointnetfeat_return2.1} parent=5 // pred_check_branch
        %251 = sbr.rel (%p248) target = $region12
      $region11: #{pointnetfeat_return2.1} parent=5 // pred_region
        %s252 = ssub.s32 %s18, 1
        // Predicated region
        $region13: #{pointnetfeat_return2.1} parent=11 // pred_check
          %p253 = pneg %p79
        $region14: #{pointnetfeat_return2.1} parent=11 // pred_check_branch
          %255 = sbr.rel (%p253) target = $region16
        $region15: #{pointnetfeat_return2.1} parent=11 // pred_region
          _
        $region16: #{pointnetfeat_return2.1} parent=11 // pred_fallthru
          _
        // Predicated region
        $region17: #{pointnetfeat_return2.1} parent=11 // pred_check
          %p256 = pneg %p100
        $region18: #{pointnetfeat_return2.1} parent=11 // pred_check_branch
          %258 = sbr.rel (%p256) target = $region20
        $region19: #{pointnetfeat_return2.1} parent=11 // pred_region
          _
        $region20: #{pointnetfeat_return2.1} parent=11 // pred_fallthru
          _
        // Predicated region
        $region21: #{pointnetfeat_return2.1} parent=11 // pred_check
          %p259 = pneg %p121
        $region22: #{pointnetfeat_return2.1} parent=11 // pred_check_branch
          %261 = sbr.rel (%p259) target = $region24
        $region23: #{pointnetfeat_return2.1} parent=11 // pred_region
          _
        $region24: #{pointnetfeat_return2.1} parent=11 // pred_fallthru
          _
        // Predicated region
        $region25: #{pointnetfeat_return2.1} parent=11 // pred_check
          %p262 = pneg %p142
        $region26: #{pointnetfeat_return2.1} parent=11 // pred_check_branch
          %264 = sbr.rel (%p262) target = $region28
        $region27: #{pointnetfeat_return2.1} parent=11 // pred_region
          _
        $region28: #{pointnetfeat_return2.1} parent=11 // pred_fallthru
          _
        // Predicated region
        $region29: #{pointnetfeat_return2.1} parent=11 // pred_check
          %p265 = pneg %p163
        $region30: #{pointnetfeat_return2.1} parent=11 // pred_check_branch
          %267 = sbr.rel (%p265) target = $region32
        $region31: #{pointnetfeat_return2.1} parent=11 // pred_region
          _
        $region32: #{pointnetfeat_return2.1} parent=11 // pred_fallthru
          _
        // Predicated region
        $region33: #{pointnetfeat_return2.1} parent=11 // pred_check
          %p268 = pneg %p184
        $region34: #{pointnetfeat_return2.1} parent=11 // pred_check_branch
          %270 = sbr.rel (%p268) target = $region36
        $region35: #{pointnetfeat_return2.1} parent=11 // pred_region
          _
        $region36: #{pointnetfeat_return2.1} parent=11 // pred_fallthru
          _
      $region12: #{pointnetfeat_return2.1} parent=5 // pred_fallthru
        _
      %p271 = scmp.lt.s32.totalorder %s18, 2
      // Predicated region
      $region37: #{pointnetfeat_return2.1} parent=5 // pred_check
        %p272 = pneg %p271
      $region38: #{pointnetfeat_return2.1} parent=5 // pred_check_branch
        %274 = sbr.rel (%p272) target = $region40
      $region39: #{pointnetfeat_return2.1} parent=5 // pred_region
        // Predicated region
        $region41: #{pointnetfeat_return2.1} parent=39 // pred_check
          %p275 = pneg %p52
        $region42: #{pointnetfeat_return2.1} parent=39 // pred_check_branch
          %277 = sbr.rel (%p275) target = $region44
        $region43: #{pointnetfeat_return2.1} parent=39 // pred_region
          %s278 = smul.u32 64, %s26
          %p279 = scmp.lt.s32.totalorder %s25, 1
          %s280 = scalar_select %p279, %s25, 1
          %p281 = scmp.lt.s32.totalorder %s278, 63
          %s282 = scalar_select %p281, %s278, 63
          %s283 = smul.addr %s280, 64
          %s284 = sadd.s32 %s282, %s283
          %s285 = smul.addr %s284, 8
          %s286 = scalar_lea.vmem %s0, %s285
          %s287 = smul.u32 64, %s26
        $region44: #{pointnetfeat_return2.1} parent=39 // pred_fallthru
          _
      $region40: #{pointnetfeat_return2.1} parent=5 // pred_fallthru
        _
      %p288 = scmp.le.s32.totalorder 1, %s18
      %p289 = scmp.lt.s32.totalorder %s18, 3
      %p290 = pnand %p288, %p289
      %p291 = pneg %p290
      // Predicated region
      $region45: #{pointnetfeat_return2.1} parent=5 // pred_check
        _
      $region46: #{pointnetfeat_return2.1} parent=5 // pred_check_branch
        %293 = sbr.rel (%p290) target = $region48
      $region47: #{pointnetfeat_return2.1} parent=5 // pred_region
        %s294 = ssub.s32 %s18, 1
        %s295 = smul.u32 64, %s28
        %p296 = scmp.lt.s32.totalorder %s27, 1
        %s297 = scalar_select %p296, %s27, 1
        %p298 = scmp.lt.s32.totalorder %s295, 63
        %s299 = scalar_select %p298, %s295, 63
        %s300 = smul.addr %s297, 64
        %s301 = sadd.s32 %s299, %s300
        %s302 = smul.addr %s301, 8
        %s303 = scalar_lea.vmem %s0, %s302
        %p304 = pneg %p58
        %p305 = pneg %p55
        %p306 = pneg %p79
        %p307 = pneg %p76
        %p308 = pneg %p100
        %p309 = pneg %p97
        %p310 = pneg %p121
        %p311 = pneg %p118
        %p312 = pneg %p142
        %p313 = pneg %p139
        %p314 = pneg %p163
        %p315 = pneg %p160
        %p316 = pneg %p184
        %p317 = pneg %p181
        %p318 = pneg %p210
        %p319 = pneg %p207
        %p320 = scmp.lt.s32.totalorder %s27, 1
        %s321 = scalar_select %p320, %s27, 1
        %s322 = smul.addr %s321, 8
        %s323 = scalar_lea.vmem %s7, %s322
        %p324 = pneg %p238
        %p325 = pneg %p235
        %s326 = sand.u32 %s225, 1
        %s327 = scalar_lea.sflag [#allocation3], %s326
        %s328 = sand.u32 %s225, 1
        %s329 = smul.addr %s328, 512
        %s330 = scalar_lea.vmem [#allocation2], %s329
        %s331 = smul.u32 64, %s28
        %p332 = scmp.lt.s32.totalorder %s27, 1
        %s333 = scalar_select %p332, %s27, 1
        %p334 = scmp.lt.s32.totalorder %s331, 63
        %s335 = scalar_select %p334, %s331, 63
        %s336 = smul.addr %s333, 64
        %s337 = sadd.s32 %s335, %s336
        %s338 = smul.addr %s337, 8
        %s339 = scalar_lea.vmem %s0, %s338
        %s340 = smul.u32 64, %s28
        %p341 = scmp.lt.s32.totalorder %s27, 1
        %s342 = scalar_select %p341, %s27, 1
        %s343 = smul.addr %s342, 8
        %s344 = scalar_lea.vmem %s7, %s343
        %s345 = smul.u32 4, %s28
        %v347 = vld [vmem:[%s339] sm:$0xff]
        %v348 = vld [vmem:[%s339 + $0x8] sm:$0xff]
        %v349 = vld [vmem:[%s339 + $0x10] sm:$0xff]
        %v350 = vld [vmem:[%s339 + $0x18] sm:$0xff]
        %v351 = vld [vmem:[%s339 + $0x20] sm:$0xff]
        %v352 = vld [vmem:[%s339 + $0x28] sm:$0xff]
        %v353 = vld [vmem:[%s339 + $0x30] sm:$0xff]
        %v354 = vld [vmem:[%s339 + $0x38] sm:$0xff]
        %v355 = vld [vmem:[%s339 + $0x40] sm:$0xff]
        %v356 = vld [vmem:[%s339 + $0x48] sm:$0xff]
        %v357 = vld [vmem:[%s339 + $0x50] sm:$0xff]
        %v358 = vld [vmem:[%s339 + $0x58] sm:$0xff]
        %v359 = vld [vmem:[%s339 + $0x60] sm:$0xff]
        %v360 = vld [vmem:[%s339 + $0x68] sm:$0xff]
        %v361 = vld [vmem:[%s339 + $0x70] sm:$0xff]
        %v362 = vld [vmem:[%s339 + $0x78] sm:$0xff]
        %v363 = vld [vmem:[%s339 + $0x80] sm:$0xff]
        %v364 = vld [vmem:[%s339 + $0x88] sm:$0xff]
        %v365 = vld [vmem:[%s339 + $0x90] sm:$0xff]
        %v366 = vld [vmem:[%s339 + $0x98] sm:$0xff]
        %v367 = vld [vmem:[%s339 + $0xa0] sm:$0xff]
        %v368 = vld [vmem:[%s339 + $0xa8] sm:$0xff]
        %v369 = vld [vmem:[%s339 + $0xb0] sm:$0xff]
        %v370 = vld [vmem:[%s339 + $0xb8] sm:$0xff]
        %v371 = vld [vmem:[%s339 + $0xc0] sm:$0xff]
        %v372 = vld [vmem:[%s339 + $0xc8] sm:$0xff]
        %v373 = vld [vmem:[%s339 + $0xd0] sm:$0xff]
        %v374 = vld [vmem:[%s339 + $0xd8] sm:$0xff]
        %v375 = vld [vmem:[%s339 + $0xe0] sm:$0xff]
        %v376 = vld [vmem:[%s339 + $0xe8] sm:$0xff]
        %v377 = vld [vmem:[%s339 + $0xf0] sm:$0xff]
        %v378 = vld [vmem:[%s339 + $0xf8] sm:$0xff]
        %v379 = vld [vmem:[%s339 + $0x100] sm:$0xff]
        %v380 = vld [vmem:[%s339 + $0x108] sm:$0xff]
        %v381 = vld [vmem:[%s339 + $0x110] sm:$0xff]
        %v382 = vld [vmem:[%s339 + $0x118] sm:$0xff]
        %v383 = vld [vmem:[%s339 + $0x120] sm:$0xff]
        %v384 = vld [vmem:[%s339 + $0x128] sm:$0xff]
        %v385 = vld [vmem:[%s339 + $0x130] sm:$0xff]
        %v386 = vld [vmem:[%s339 + $0x138] sm:$0xff]
        %v387 = vld [vmem:[%s339 + $0x140] sm:$0xff]
        %v388 = vld [vmem:[%s339 + $0x148] sm:$0xff]
        %v389 = vld [vmem:[%s339 + $0x150] sm:$0xff]
        %v390 = vld [vmem:[%s339 + $0x158] sm:$0xff]
        %v391 = vld [vmem:[%s339 + $0x160] sm:$0xff]
        %v392 = vld [vmem:[%s339 + $0x168] sm:$0xff]
        %v393 = vld [vmem:[%s339 + $0x170] sm:$0xff]
        %v394 = vld [vmem:[%s339 + $0x178] sm:$0xff]
        %v395 = vld [vmem:[%s339 + $0x180] sm:$0xff]
        %v396 = vld [vmem:[%s339 + $0x188] sm:$0xff]
        %v397 = vld [vmem:[%s339 + $0x190] sm:$0xff]
        %v398 = vld [vmem:[%s339 + $0x198] sm:$0xff]
        %v399 = vld [vmem:[%s339 + $0x1a0] sm:$0xff]
        %v400 = vld [vmem:[%s339 + $0x1a8] sm:$0xff]
        %v401 = vld [vmem:[%s339 + $0x1b0] sm:$0xff]
        %v402 = vld [vmem:[%s339 + $0x1b8] sm:$0xff]
        %v403 = vld [vmem:[%s339 + $0x1c0] sm:$0xff]
        %v404 = vld [vmem:[%s339 + $0x1c8] sm:$0xff]
        %v405 = vld [vmem:[%s339 + $0x1d0] sm:$0xff]
        %v406 = vld [vmem:[%s339 + $0x1d8] sm:$0xff]
        %v407 = vld [vmem:[%s339 + $0x1e0] sm:$0xff]
        %v408 = vld [vmem:[%s339 + $0x1e8] sm:$0xff]
        %v409 = vld [vmem:[%s339 + $0x1f0] sm:$0xff]
        %v410 = vld [vmem:[%s339 + $0x1f8] sm:$0xff]
        %v411 = vld [vmem:[%s1] sm:$0x1]
        %413 = vset.pattern.permute.xlu0 0
        %414 = vperm.xlu0 %413, %v347
        %v415 = vpop.permute.xlu0 %414
        %418 = vset.pattern.permute.xlu0 0
        %419 = vperm.xlu0 %418, %v348
        %v420 = vpop.permute.xlu0 %419
        %423 = vset.pattern.permute.xlu0 0
        %424 = vperm.xlu0 %423, %v349
        %v425 = vpop.permute.xlu0 %424
        %428 = vset.pattern.permute.xlu0 0
        %429 = vperm.xlu0 %428, %v350
        %v430 = vpop.permute.xlu0 %429
        %433 = vset.pattern.permute.xlu0 0
        %434 = vperm.xlu0 %433, %v351
        %v435 = vpop.permute.xlu0 %434
        %438 = vset.pattern.permute.xlu0 0
        %439 = vperm.xlu0 %438, %v352
        %v440 = vpop.permute.xlu0 %439
        %443 = vset.pattern.permute.xlu0 0
        %444 = vperm.xlu0 %443, %v353
        %v445 = vpop.permute.xlu0 %444
        %448 = vset.pattern.permute.xlu0 0
        %449 = vperm.xlu0 %448, %v354
        %v450 = vpop.permute.xlu0 %449
        %453 = vset.pattern.permute.xlu0 0
        %454 = vperm.xlu0 %453, %v355
        %v455 = vpop.permute.xlu0 %454
        %458 = vset.pattern.permute.xlu0 0
        %459 = vperm.xlu0 %458, %v356
        %v460 = vpop.permute.xlu0 %459
        %463 = vset.pattern.permute.xlu0 0
        %464 = vperm.xlu0 %463, %v357
        %v465 = vpop.permute.xlu0 %464
        %468 = vset.pattern.permute.xlu0 0
        %469 = vperm.xlu0 %468, %v358
        %v470 = vpop.permute.xlu0 %469
        %473 = vset.pattern.permute.xlu0 0
        %474 = vperm.xlu0 %473, %v359
        %v475 = vpop.permute.xlu0 %474
        %478 = vset.pattern.permute.xlu0 0
        %479 = vperm.xlu0 %478, %v360
        %v480 = vpop.permute.xlu0 %479
        %483 = vset.pattern.permute.xlu0 0
        %484 = vperm.xlu0 %483, %v361
        %v485 = vpop.permute.xlu0 %484
        %488 = vset.pattern.permute.xlu0 0
        %489 = vperm.xlu0 %488, %v362
        %v490 = vpop.permute.xlu0 %489
        %493 = vset.pattern.permute.xlu0 0
        %494 = vperm.xlu0 %493, %v363
        %v495 = vpop.permute.xlu0 %494
        %498 = vset.pattern.permute.xlu0 0
        %499 = vperm.xlu0 %498, %v364
        %v500 = vpop.permute.xlu0 %499
        %503 = vset.pattern.permute.xlu0 0
        %504 = vperm.xlu0 %503, %v365
        %v505 = vpop.permute.xlu0 %504
        %508 = vset.pattern.permute.xlu0 0
        %509 = vperm.xlu0 %508, %v366
        %v510 = vpop.permute.xlu0 %509
        %513 = vset.pattern.permute.xlu0 0
        %514 = vperm.xlu0 %513, %v367
        %v515 = vpop.permute.xlu0 %514
        %518 = vset.pattern.permute.xlu0 0
        %519 = vperm.xlu0 %518, %v368
        %v520 = vpop.permute.xlu0 %519
        %523 = vset.pattern.permute.xlu0 0
        %524 = vperm.xlu0 %523, %v369
        %v525 = vpop.permute.xlu0 %524
        %528 = vset.pattern.permute.xlu0 0
        %529 = vperm.xlu0 %528, %v370
        %v530 = vpop.permute.xlu0 %529
        %533 = vset.pattern.permute.xlu0 0
        %534 = vperm.xlu0 %533, %v371
        %v535 = vpop.permute.xlu0 %534
        %538 = vset.pattern.permute.xlu0 0
        %539 = vperm.xlu0 %538, %v372
        %v540 = vpop.permute.xlu0 %539
        %543 = vset.pattern.permute.xlu0 0
        %544 = vperm.xlu0 %543, %v373
        %v545 = vpop.permute.xlu0 %544
        %548 = vset.pattern.permute.xlu0 0
        %549 = vperm.xlu0 %548, %v374
        %v550 = vpop.permute.xlu0 %549
        %553 = vset.pattern.permute.xlu0 0
        %554 = vperm.xlu0 %553, %v375
        %v555 = vpop.permute.xlu0 %554
        %558 = vset.pattern.permute.xlu0 0
        %559 = vperm.xlu0 %558, %v376
        %v560 = vpop.permute.xlu0 %559
        %563 = vset.pattern.permute.xlu0 0
        %564 = vperm.xlu0 %563, %v377
        %v565 = vpop.permute.xlu0 %564
        %568 = vset.pattern.permute.xlu0 0
        %569 = vperm.xlu0 %568, %v378
        %v570 = vpop.permute.xlu0 %569
        %573 = vset.pattern.permute.xlu0 0
        %574 = vperm.xlu0 %573, %v379
        %v575 = vpop.permute.xlu0 %574
        %578 = vset.pattern.permute.xlu0 0
        %579 = vperm.xlu0 %578, %v380
        %v580 = vpop.permute.xlu0 %579
        %583 = vset.pattern.permute.xlu0 0
        %584 = vperm.xlu0 %583, %v381
        %v585 = vpop.permute.xlu0 %584
        %588 = vset.pattern.permute.xlu0 0
        %589 = vperm.xlu0 %588, %v382
        %v590 = vpop.permute.xlu0 %589
        %593 = vset.pattern.permute.xlu0 0
        %594 = vperm.xlu0 %593, %v383
        %v595 = vpop.permute.xlu0 %594
        %598 = vset.pattern.permute.xlu0 0
        %599 = vperm.xlu0 %598, %v384
        %v600 = vpop.permute.xlu0 %599
        %603 = vset.pattern.permute.xlu0 0
        %604 = vperm.xlu0 %603, %v385
        %v605 = vpop.permute.xlu0 %604
        %608 = vset.pattern.permute.xlu0 0
        %609 = vperm.xlu0 %608, %v386
        %v610 = vpop.permute.xlu0 %609
        %613 = vset.pattern.permute.xlu0 0
        %614 = vperm.xlu0 %613, %v387
        %v615 = vpop.permute.xlu0 %614
        %618 = vset.pattern.permute.xlu0 0
        %619 = vperm.xlu0 %618, %v388
        %v620 = vpop.permute.xlu0 %619
        %623 = vset.pattern.permute.xlu0 0
        %624 = vperm.xlu0 %623, %v389
        %v625 = vpop.permute.xlu0 %624
        %628 = vset.pattern.permute.xlu0 0
        %629 = vperm.xlu0 %628, %v390
        %v630 = vpop.permute.xlu0 %629
        %633 = vset.pattern.permute.xlu0 0
        %634 = vperm.xlu0 %633, %v391
        %v635 = vpop.permute.xlu0 %634
        %638 = vset.pattern.permute.xlu0 0
        %639 = vperm.xlu0 %638, %v392
        %v640 = vpop.permute.xlu0 %639
        %643 = vset.pattern.permute.xlu0 0
        %644 = vperm.xlu0 %643, %v393
        %v645 = vpop.permute.xlu0 %644
        %648 = vset.pattern.permute.xlu0 0
        %649 = vperm.xlu0 %648, %v394
        %v650 = vpop.permute.xlu0 %649
        %653 = vset.pattern.permute.xlu0 0
        %654 = vperm.xlu0 %653, %v395
        %v655 = vpop.permute.xlu0 %654
        %658 = vset.pattern.permute.xlu0 0
        %659 = vperm.xlu0 %658, %v396
        %v660 = vpop.permute.xlu0 %659
        %663 = vset.pattern.permute.xlu0 0
        %664 = vperm.xlu0 %663, %v397
        %v665 = vpop.permute.xlu0 %664
        %668 = vset.pattern.permute.xlu0 0
        %669 = vperm.xlu0 %668, %v398
        %v670 = vpop.permute.xlu0 %669
        %673 = vset.pattern.permute.xlu0 0
        %674 = vperm.xlu0 %673, %v399
        %v675 = vpop.permute.xlu0 %674
        %678 = vset.pattern.permute.xlu0 0
        %679 = vperm.xlu0 %678, %v400
        %v680 = vpop.permute.xlu0 %679
        %683 = vset.pattern.permute.xlu0 0
        %684 = vperm.xlu0 %683, %v401
        %v685 = vpop.permute.xlu0 %684
        %688 = vset.pattern.permute.xlu0 0
        %689 = vperm.xlu0 %688, %v402
        %v690 = vpop.permute.xlu0 %689
        %693 = vset.pattern.permute.xlu0 0
        %694 = vperm.xlu0 %693, %v403
        %v695 = vpop.permute.xlu0 %694
        %698 = vset.pattern.permute.xlu0 0
        %699 = vperm.xlu0 %698, %v404
        %v700 = vpop.permute.xlu0 %699
        %703 = vset.pattern.permute.xlu0 0
        %704 = vperm.xlu0 %703, %v405
        %v705 = vpop.permute.xlu0 %704
        %708 = vset.pattern.permute.xlu0 0
        %709 = vperm.xlu0 %708, %v406
        %v710 = vpop.permute.xlu0 %709
        %713 = vset.pattern.permute.xlu0 0
        %714 = vperm.xlu0 %713, %v407
        %v715 = vpop.permute.xlu0 %714
        %718 = vset.pattern.permute.xlu0 0
        %719 = vperm.xlu0 %718, %v408
        %v720 = vpop.permute.xlu0 %719
        %723 = vset.pattern.permute.xlu0 0
        %724 = vperm.xlu0 %723, %v409
        %v725 = vpop.permute.xlu0 %724
        %728 = vset.pattern.permute.xlu0 0
        %729 = vperm.xlu0 %728, %v410
        %v730 = vpop.permute.xlu0 %729
        %v732 = vlaneseq
        %v733 = vshrl.u32 %v732, 7
        %v734 = vsub.s32 0, %v733
        %v735 = vrot.slane %v411, %v734
        %v736 = vmul.f32 %v415, %v735
        %v737 = vmul.f32 %v420, %v735
        %v738 = vmul.f32 %v425, %v735
        %v739 = vmul.f32 %v430, %v735
        %v740 = vmul.f32 %v435, %v735
        %v741 = vmul.f32 %v440, %v735
        %v742 = vmul.f32 %v445, %v735
        %v743 = vmul.f32 %v450, %v735
        %v744 = vmul.f32 %v455, %v735
        %v745 = vmul.f32 %v460, %v735
        %v746 = vmul.f32 %v465, %v735
        %v747 = vmul.f32 %v470, %v735
        %v748 = vmul.f32 %v475, %v735
        %v749 = vmul.f32 %v480, %v735
        %v750 = vmul.f32 %v485, %v735
        %v751 = vmul.f32 %v490, %v735
        %v752 = vmul.f32 %v495, %v735
        %v753 = vmul.f32 %v500, %v735
        %v754 = vmul.f32 %v505, %v735
        %v755 = vmul.f32 %v510, %v735
        %v756 = vmul.f32 %v515, %v735
        %v757 = vmul.f32 %v520, %v735
        %v758 = vmul.f32 %v525, %v735
        %v759 = vmul.f32 %v530, %v735
        %v760 = vmul.f32 %v535, %v735
        %v761 = vmul.f32 %v540, %v735
        %v762 = vmul.f32 %v545, %v735
        %v763 = vmul.f32 %v550, %v735
        %v764 = vmul.f32 %v555, %v735
        %v765 = vmul.f32 %v560, %v735
        %v766 = vmul.f32 %v565, %v735
        %v767 = vmul.f32 %v570, %v735
        %v768 = vmul.f32 %v575, %v735
        %v769 = vmul.f32 %v580, %v735
        %v770 = vmul.f32 %v585, %v735
        %v771 = vmul.f32 %v590, %v735
        %v772 = vmul.f32 %v595, %v735
        %v773 = vmul.f32 %v600, %v735
        %v774 = vmul.f32 %v605, %v735
        %v775 = vmul.f32 %v610, %v735
        %v776 = vmul.f32 %v615, %v735
        %v777 = vmul.f32 %v620, %v735
        %v778 = vmul.f32 %v625, %v735
        %v779 = vmul.f32 %v630, %v735
        %v780 = vmul.f32 %v635, %v735
        %v781 = vmul.f32 %v640, %v735
        %v782 = vmul.f32 %v645, %v735
        %v783 = vmul.f32 %v650, %v735
        %v784 = vmul.f32 %v655, %v735
        %v785 = vmul.f32 %v660, %v735
        %v786 = vmul.f32 %v665, %v735
        %v787 = vmul.f32 %v670, %v735
        %v788 = vmul.f32 %v675, %v735
        %v789 = vmul.f32 %v680, %v735
        %v790 = vmul.f32 %v685, %v735
        %v791 = vmul.f32 %v690, %v735
        %v792 = vmul.f32 %v695, %v735
        %v793 = vmul.f32 %v700, %v735
        %v794 = vmul.f32 %v705, %v735
        %v795 = vmul.f32 %v710, %v735
        %v796 = vmul.f32 %v715, %v735
        %v797 = vmul.f32 %v720, %v735
        %v798 = vmul.f32 %v725, %v735
        %v799 = vmul.f32 %v730, %v735
        %v800 = vld [vmem:[%s1 + $0x1] sm:$0x1]
        %801 = vset.pattern.permute.xlu0 1
        %802 = vperm.xlu0 %801, %v347
        %v803 = vpop.permute.xlu0 %802
        %805 = vset.pattern.permute.xlu0 1
        %806 = vperm.xlu0 %805, %v348
        %v807 = vpop.permute.xlu0 %806
        %809 = vset.pattern.permute.xlu0 1
        %810 = vperm.xlu0 %809, %v349
        %v811 = vpop.permute.xlu0 %810
        %813 = vset.pattern.permute.xlu0 1
        %814 = vperm.xlu0 %813, %v350
        %v815 = vpop.permute.xlu0 %814
        %817 = vset.pattern.permute.xlu0 1
        %818 = vperm.xlu0 %817, %v351
        %v819 = vpop.permute.xlu0 %818
        %821 = vset.pattern.permute.xlu0 1
        %822 = vperm.xlu0 %821, %v352
        %v823 = vpop.permute.xlu0 %822
        %825 = vset.pattern.permute.xlu0 1
        %826 = vperm.xlu0 %825, %v353
        %v827 = vpop.permute.xlu0 %826
        %829 = vset.pattern.permute.xlu0 1
        %830 = vperm.xlu0 %829, %v354
        %v831 = vpop.permute.xlu0 %830
        %833 = vset.pattern.permute.xlu0 1
        %834 = vperm.xlu0 %833, %v355
        %v835 = vpop.permute.xlu0 %834
        %837 = vset.pattern.permute.xlu0 1
        %838 = vperm.xlu0 %837, %v356
        %v839 = vpop.permute.xlu0 %838
        %841 = vset.pattern.permute.xlu0 1
        %842 = vperm.xlu0 %841, %v357
        %v843 = vpop.permute.xlu0 %842
        %845 = vset.pattern.permute.xlu0 1
        %846 = vperm.xlu0 %845, %v358
        %v847 = vpop.permute.xlu0 %846
        %849 = vset.pattern.permute.xlu0 1
        %850 = vperm.xlu0 %849, %v359
        %v851 = vpop.permute.xlu0 %850
        %853 = vset.pattern.permute.xlu0 1
        %854 = vperm.xlu0 %853, %v360
        %v855 = vpop.permute.xlu0 %854
        %857 = vset.pattern.permute.xlu0 1
        %858 = vperm.xlu0 %857, %v361
        %v859 = vpop.permute.xlu0 %858
        %861 = vset.pattern.permute.xlu0 1
        %862 = vperm.xlu0 %861, %v362
        %v863 = vpop.permute.xlu0 %862
        %865 = vset.pattern.permute.xlu0 1
        %866 = vperm.xlu0 %865, %v363
        %v867 = vpop.permute.xlu0 %866
        %869 = vset.pattern.permute.xlu0 1
        %870 = vperm.xlu0 %869, %v364
        %v871 = vpop.permute.xlu0 %870
        %873 = vset.pattern.permute.xlu0 1
        %874 = vperm.xlu0 %873, %v365
        %v875 = vpop.permute.xlu0 %874
        %877 = vset.pattern.permute.xlu0 1
        %878 = vperm.xlu0 %877, %v366
        %v879 = vpop.permute.xlu0 %878
        %881 = vset.pattern.permute.xlu0 1
        %882 = vperm.xlu0 %881, %v367
        %v883 = vpop.permute.xlu0 %882
        %885 = vset.pattern.permute.xlu0 1
        %886 = vperm.xlu0 %885, %v368
        %v887 = vpop.permute.xlu0 %886
        %889 = vset.pattern.permute.xlu0 1
        %890 = vperm.xlu0 %889, %v369
        %v891 = vpop.permute.xlu0 %890
        %893 = vset.pattern.permute.xlu0 1
        %894 = vperm.xlu0 %893, %v370
        %v895 = vpop.permute.xlu0 %894
        %897 = vset.pattern.permute.xlu0 1
        %898 = vperm.xlu0 %897, %v371
        %v899 = vpop.permute.xlu0 %898
        %901 = vset.pattern.permute.xlu0 1
        %902 = vperm.xlu0 %901, %v372
        %v903 = vpop.permute.xlu0 %902
        %905 = vset.pattern.permute.xlu0 1
        %906 = vperm.xlu0 %905, %v373
        %v907 = vpop.permute.xlu0 %906
        %909 = vset.pattern.permute.xlu0 1
        %910 = vperm.xlu0 %909, %v374
        %v911 = vpop.permute.xlu0 %910
        %913 = vset.pattern.permute.xlu0 1
        %914 = vperm.xlu0 %913, %v375
        %v915 = vpop.permute.xlu0 %914
        %917 = vset.pattern.permute.xlu0 1
        %918 = vperm.xlu0 %917, %v376
        %v919 = vpop.permute.xlu0 %918
        %921 = vset.pattern.permute.xlu0 1
        %922 = vperm.xlu0 %921, %v377
        %v923 = vpop.permute.xlu0 %922
        %925 = vset.pattern.permute.xlu0 1
        %926 = vperm.xlu0 %925, %v378
        %v927 = vpop.permute.xlu0 %926
        %929 = vset.pattern.permute.xlu0 1
        %930 = vperm.xlu0 %929, %v379
        %v931 = vpop.permute.xlu0 %930
        %933 = vset.pattern.permute.xlu0 1
        %934 = vperm.xlu0 %933, %v380
        %v935 = vpop.permute.xlu0 %934
        %937 = vset.pattern.permute.xlu0 1
        %938 = vperm.xlu0 %937, %v381
        %v939 = vpop.permute.xlu0 %938
        %941 = vset.pattern.permute.xlu0 1
        %942 = vperm.xlu0 %941, %v382
        %v943 = vpop.permute.xlu0 %942
        %945 = vset.pattern.permute.xlu0 1
        %946 = vperm.xlu0 %945, %v383
        %v947 = vpop.permute.xlu0 %946
        %949 = vset.pattern.permute.xlu0 1
        %950 = vperm.xlu0 %949, %v384
        %v951 = vpop.permute.xlu0 %950
        %953 = vset.pattern.permute.xlu0 1
        %954 = vperm.xlu0 %953, %v385
        %v955 = vpop.permute.xlu0 %954
        %957 = vset.pattern.permute.xlu0 1
        %958 = vperm.xlu0 %957, %v386
        %v959 = vpop.permute.xlu0 %958
        %961 = vset.pattern.permute.xlu0 1
        %962 = vperm.xlu0 %961, %v387
        %v963 = vpop.permute.xlu0 %962
        %965 = vset.pattern.permute.xlu0 1
        %966 = vperm.xlu0 %965, %v388
        %v967 = vpop.permute.xlu0 %966
        %969 = vset.pattern.permute.xlu0 1
        %970 = vperm.xlu0 %969, %v389
        %v971 = vpop.permute.xlu0 %970
        %973 = vset.pattern.permute.xlu0 1
        %974 = vperm.xlu0 %973, %v390
        %v975 = vpop.permute.xlu0 %974
        %977 = vset.pattern.permute.xlu0 1
        %978 = vperm.xlu0 %977, %v391
        %v979 = vpop.permute.xlu0 %978
        %981 = vset.pattern.permute.xlu0 1
        %982 = vperm.xlu0 %981, %v392
        %v983 = vpop.permute.xlu0 %982
        %985 = vset.pattern.permute.xlu0 1
        %986 = vperm.xlu0 %985, %v393
        %v987 = vpop.permute.xlu0 %986
        %989 = vset.pattern.permute.xlu0 1
        %990 = vperm.xlu0 %989, %v394
        %v991 = vpop.permute.xlu0 %990
        %993 = vset.pattern.permute.xlu0 1
        %994 = vperm.xlu0 %993, %v395
        %v995 = vpop.permute.xlu0 %994
        %997 = vset.pattern.permute.xlu0 1
        %998 = vperm.xlu0 %997, %v396
        %v999 = vpop.permute.xlu0 %998
        %1001 = vset.pattern.permute.xlu0 1
        %1002 = vperm.xlu0 %1001, %v397
        %v1003 = vpop.permute.xlu0 %1002
        %1005 = vset.pattern.permute.xlu0 1
        %1006 = vperm.xlu0 %1005, %v398
        %v1007 = vpop.permute.xlu0 %1006
        %1009 = vset.pattern.permute.xlu0 1
        %1010 = vperm.xlu0 %1009, %v399
        %v1011 = vpop.permute.xlu0 %1010
        %1013 = vset.pattern.permute.xlu0 1
        %1014 = vperm.xlu0 %1013, %v400
        %v1015 = vpop.permute.xlu0 %1014
        %1017 = vset.pattern.permute.xlu0 1
        %1018 = vperm.xlu0 %1017, %v401
        %v1019 = vpop.permute.xlu0 %1018
        %1021 = vset.pattern.permute.xlu0 1
        %1022 = vperm.xlu0 %1021, %v402
        %v1023 = vpop.permute.xlu0 %1022
        %1025 = vset.pattern.permute.xlu0 1
        %1026 = vperm.xlu0 %1025, %v403
        %v1027 = vpop.permute.xlu0 %1026
        %1029 = vset.pattern.permute.xlu0 1
        %1030 = vperm.xlu0 %1029, %v404
        %v1031 = vpop.permute.xlu0 %1030
        %1033 = vset.pattern.permute.xlu0 1
        %1034 = vperm.xlu0 %1033, %v405
        %v1035 = vpop.permute.xlu0 %1034
        %1037 = vset.pattern.permute.xlu0 1
        %1038 = vperm.xlu0 %1037, %v406
        %v1039 = vpop.permute.xlu0 %1038
        %1041 = vset.pattern.permute.xlu0 1
        %1042 = vperm.xlu0 %1041, %v407
        %v1043 = vpop.permute.xlu0 %1042
        %1045 = vset.pattern.permute.xlu0 1
        %1046 = vperm.xlu0 %1045, %v408
        %v1047 = vpop.permute.xlu0 %1046
        %1049 = vset.pattern.permute.xlu0 1
        %1050 = vperm.xlu0 %1049, %v409
        %v1051 = vpop.permute.xlu0 %1050
        %1053 = vset.pattern.permute.xlu0 1
        %1054 = vperm.xlu0 %1053, %v410
        %v1055 = vpop.permute.xlu0 %1054
        %v1057 = vlaneseq
        %v1058 = vshrl.u32 %v1057, 7
        %v1059 = vsub.s32 0, %v1058
        %v1060 = vrot.slane %v800, %v1059
        %v1061 = vmul.f32 %v803, %v1060
        %v1062 = vmul.f32 %v807, %v1060
        %v1063 = vmul.f32 %v811, %v1060
        %v1064 = vmul.f32 %v815, %v1060
        %v1065 = vmul.f32 %v819, %v1060
        %v1066 = vmul.f32 %v823, %v1060
        %v1067 = vmul.f32 %v827, %v1060
        %v1068 = vmul.f32 %v831, %v1060
        %v1069 = vmul.f32 %v835, %v1060
        %v1070 = vmul.f32 %v839, %v1060
        %v1071 = vmul.f32 %v843, %v1060
        %v1072 = vmul.f32 %v847, %v1060
        %v1073 = vmul.f32 %v851, %v1060
        %v1074 = vmul.f32 %v855, %v1060
        %v1075 = vmul.f32 %v859, %v1060
        %v1076 = vmul.f32 %v863, %v1060
        %v1077 = vmul.f32 %v867, %v1060
        %v1078 = vmul.f32 %v871, %v1060
        %v1079 = vmul.f32 %v875, %v1060
        %v1080 = vmul.f32 %v879, %v1060
        %v1081 = vmul.f32 %v883, %v1060
        %v1082 = vmul.f32 %v887, %v1060
        %v1083 = vmul.f32 %v891, %v1060
        %v1084 = vmul.f32 %v895, %v1060
        %v1085 = vmul.f32 %v899, %v1060
        %v1086 = vmul.f32 %v903, %v1060
        %v1087 = vmul.f32 %v907, %v1060
        %v1088 = vmul.f32 %v911, %v1060
        %v1089 = vmul.f32 %v915, %v1060
        %v1090 = vmul.f32 %v919, %v1060
        %v1091 = vmul.f32 %v923, %v1060
        %v1092 = vmul.f32 %v927, %v1060
        %v1093 = vmul.f32 %v931, %v1060
        %v1094 = vmul.f32 %v935, %v1060
        %v1095 = vmul.f32 %v939, %v1060
        %v1096 = vmul.f32 %v943, %v1060
        %v1097 = vmul.f32 %v947, %v1060
        %v1098 = vmul.f32 %v951, %v1060
        %v1099 = vmul.f32 %v955, %v1060
        %v1100 = vmul.f32 %v959, %v1060
        %v1101 = vmul.f32 %v963, %v1060
        %v1102 = vmul.f32 %v967, %v1060
        %v1103 = vmul.f32 %v971, %v1060
        %v1104 = vmul.f32 %v975, %v1060
        %v1105 = vmul.f32 %v979, %v1060
        %v1106 = vmul.f32 %v983, %v1060
        %v1107 = vmul.f32 %v987, %v1060
        %v1108 = vmul.f32 %v991, %v1060
        %v1109 = vmul.f32 %v995, %v1060
        %v1110 = vmul.f32 %v999, %v1060
        %v1111 = vmul.f32 %v1003, %v1060
        %v1112 = vmul.f32 %v1007, %v1060
        %v1113 = vmul.f32 %v1011, %v1060
        %v1114 = vmul.f32 %v1015, %v1060
        %v1115 = vmul.f32 %v1019, %v1060
        %v1116 = vmul.f32 %v1023, %v1060
        %v1117 = vmul.f32 %v1027, %v1060
        %v1118 = vmul.f32 %v1031, %v1060
        %v1119 = vmul.f32 %v1035, %v1060
        %v1120 = vmul.f32 %v1039, %v1060
        %v1121 = vmul.f32 %v1043, %v1060
        %v1122 = vmul.f32 %v1047, %v1060
        %v1123 = vmul.f32 %v1051, %v1060
        %v1124 = vmul.f32 %v1055, %v1060
        %v1125 = vadd.f32 %v736, %v1061
        %v1126 = vadd.f32 %v737, %v1062
        %v1127 = vadd.f32 %v738, %v1063
        %v1128 = vadd.f32 %v739, %v1064
        %v1129 = vadd.f32 %v740, %v1065
        %v1130 = vadd.f32 %v741, %v1066
        %v1131 = vadd.f32 %v742, %v1067
        %v1132 = vadd.f32 %v743, %v1068
        %v1133 = vadd.f32 %v744, %v1069
        %v1134 = vadd.f32 %v745, %v1070
        %v1135 = vadd.f32 %v746, %v1071
        %v1136 = vadd.f32 %v747, %v1072
        %v1137 = vadd.f32 %v748, %v1073
        %v1138 = vadd.f32 %v749, %v1074
        %v1139 = vadd.f32 %v750, %v1075
        %v1140 = vadd.f32 %v751, %v1076
        %v1141 = vadd.f32 %v752, %v1077
        %v1142 = vadd.f32 %v753, %v1078
        %v1143 = vadd.f32 %v754, %v1079
        %v1144 = vadd.f32 %v755, %v1080
        %v1145 = vadd.f32 %v756, %v1081
        %v1146 = vadd.f32 %v757, %v1082
        %v1147 = vadd.f32 %v758, %v1083
        %v1148 = vadd.f32 %v759, %v1084
        %v1149 = vadd.f32 %v760, %v1085
        %v1150 = vadd.f32 %v761, %v1086
        %v1151 = vadd.f32 %v762, %v1087
        %v1152 = vadd.f32 %v763, %v1088
        %v1153 = vadd.f32 %v764, %v1089
        %v1154 = vadd.f32 %v765, %v1090
        %v1155 = vadd.f32 %v766, %v1091
        %v1156 = vadd.f32 %v767, %v1092
        %v1157 = vadd.f32 %v768, %v1093
        %v1158 = vadd.f32 %v769, %v1094
        %v1159 = vadd.f32 %v770, %v1095
        %v1160 = vadd.f32 %v771, %v1096
        %v1161 = vadd.f32 %v772, %v1097
        %v1162 = vadd.f32 %v773, %v1098
        %v1163 = vadd.f32 %v774, %v1099
        %v1164 = vadd.f32 %v775, %v1100
        %v1165 = vadd.f32 %v776, %v1101
        %v1166 = vadd.f32 %v777, %v1102
        %v1167 = vadd.f32 %v778, %v1103
        %v1168 = vadd.f32 %v779, %v1104
        %v1169 = vadd.f32 %v780, %v1105
        %v1170 = vadd.f32 %v781, %v1106
        %v1171 = vadd.f32 %v782, %v1107
        %v1172 = vadd.f32 %v783, %v1108
        %v1173 = vadd.f32 %v784, %v1109
        %v1174 = vadd.f32 %v785, %v1110
        %v1175 = vadd.f32 %v786, %v1111
        %v1176 = vadd.f32 %v787, %v1112
        %v1177 = vadd.f32 %v788, %v1113
        %v1178 = vadd.f32 %v789, %v1114
        %v1179 = vadd.f32 %v790, %v1115
        %v1180 = vadd.f32 %v791, %v1116
        %v1181 = vadd.f32 %v792, %v1117
        %v1182 = vadd.f32 %v793, %v1118
        %v1183 = vadd.f32 %v794, %v1119
        %v1184 = vadd.f32 %v795, %v1120
        %v1185 = vadd.f32 %v796, %v1121
        %v1186 = vadd.f32 %v797, %v1122
        %v1187 = vadd.f32 %v798, %v1123
        %v1188 = vadd.f32 %v799, %v1124
        %v1189 = vld [vmem:[%s1 + $0x2] sm:$0x1]
        %1190 = vset.pattern.permute.xlu0 2
        %1191 = vperm.xlu0 %1190, %v347
        %v1192 = vpop.permute.xlu0 %1191
        %1194 = vset.pattern.permute.xlu0 2
        %1195 = vperm.xlu0 %1194, %v348
        %v1196 = vpop.permute.xlu0 %1195
        %1198 = vset.pattern.permute.xlu0 2
        %1199 = vperm.xlu0 %1198, %v349
        %v1200 = vpop.permute.xlu0 %1199
        %1202 = vset.pattern.permute.xlu0 2
        %1203 = vperm.xlu0 %1202, %v350
        %v1204 = vpop.permute.xlu0 %1203
        %1206 = vset.pattern.permute.xlu0 2
        %1207 = vperm.xlu0 %1206, %v351
        %v1208 = vpop.permute.xlu0 %1207
        %1210 = vset.pattern.permute.xlu0 2
        %1211 = vperm.xlu0 %1210, %v352
        %v1212 = vpop.permute.xlu0 %1211
        %1214 = vset.pattern.permute.xlu0 2
        %1215 = vperm.xlu0 %1214, %v353
        %v1216 = vpop.permute.xlu0 %1215
        %1218 = vset.pattern.permute.xlu0 2
        %1219 = vperm.xlu0 %1218, %v354
        %v1220 = vpop.permute.xlu0 %1219
        %1222 = vset.pattern.permute.xlu0 2
        %1223 = vperm.xlu0 %1222, %v355
        %v1224 = vpop.permute.xlu0 %1223
        %1226 = vset.pattern.permute.xlu0 2
        %1227 = vperm.xlu0 %1226, %v356
        %v1228 = vpop.permute.xlu0 %1227
        %1230 = vset.pattern.permute.xlu0 2
        %1231 = vperm.xlu0 %1230, %v357
        %v1232 = vpop.permute.xlu0 %1231
        %1234 = vset.pattern.permute.xlu0 2
        %1235 = vperm.xlu0 %1234, %v358
        %v1236 = vpop.permute.xlu0 %1235
        %1238 = vset.pattern.permute.xlu0 2
        %1239 = vperm.xlu0 %1238, %v359
        %v1240 = vpop.permute.xlu0 %1239
        %1242 = vset.pattern.permute.xlu0 2
        %1243 = vperm.xlu0 %1242, %v360
        %v1244 = vpop.permute.xlu0 %1243
        %1246 = vset.pattern.permute.xlu0 2
        %1247 = vperm.xlu0 %1246, %v361
        %v1248 = vpop.permute.xlu0 %1247
        %1250 = vset.pattern.permute.xlu0 2
        %1251 = vperm.xlu0 %1250, %v362
        %v1252 = vpop.permute.xlu0 %1251
        %1254 = vset.pattern.permute.xlu0 2
        %1255 = vperm.xlu0 %1254, %v363
        %v1256 = vpop.permute.xlu0 %1255
        %1258 = vset.pattern.permute.xlu0 2
        %1259 = vperm.xlu0 %1258, %v364
        %v1260 = vpop.permute.xlu0 %1259
        %1262 = vset.pattern.permute.xlu0 2
        %1263 = vperm.xlu0 %1262, %v365
        %v1264 = vpop.permute.xlu0 %1263
        %1266 = vset.pattern.permute.xlu0 2
        %1267 = vperm.xlu0 %1266, %v366
        %v1268 = vpop.permute.xlu0 %1267
        %1270 = vset.pattern.permute.xlu0 2
        %1271 = vperm.xlu0 %1270, %v367
        %v1272 = vpop.permute.xlu0 %1271
        %1274 = vset.pattern.permute.xlu0 2
        %1275 = vperm.xlu0 %1274, %v368
        %v1276 = vpop.permute.xlu0 %1275
        %1278 = vset.pattern.permute.xlu0 2
        %1279 = vperm.xlu0 %1278, %v369
        %v1280 = vpop.permute.xlu0 %1279
        %1282 = vset.pattern.permute.xlu0 2
        %1283 = vperm.xlu0 %1282, %v370
        %v1284 = vpop.permute.xlu0 %1283
        %1286 = vset.pattern.permute.xlu0 2
        %1287 = vperm.xlu0 %1286, %v371
        %v1288 = vpop.permute.xlu0 %1287
        %1290 = vset.pattern.permute.xlu0 2
        %1291 = vperm.xlu0 %1290, %v372
        %v1292 = vpop.permute.xlu0 %1291
        %1294 = vset.pattern.permute.xlu0 2
        %1295 = vperm.xlu0 %1294, %v373
        %v1296 = vpop.permute.xlu0 %1295
        %1298 = vset.pattern.permute.xlu0 2
        %1299 = vperm.xlu0 %1298, %v374
        %v1300 = vpop.permute.xlu0 %1299
        %1302 = vset.pattern.permute.xlu0 2
        %1303 = vperm.xlu0 %1302, %v375
        %v1304 = vpop.permute.xlu0 %1303
        %1306 = vset.pattern.permute.xlu0 2
        %1307 = vperm.xlu0 %1306, %v376
        %v1308 = vpop.permute.xlu0 %1307
        %1310 = vset.pattern.permute.xlu0 2
        %1311 = vperm.xlu0 %1310, %v377
        %v1312 = vpop.permute.xlu0 %1311
        %1314 = vset.pattern.permute.xlu0 2
        %1315 = vperm.xlu0 %1314, %v378
        %v1316 = vpop.permute.xlu0 %1315
        %1318 = vset.pattern.permute.xlu0 2
        %1319 = vperm.xlu0 %1318, %v379
        %v1320 = vpop.permute.xlu0 %1319
        %1322 = vset.pattern.permute.xlu0 2
        %1323 = vperm.xlu0 %1322, %v380
        %v1324 = vpop.permute.xlu0 %1323
        %1326 = vset.pattern.permute.xlu0 2
        %1327 = vperm.xlu0 %1326, %v381
        %v1328 = vpop.permute.xlu0 %1327
        %1330 = vset.pattern.permute.xlu0 2
        %1331 = vperm.xlu0 %1330, %v382
        %v1332 = vpop.permute.xlu0 %1331
        %1334 = vset.pattern.permute.xlu0 2
        %1335 = vperm.xlu0 %1334, %v383
        %v1336 = vpop.permute.xlu0 %1335
        %1338 = vset.pattern.permute.xlu0 2
        %1339 = vperm.xlu0 %1338, %v384
        %v1340 = vpop.permute.xlu0 %1339
        %1342 = vset.pattern.permute.xlu0 2
        %1343 = vperm.xlu0 %1342, %v385
        %v1344 = vpop.permute.xlu0 %1343
        %1346 = vset.pattern.permute.xlu0 2
        %1347 = vperm.xlu0 %1346, %v386
        %v1348 = vpop.permute.xlu0 %1347
        %1350 = vset.pattern.permute.xlu0 2
        %1351 = vperm.xlu0 %1350, %v387
        %v1352 = vpop.permute.xlu0 %1351
        %1354 = vset.pattern.permute.xlu0 2
        %1355 = vperm.xlu0 %1354, %v388
        %v1356 = vpop.permute.xlu0 %1355
        %1358 = vset.pattern.permute.xlu0 2
        %1359 = vperm.xlu0 %1358, %v389
        %v1360 = vpop.permute.xlu0 %1359
        %1362 = vset.pattern.permute.xlu0 2
        %1363 = vperm.xlu0 %1362, %v390
        %v1364 = vpop.permute.xlu0 %1363
        %1366 = vset.pattern.permute.xlu0 2
        %1367 = vperm.xlu0 %1366, %v391
        %v1368 = vpop.permute.xlu0 %1367
        %1370 = vset.pattern.permute.xlu0 2
        %1371 = vperm.xlu0 %1370, %v392
        %v1372 = vpop.permute.xlu0 %1371
        %1374 = vset.pattern.permute.xlu0 2
        %1375 = vperm.xlu0 %1374, %v393
        %v1376 = vpop.permute.xlu0 %1375
        %1378 = vset.pattern.permute.xlu0 2
        %1379 = vperm.xlu0 %1378, %v394
        %v1380 = vpop.permute.xlu0 %1379
        %1382 = vset.pattern.permute.xlu0 2
        %1383 = vperm.xlu0 %1382, %v395
        %v1384 = vpop.permute.xlu0 %1383
        %1386 = vset.pattern.permute.xlu0 2
        %1387 = vperm.xlu0 %1386, %v396
        %v1388 = vpop.permute.xlu0 %1387
        %1390 = vset.pattern.permute.xlu0 2
        %1391 = vperm.xlu0 %1390, %v397
        %v1392 = vpop.permute.xlu0 %1391
        %1394 = vset.pattern.permute.xlu0 2
        %1395 = vperm.xlu0 %1394, %v398
        %v1396 = vpop.permute.xlu0 %1395
        %1398 = vset.pattern.permute.xlu0 2
        %1399 = vperm.xlu0 %1398, %v399
        %v1400 = vpop.permute.xlu0 %1399
        %1402 = vset.pattern.permute.xlu0 2
        %1403 = vperm.xlu0 %1402, %v400
        %v1404 = vpop.permute.xlu0 %1403
        %1406 = vset.pattern.permute.xlu0 2
        %1407 = vperm.xlu0 %1406, %v401
        %v1408 = vpop.permute.xlu0 %1407
        %1410 = vset.pattern.permute.xlu0 2
        %1411 = vperm.xlu0 %1410, %v402
        %v1412 = vpop.permute.xlu0 %1411
        %1414 = vset.pattern.permute.xlu0 2
        %1415 = vperm.xlu0 %1414, %v403
        %v1416 = vpop.permute.xlu0 %1415
        %1418 = vset.pattern.permute.xlu0 2
        %1419 = vperm.xlu0 %1418, %v404
        %v1420 = vpop.permute.xlu0 %1419
        %1422 = vset.pattern.permute.xlu0 2
        %1423 = vperm.xlu0 %1422, %v405
        %v1424 = vpop.permute.xlu0 %1423
        %1426 = vset.pattern.permute.xlu0 2
        %1427 = vperm.xlu0 %1426, %v406
        %v1428 = vpop.permute.xlu0 %1427
        %1430 = vset.pattern.permute.xlu0 2
        %1431 = vperm.xlu0 %1430, %v407
        %v1432 = vpop.permute.xlu0 %1431
        %1434 = vset.pattern.permute.xlu0 2
        %1435 = vperm.xlu0 %1434, %v408
        %v1436 = vpop.permute.xlu0 %1435
        %1438 = vset.pattern.permute.xlu0 2
        %1439 = vperm.xlu0 %1438, %v409
        %v1440 = vpop.permute.xlu0 %1439
        %1442 = vset.pattern.permute.xlu0 2
        %1443 = vperm.xlu0 %1442, %v410
        %v1444 = vpop.permute.xlu0 %1443
        %v1446 = vlaneseq
        %v1447 = vshrl.u32 %v1446, 7
        %v1448 = vsub.s32 0, %v1447
        %v1449 = vrot.slane %v1189, %v1448
        %v1450 = vmul.f32 %v1192, %v1449
        %v1451 = vmul.f32 %v1196, %v1449
        %v1452 = vmul.f32 %v1200, %v1449
        %v1453 = vmul.f32 %v1204, %v1449
        %v1454 = vmul.f32 %v1208, %v1449
        %v1455 = vmul.f32 %v1212, %v1449
        %v1456 = vmul.f32 %v1216, %v1449
        %v1457 = vmul.f32 %v1220, %v1449
        %v1458 = vmul.f32 %v1224, %v1449
        %v1459 = vmul.f32 %v1228, %v1449
        %v1460 = vmul.f32 %v1232, %v1449
        %v1461 = vmul.f32 %v1236, %v1449
        %v1462 = vmul.f32 %v1240, %v1449
        %v1463 = vmul.f32 %v1244, %v1449
        %v1464 = vmul.f32 %v1248, %v1449
        %v1465 = vmul.f32 %v1252, %v1449
        %v1466 = vmul.f32 %v1256, %v1449
        %v1467 = vmul.f32 %v1260, %v1449
        %v1468 = vmul.f32 %v1264, %v1449
        %v1469 = vmul.f32 %v1268, %v1449
        %v1470 = vmul.f32 %v1272, %v1449
        %v1471 = vmul.f32 %v1276, %v1449
        %v1472 = vmul.f32 %v1280, %v1449
        %v1473 = vmul.f32 %v1284, %v1449
        %v1474 = vmul.f32 %v1288, %v1449
        %v1475 = vmul.f32 %v1292, %v1449
        %v1476 = vmul.f32 %v1296, %v1449
        %v1477 = vmul.f32 %v1300, %v1449
        %v1478 = vmul.f32 %v1304, %v1449
        %v1479 = vmul.f32 %v1308, %v1449
        %v1480 = vmul.f32 %v1312, %v1449
        %v1481 = vmul.f32 %v1316, %v1449
        %v1482 = vmul.f32 %v1320, %v1449
        %v1483 = vmul.f32 %v1324, %v1449
        %v1484 = vmul.f32 %v1328, %v1449
        %v1485 = vmul.f32 %v1332, %v1449
        %v1486 = vmul.f32 %v1336, %v1449
        %v1487 = vmul.f32 %v1340, %v1449
        %v1488 = vmul.f32 %v1344, %v1449
        %v1489 = vmul.f32 %v1348, %v1449
        %v1490 = vmul.f32 %v1352, %v1449
        %v1491 = vmul.f32 %v1356, %v1449
        %v1492 = vmul.f32 %v1360, %v1449
        %v1493 = vmul.f32 %v1364, %v1449
        %v1494 = vmul.f32 %v1368, %v1449
        %v1495 = vmul.f32 %v1372, %v1449
        %v1496 = vmul.f32 %v1376, %v1449
        %v1497 = vmul.f32 %v1380, %v1449
        %v1498 = vmul.f32 %v1384, %v1449
        %v1499 = vmul.f32 %v1388, %v1449
        %v1500 = vmul.f32 %v1392, %v1449
        %v1501 = vmul.f32 %v1396, %v1449
        %v1502 = vmul.f32 %v1400, %v1449
        %v1503 = vmul.f32 %v1404, %v1449
        %v1504 = vmul.f32 %v1408, %v1449
        %v1505 = vmul.f32 %v1412, %v1449
        %v1506 = vmul.f32 %v1416, %v1449
        %v1507 = vmul.f32 %v1420, %v1449
        %v1508 = vmul.f32 %v1424, %v1449
        %v1509 = vmul.f32 %v1428, %v1449
        %v1510 = vmul.f32 %v1432, %v1449
        %v1511 = vmul.f32 %v1436, %v1449
        %v1512 = vmul.f32 %v1440, %v1449
        %v1513 = vmul.f32 %v1444, %v1449
        %v1514 = vadd.f32 %v1125, %v1450
        %v1515 = vadd.f32 %v1126, %v1451
        %v1516 = vadd.f32 %v1127, %v1452
        %v1517 = vadd.f32 %v1128, %v1453
        %v1518 = vadd.f32 %v1129, %v1454
        %v1519 = vadd.f32 %v1130, %v1455
        %v1520 = vadd.f32 %v1131, %v1456
        %v1521 = vadd.f32 %v1132, %v1457
        %v1522 = vadd.f32 %v1133, %v1458
        %v1523 = vadd.f32 %v1134, %v1459
        %v1524 = vadd.f32 %v1135, %v1460
        %v1525 = vadd.f32 %v1136, %v1461
        %v1526 = vadd.f32 %v1137, %v1462
        %v1527 = vadd.f32 %v1138, %v1463
        %v1528 = vadd.f32 %v1139, %v1464
        %v1529 = vadd.f32 %v1140, %v1465
        %v1530 = vadd.f32 %v1141, %v1466
        %v1531 = vadd.f32 %v1142, %v1467
        %v1532 = vadd.f32 %v1143, %v1468
        %v1533 = vadd.f32 %v1144, %v1469
        %v1534 = vadd.f32 %v1145, %v1470
        %v1535 = vadd.f32 %v1146, %v1471
        %v1536 = vadd.f32 %v1147, %v1472
        %v1537 = vadd.f32 %v1148, %v1473
        %v1538 = vadd.f32 %v1149, %v1474
        %v1539 = vadd.f32 %v1150, %v1475
        %v1540 = vadd.f32 %v1151, %v1476
        %v1541 = vadd.f32 %v1152, %v1477
        %v1542 = vadd.f32 %v1153, %v1478
        %v1543 = vadd.f32 %v1154, %v1479
        %v1544 = vadd.f32 %v1155, %v1480
        %v1545 = vadd.f32 %v1156, %v1481
        %v1546 = vadd.f32 %v1157, %v1482
        %v1547 = vadd.f32 %v1158, %v1483
        %v1548 = vadd.f32 %v1159, %v1484
        %v1549 = vadd.f32 %v1160, %v1485
        %v1550 = vadd.f32 %v1161, %v1486
        %v1551 = vadd.f32 %v1162, %v1487
        %v1552 = vadd.f32 %v1163, %v1488
        %v1553 = vadd.f32 %v1164, %v1489
        %v1554 = vadd.f32 %v1165, %v1490
        %v1555 = vadd.f32 %v1166, %v1491
        %v1556 = vadd.f32 %v1167, %v1492
        %v1557 = vadd.f32 %v1168, %v1493
        %v1558 = vadd.f32 %v1169, %v1494
        %v1559 = vadd.f32 %v1170, %v1495
        %v1560 = vadd.f32 %v1171, %v1496
        %v1561 = vadd.f32 %v1172, %v1497
        %v1562 = vadd.f32 %v1173, %v1498
        %v1563 = vadd.f32 %v1174, %v1499
        %v1564 = vadd.f32 %v1175, %v1500
        %v1565 = vadd.f32 %v1176, %v1501
        %v1566 = vadd.f32 %v1177, %v1502
        %v1567 = vadd.f32 %v1178, %v1503
        %v1568 = vadd.f32 %v1179, %v1504
        %v1569 = vadd.f32 %v1180, %v1505
        %v1570 = vadd.f32 %v1181, %v1506
        %v1571 = vadd.f32 %v1182, %v1507
        %v1572 = vadd.f32 %v1183, %v1508
        %v1573 = vadd.f32 %v1184, %v1509
        %v1574 = vadd.f32 %v1185, %v1510
        %v1575 = vadd.f32 %v1186, %v1511
        %v1576 = vadd.f32 %v1187, %v1512
        %v1577 = vadd.f32 %v1188, %v1513
        %v1578 = vld [vmem:[%s2] sm:$0x1]
        %v1580 = vlaneseq
        %v1581 = vshrl.u32 %v1580, 7
        %v1582 = vsub.s32 0, %v1581
        %v1583 = vrot.slane %v1578, %v1582
        %v1585 = vadd.f32 %v1514, %v1583
        %v1586 = vadd.f32 %v1515, %v1583
        %v1587 = vadd.f32 %v1516, %v1583
        %v1588 = vadd.f32 %v1517, %v1583
        %v1589 = vadd.f32 %v1518, %v1583
        %v1590 = vadd.f32 %v1519, %v1583
        %v1591 = vadd.f32 %v1520, %v1583
        %v1592 = vadd.f32 %v1521, %v1583
        %v1593 = vadd.f32 %v1522, %v1583
        %v1594 = vadd.f32 %v1523, %v1583
        %v1595 = vadd.f32 %v1524, %v1583
        %v1596 = vadd.f32 %v1525, %v1583
        %v1597 = vadd.f32 %v1526, %v1583
        %v1598 = vadd.f32 %v1527, %v1583
        %v1599 = vadd.f32 %v1528, %v1583
        %v1600 = vadd.f32 %v1529, %v1583
        %v1601 = vadd.f32 %v1530, %v1583
        %v1602 = vadd.f32 %v1531, %v1583
        %v1603 = vadd.f32 %v1532, %v1583
        %v1604 = vadd.f32 %v1533, %v1583
        %v1605 = vadd.f32 %v1534, %v1583
        %v1606 = vadd.f32 %v1535, %v1583
        %v1607 = vadd.f32 %v1536, %v1583
        %v1608 = vadd.f32 %v1537, %v1583
        %v1609 = vadd.f32 %v1538, %v1583
        %v1610 = vadd.f32 %v1539, %v1583
        %v1611 = vadd.f32 %v1540, %v1583
        %v1612 = vadd.f32 %v1541, %v1583
        %v1613 = vadd.f32 %v1542, %v1583
        %v1614 = vadd.f32 %v1543, %v1583
        %v1615 = vadd.f32 %v1544, %v1583
        %v1616 = vadd.f32 %v1545, %v1583
        %v1617 = vadd.f32 %v1546, %v1583
        %v1618 = vadd.f32 %v1547, %v1583
        %v1619 = vadd.f32 %v1548, %v1583
        %v1620 = vadd.f32 %v1549, %v1583
        %v1621 = vadd.f32 %v1550, %v1583
        %v1622 = vadd.f32 %v1551, %v1583
        %v1623 = vadd.f32 %v1552, %v1583
        %v1624 = vadd.f32 %v1553, %v1583
        %v1625 = vadd.f32 %v1554, %v1583
        %v1626 = vadd.f32 %v1555, %v1583
        %v1627 = vadd.f32 %v1556, %v1583
        %v1628 = vadd.f32 %v1557, %v1583
        %v1629 = vadd.f32 %v1558, %v1583
        %v1630 = vadd.f32 %v1559, %v1583
        %v1631 = vadd.f32 %v1560, %v1583
        %v1632 = vadd.f32 %v1561, %v1583
        %v1633 = vadd.f32 %v1562, %v1583
        %v1634 = vadd.f32 %v1563, %v1583
        %v1635 = vadd.f32 %v1564, %v1583
        %v1636 = vadd.f32 %v1565, %v1583
        %v1637 = vadd.f32 %v1566, %v1583
        %v1638 = vadd.f32 %v1567, %v1583
        %v1639 = vadd.f32 %v1568, %v1583
        %v1640 = vadd.f32 %v1569, %v1583
        %v1641 = vadd.f32 %v1570, %v1583
        %v1642 = vadd.f32 %v1571, %v1583
        %v1643 = vadd.f32 %v1572, %v1583
        %v1644 = vadd.f32 %v1573, %v1583
        %v1645 = vadd.f32 %v1574, %v1583
        %v1646 = vadd.f32 %v1575, %v1583
        %v1647 = vadd.f32 %v1576, %v1583
        %v1648 = vadd.f32 %v1577, %v1583
        %v1649 = vmax.f32 %v1585, 0.0
        %v1650 = vmax.f32 %v1586, 0.0
        %v1651 = vmax.f32 %v1587, 0.0
        %v1652 = vmax.f32 %v1588, 0.0
        %v1653 = vmax.f32 %v1589, 0.0
        %v1654 = vmax.f32 %v1590, 0.0
        %v1655 = vmax.f32 %v1591, 0.0
        %v1656 = vmax.f32 %v1592, 0.0
        %v1657 = vmax.f32 %v1593, 0.0
        %v1658 = vmax.f32 %v1594, 0.0
        %v1659 = vmax.f32 %v1595, 0.0
        %v1660 = vmax.f32 %v1596, 0.0
        %v1661 = vmax.f32 %v1597, 0.0
        %v1662 = vmax.f32 %v1598, 0.0
        %v1663 = vmax.f32 %v1599, 0.0
        %v1664 = vmax.f32 %v1600, 0.0
        %v1665 = vmax.f32 %v1601, 0.0
        %v1666 = vmax.f32 %v1602, 0.0
        %v1667 = vmax.f32 %v1603, 0.0
        %v1668 = vmax.f32 %v1604, 0.0
        %v1669 = vmax.f32 %v1605, 0.0
        %v1670 = vmax.f32 %v1606, 0.0
        %v1671 = vmax.f32 %v1607, 0.0
        %v1672 = vmax.f32 %v1608, 0.0
        %v1673 = vmax.f32 %v1609, 0.0
        %v1674 = vmax.f32 %v1610, 0.0
        %v1675 = vmax.f32 %v1611, 0.0
        %v1676 = vmax.f32 %v1612, 0.0
        %v1677 = vmax.f32 %v1613, 0.0
        %v1678 = vmax.f32 %v1614, 0.0
        %v1679 = vmax.f32 %v1615, 0.0
        %v1680 = vmax.f32 %v1616, 0.0
        %v1681 = vmax.f32 %v1617, 0.0
        %v1682 = vmax.f32 %v1618, 0.0
        %v1683 = vmax.f32 %v1619, 0.0
        %v1684 = vmax.f32 %v1620, 0.0
        %v1685 = vmax.f32 %v1621, 0.0
        %v1686 = vmax.f32 %v1622, 0.0
        %v1687 = vmax.f32 %v1623, 0.0
        %v1688 = vmax.f32 %v1624, 0.0
        %v1689 = vmax.f32 %v1625, 0.0
        %v1690 = vmax.f32 %v1626, 0.0
        %v1691 = vmax.f32 %v1627, 0.0
        %v1692 = vmax.f32 %v1628, 0.0
        %v1693 = vmax.f32 %v1629, 0.0
        %v1694 = vmax.f32 %v1630, 0.0
        %v1695 = vmax.f32 %v1631, 0.0
        %v1696 = vmax.f32 %v1632, 0.0
        %v1697 = vmax.f32 %v1633, 0.0
        %v1698 = vmax.f32 %v1634, 0.0
        %v1699 = vmax.f32 %v1635, 0.0
        %v1700 = vmax.f32 %v1636, 0.0
        %v1701 = vmax.f32 %v1637, 0.0
        %v1702 = vmax.f32 %v1638, 0.0
        %v1703 = vmax.f32 %v1639, 0.0
        %v1704 = vmax.f32 %v1640, 0.0
        %v1705 = vmax.f32 %v1641, 0.0
        %v1706 = vmax.f32 %v1642, 0.0
        %v1707 = vmax.f32 %v1643, 0.0
        %v1708 = vmax.f32 %v1644, 0.0
        %v1709 = vmax.f32 %v1645, 0.0
        %v1710 = vmax.f32 %v1646, 0.0
        %v1711 = vmax.f32 %v1647, 0.0
        %v1712 = vmax.f32 %v1648, 0.0
        %v1713 = vpack.c.bf16 %v1650, %v1649
        %v1714 = vpack.c.bf16 %v1652, %v1651
        %v1715 = vpack.c.bf16 %v1654, %v1653
        %v1716 = vpack.c.bf16 %v1656, %v1655
        %v1717 = vpack.c.bf16 %v1658, %v1657
        %v1718 = vpack.c.bf16 %v1660, %v1659
        %v1719 = vpack.c.bf16 %v1662, %v1661
        %v1720 = vpack.c.bf16 %v1664, %v1663
        %v1721 = vpack.c.bf16 %v1666, %v1665
        %v1722 = vpack.c.bf16 %v1668, %v1667
        %v1723 = vpack.c.bf16 %v1670, %v1669
        %v1724 = vpack.c.bf16 %v1672, %v1671
        %v1725 = vpack.c.bf16 %v1674, %v1673
        %v1726 = vpack.c.bf16 %v1676, %v1675
        %v1727 = vpack.c.bf16 %v1678, %v1677
        %v1728 = vpack.c.bf16 %v1680, %v1679
        %v1729 = vpack.c.bf16 %v1682, %v1681
        %v1730 = vpack.c.bf16 %v1684, %v1683
        %v1731 = vpack.c.bf16 %v1686, %v1685
        %v1732 = vpack.c.bf16 %v1688, %v1687
        %v1733 = vpack.c.bf16 %v1690, %v1689
        %v1734 = vpack.c.bf16 %v1692, %v1691
        %v1735 = vpack.c.bf16 %v1694, %v1693
        %v1736 = vpack.c.bf16 %v1696, %v1695
        %v1737 = vpack.c.bf16 %v1698, %v1697
        %v1738 = vpack.c.bf16 %v1700, %v1699
        %v1739 = vpack.c.bf16 %v1702, %v1701
        %v1740 = vpack.c.bf16 %v1704, %v1703
        %v1741 = vpack.c.bf16 %v1706, %v1705
        %v1742 = vpack.c.bf16 %v1708, %v1707
        %v1743 = vpack.c.bf16 %v1710, %v1709
        %v1744 = vpack.c.bf16 %v1712, %v1711
        %v1745 = vld [vmem:[%s3] sm:$0xf]
        %v1746 = vld [vmem:[%s3 + $0x4] sm:$0xf]
        %v1747 = vld [vmem:[%s3 + $0x8] sm:$0xf]
        %v1748 = vld [vmem:[%s3 + $0xc] sm:$0xf]
        %v1749 = vld [vmem:[%s3 + $0x10] sm:$0xf]
        %v1750 = vld [vmem:[%s3 + $0x14] sm:$0xf]
        %v1751 = vld [vmem:[%s3 + $0x18] sm:$0xf]
        %v1752 = vld [vmem:[%s3 + $0x1c] sm:$0xf]
        %v1753 = vld [vmem:[%s4] sm:$0x1]
        %v1755 = vlaneseq
        %v1756 = vshrl.u32 %v1755, 7
        %v1757 = vsub.s32 0, %v1756
        %v1758 = vrot.slane %v1753, %v1757
        %v1768 = vunpack.c.l.b16 %v1745
        %v1769 = vunpack.c.l.b16 %v1746
        %v1770 = vunpack.c.l.b16 %v1747
        %v1771 = vunpack.c.l.b16 %v1748
        %v1772 = vunpack.c.l.b16 %v1749
        %v1773 = vunpack.c.l.b16 %v1750
        %v1774 = vunpack.c.l.b16 %v1751
        %v1775 = vunpack.c.l.b16 %v1752
        %v1776 = vpack.c.b16 %v1769, %v1768
        %v1777 = vpack.c.b16 %v1771, %v1770
        %v1778 = vpack.c.b16 %v1773, %v1772
        %v1779 = vpack.c.b16 %v1775, %v1774
        %vm1784 = vcmask 523264
        %v1786 = vsel %vm1784, %v1713, 0
        %v1789 = vsel %vm1784, %v1714, 0
        %v1792 = vsel %vm1784, %v1715, 0
        %v1795 = vsel %vm1784, %v1716, 0
        %v1798 = vsel %vm1784, %v1717, 0
        %v1801 = vsel %vm1784, %v1718, 0
        %v1804 = vsel %vm1784, %v1719, 0
        %v1807 = vsel %vm1784, %v1720, 0
        %v1810 = vsel %vm1784, %v1721, 0
        %v1813 = vsel %vm1784, %v1722, 0
        %v1816 = vsel %vm1784, %v1723, 0
        %v1819 = vsel %vm1784, %v1724, 0
        %v1822 = vsel %vm1784, %v1725, 0
        %v1825 = vsel %vm1784, %v1726, 0
        %v1828 = vsel %vm1784, %v1727, 0
        %v1831 = vsel %vm1784, %v1728, 0
        %v1834 = vsel %vm1784, %v1729, 0
        %v1837 = vsel %vm1784, %v1730, 0
        %v1840 = vsel %vm1784, %v1731, 0
        %v1843 = vsel %vm1784, %v1732, 0
        %v1846 = vsel %vm1784, %v1733, 0
        %v1849 = vsel %vm1784, %v1734, 0
        %v1852 = vsel %vm1784, %v1735, 0
        %v1855 = vsel %vm1784, %v1736, 0
        %v1858 = vsel %vm1784, %v1737, 0
        %v1861 = vsel %vm1784, %v1738, 0
        %v1864 = vsel %vm1784, %v1739, 0
        %v1867 = vsel %vm1784, %v1740, 0
        %v1870 = vsel %vm1784, %v1741, 0
        %v1873 = vsel %vm1784, %v1742, 0
        %v1876 = vsel %vm1784, %v1743, 0
        %v1879 = vsel %vm1784, %v1744, 0
        %1881 = vmatprep.subr.bf16.mxu0 0
        %1882 = vmatpush1.bf16.msra.mxu0 %v1776
        %1883 = vmatprep.subr.bf16.mxu0 0
        %1884 = vmatpush1.bf16.msra.mxu0 %v1777
        %1885 = vmatprep.subr.bf16.mxu0 0
        %1886 = vmatpush1.bf16.msra.mxu0 %v1778
        %1887 = vmatprep.subr.bf16.mxu0 0
        %1888 = vmatpush1.bf16.msra.mxu0 %v1779
        %1889 = vmatprep.subr.bf16.mxu0 0
        %1890 = vmatpush1.bf16.msra.mxu0 0
        %1891 = vmatprep.subr.bf16.mxu0 0
        %1892 = vmatpush1.bf16.msra.mxu0 0
        %1893 = vmatprep.subr.bf16.mxu0 0
        %1894 = vmatpush1.bf16.msra.mxu0 0
        %1895 = vmatprep.subr.bf16.mxu0 0
        %1896 = vmatpush1.bf16.msra.mxu0 0
        %1897 = vmatprep.subr.bf16.mxu0 0
        %1898 = vmatpush1.bf16.msra.mxu0 0
        %1899 = vmatprep.subr.bf16.mxu0 0
        %1900 = vmatpush1.bf16.msra.mxu0 0
        %1901 = vmatprep.subr.bf16.mxu0 0
        %1902 = vmatpush1.bf16.msra.mxu0 0
        %1903 = vmatprep.subr.bf16.mxu0 0
        %1904 = vmatpush1.bf16.msra.mxu0 0
        %1905 = vmatprep.subr.bf16.mxu0 0
        %1906 = vmatpush1.bf16.msra.mxu0 0
        %1907 = vmatprep.subr.bf16.mxu0 0
        %1908 = vmatpush1.bf16.msra.mxu0 0
        %1909 = vmatprep.subr.bf16.mxu0 0
        %1910 = vmatpush1.bf16.msra.mxu0 0
        %1911 = vmatprep.subr.bf16.mxu0 0
        %1912 = vmatpush1.bf16.msra.mxu0 0
        %1913 = vmatprep.mubr.bf16.mxu0 0
        %1914 = vmatmul.mubr.bf16.gmra.mrb[0].mxu0 %v1786
        %v1915 = vpop.f32.mrb[0].mxu0
        %v1916 = vadd.f32 %v1758, %v1915
        %v1917 = vpop.f32.mrb[0].mxu0
        %v1918 = vpop.f32.mrb[0].mxu0
        %v1919 = vadd.f32 %v1758, %v1918
        %v1920 = vpop.f32.mrb[0].mxu0
        %1921 = vmatprep.mubr.bf16.mxu0 0
        %1922 = vmatmul.mubr.bf16.gmra.mrb[0].mxu0 %v1789
        %v1923 = vpop.f32.mrb[0].mxu0
        %v1924 = vadd.f32 %v1758, %v1923
        %v1925 = vpop.f32.mrb[0].mxu0
        %v1926 = vpop.f32.mrb[0].mxu0
        %v1927 = vadd.f32 %v1758, %v1926
        %v1928 = vpop.f32.mrb[0].mxu0
        %1929 = vmatprep.mubr.bf16.mxu0 0
        %1930 = vmatmul.mubr.bf16.gmra.mrb[0].mxu0 %v1792
        %v1931 = vpop.f32.mrb[0].mxu0
        %v1932 = vadd.f32 %v1758, %v1931
        %v1933 = vpop.f32.mrb[0].mxu0
        %v1934 = vpop.f32.mrb[0].mxu0
        %v1935 = vadd.f32 %v1758, %v1934
        %v1936 = vpop.f32.mrb[0].mxu0
        %1937 = vmatprep.mubr.bf16.mxu0 0
        %1938 = vmatmul.mubr.bf16.gmra.mrb[0].mxu0 %v1795
        %v1939 = vpop.f32.mrb[0].mxu0
        %v1940 = vadd.f32 %v1758, %v1939
        %v1941 = vpop.f32.mrb[0].mxu0
        %v1942 = vpop.f32.mrb[0].mxu0
        %v1943 = vadd.f32 %v1758, %v1942
        %v1944 = vpop.f32.mrb[0].mxu0
        %1945 = vmatprep.mubr.bf16.mxu0 0
        %1946 = vmatmul.mubr.bf16.gmra.mrb[0].mxu0 %v1798
        %v1947 = vpop.f32.mrb[0].mxu0
        %v1948 = vadd.f32 %v1758, %v1947
        %v1949 = vpop.f32.mrb[0].mxu0
        %v1950 = vpop.f32.mrb[0].mxu0
        %v1951 = vadd.f32 %v1758, %v1950
        %v1952 = vpop.f32.mrb[0].mxu0
        %1953 = vmatprep.mubr.bf16.mxu0 0
        %1954 = vmatmul.mubr.bf16.gmra.mrb[0].mxu0 %v1801
        %v1955 = vpop.f32.mrb[0].mxu0
        %v1956 = vadd.f32 %v1758, %v1955
        %v1957 = vpop.f32.mrb[0].mxu0
        %v1958 = vpop.f32.mrb[0].mxu0
        %v1959 = vadd.f32 %v1758, %v1958
        %v1960 = vpop.f32.mrb[0].mxu0
        %1961 = vmatprep.mubr.bf16.mxu0 0
        %1962 = vmatmul.mubr.bf16.gmra.mrb[0].mxu0 %v1804
        %v1963 = vpop.f32.mrb[0].mxu0
        %v1964 = vadd.f32 %v1758, %v1963
        %v1965 = vpop.f32.mrb[0].mxu0
        %v1966 = vpop.f32.mrb[0].mxu0
        %v1967 = vadd.f32 %v1758, %v1966
        %v1968 = vpop.f32.mrb[0].mxu0
        %1969 = vmatprep.mubr.bf16.mxu0 0
        %1970 = vmatmul.mubr.bf16.gmra.mrb[0].mxu0 %v1807
        %v1971 = vpop.f32.mrb[0].mxu0
        %v1972 = vadd.f32 %v1758, %v1971
        %v1973 = vpop.f32.mrb[0].mxu0
        %v1974 = vpop.f32.mrb[0].mxu0
        %v1975 = vadd.f32 %v1758, %v1974
        %v1976 = vpop.f32.mrb[0].mxu0
        %1977 = vmatprep.mubr.bf16.mxu0 0
        %1978 = vmatmul.mubr.bf16.gmra.mrb[0].mxu0 %v1810
        %v1979 = vpop.f32.mrb[0].mxu0
        %v1980 = vadd.f32 %v1758, %v1979
        %v1981 = vpop.f32.mrb[0].mxu0
        %v1982 = vpop.f32.mrb[0].mxu0
        %v1983 = vadd.f32 %v1758, %v1982
        %v1984 = vpop.f32.mrb[0].mxu0
        %1985 = vmatprep.mubr.bf16.mxu0 0
        %1986 = vmatmul.mubr.bf16.gmra.mrb[0].mxu0 %v1813
        %v1987 = vpop.f32.mrb[0].mxu0
        %v1988 = vadd.f32 %v1758, %v1987
        %v1989 = vpop.f32.mrb[0].mxu0
        %v1990 = vpop.f32.mrb[0].mxu0
        %v1991 = vadd.f32 %v1758, %v1990
        %v1992 = vpop.f32.mrb[0].mxu0
        %1993 = vmatprep.mubr.bf16.mxu0 0
        %1994 = vmatmul.mubr.bf16.gmra.mrb[0].mxu0 %v1816
        %v1995 = vpop.f32.mrb[0].mxu0
        %v1996 = vadd.f32 %v1758, %v1995
        %v1997 = vpop.f32.mrb[0].mxu0
        %v1998 = vpop.f32.mrb[0].mxu0
        %v1999 = vadd.f32 %v1758, %v1998
        %v2000 = vpop.f32.mrb[0].mxu0
        %2001 = vmatprep.mubr.bf16.mxu0 0
        %2002 = vmatmul.mubr.bf16.gmra.mrb[0].mxu0 %v1819
        %v2003 = vpop.f32.mrb[0].mxu0
        %v2004 = vadd.f32 %v1758, %v2003
        %v2005 = vpop.f32.mrb[0].mxu0
        %v2006 = vpop.f32.mrb[0].mxu0
        %v2007 = vadd.f32 %v1758, %v2006
        %v2008 = vpop.f32.mrb[0].mxu0
        %2009 = vmatprep.mubr.bf16.mxu0 0
        %2010 = vmatmul.mubr.bf16.gmra.mrb[0].mxu0 %v1822
        %v2011 = vpop.f32.mrb[0].mxu0
        %v2012 = vadd.f32 %v1758, %v2011
        %v2013 = vpop.f32.mrb[0].mxu0
        %v2014 = vpop.f32.mrb[0].mxu0
        %v2015 = vadd.f32 %v1758, %v2014
        %v2016 = vpop.f32.mrb[0].mxu0
        %2017 = vmatprep.mubr.bf16.mxu0 0
        %2018 = vmatmul.mubr.bf16.gmra.mrb[0].mxu0 %v1825
        %v2019 = vpop.f32.mrb[0].mxu0
        %v2020 = vadd.f32 %v1758, %v2019
        %v2021 = vpop.f32.mrb[0].mxu0
        %v2022 = vpop.f32.mrb[0].mxu0
        %v2023 = vadd.f32 %v1758, %v2022
        %v2024 = vpop.f32.mrb[0].mxu0
        %2025 = vmatprep.mubr.bf16.mxu0 0
        %2026 = vmatmul.mubr.bf16.gmra.mrb[0].mxu0 %v1828
        %v2027 = vpop.f32.mrb[0].mxu0
        %v2028 = vadd.f32 %v1758, %v2027
        %v2029 = vpop.f32.mrb[0].mxu0
        %v2030 = vpop.f32.mrb[0].mxu0
        %v2031 = vadd.f32 %v1758, %v2030
        %v2032 = vpop.f32.mrb[0].mxu0
        %2033 = vmatprep.mubr.bf16.mxu0 0
        %2034 = vmatmul.mubr.bf16.gmra.mrb[0].mxu0 %v1831
        %v2035 = vpop.f32.mrb[0].mxu0
        %v2036 = vadd.f32 %v1758, %v2035
        %v2037 = vpop.f32.mrb[0].mxu0
        %v2038 = vpop.f32.mrb[0].mxu0
        %v2039 = vadd.f32 %v1758, %v2038
        %v2040 = vpop.f32.mrb[0].mxu0
        %2041 = vmatprep.mubr.bf16.mxu0 0
        %2042 = vmatmul.mubr.bf16.gmra.mrb[0].mxu0 %v1834
        %v2043 = vpop.f32.mrb[0].mxu0
        %v2044 = vadd.f32 %v1758, %v2043
        %v2045 = vpop.f32.mrb[0].mxu0
        %v2046 = vpop.f32.mrb[0].mxu0
        %v2047 = vadd.f32 %v1758, %v2046
        %v2048 = vpop.f32.mrb[0].mxu0
        %2049 = vmatprep.mubr.bf16.mxu0 0
        %2050 = vmatmul.mubr.bf16.gmra.mrb[0].mxu0 %v1837
        %v2051 = vpop.f32.mrb[0].mxu0
        %v2052 = vadd.f32 %v1758, %v2051
        %v2053 = vpop.f32.mrb[0].mxu0
        %v2054 = vpop.f32.mrb[0].mxu0
        %v2055 = vadd.f32 %v1758, %v2054
        %v2056 = vpop.f32.mrb[0].mxu0
        %2057 = vmatprep.mubr.bf16.mxu0 0
        %2058 = vmatmul.mubr.bf16.gmra.mrb[0].mxu0 %v1840
        %v2059 = vpop.f32.mrb[0].mxu0
        %v2060 = vadd.f32 %v1758, %v2059
        %v2061 = vpop.f32.mrb[0].mxu0
        %v2062 = vpop.f32.mrb[0].mxu0
        %v2063 = vadd.f32 %v1758, %v2062
        %v2064 = vpop.f32.mrb[0].mxu0
        %2065 = vmatprep.mubr.bf16.mxu0 0
        %2066 = vmatmul.mubr.bf16.gmra.mrb[0].mxu0 %v1843
        %v2067 = vpop.f32.mrb[0].mxu0
        %v2068 = vadd.f32 %v1758, %v2067
        %v2069 = vpop.f32.mrb[0].mxu0
        %v2070 = vpop.f32.mrb[0].mxu0
        %v2071 = vadd.f32 %v1758, %v2070
        %v2072 = vpop.f32.mrb[0].mxu0
        %2073 = vmatprep.mubr.bf16.mxu0 0
        %2074 = vmatmul.mubr.bf16.gmra.mrb[0].mxu0 %v1846
        %v2075 = vpop.f32.mrb[0].mxu0
        %v2076 = vadd.f32 %v1758, %v2075
        %v2077 = vpop.f32.mrb[0].mxu0
        %v2078 = vpop.f32.mrb[0].mxu0
        %v2079 = vadd.f32 %v1758, %v2078
        %v2080 = vpop.f32.mrb[0].mxu0
        %2081 = vmatprep.mubr.bf16.mxu0 0
        %2082 = vmatmul.mubr.bf16.gmra.mrb[0].mxu0 %v1849
        %v2083 = vpop.f32.mrb[0].mxu0
        %v2084 = vadd.f32 %v1758, %v2083
        %v2085 = vpop.f32.mrb[0].mxu0
        %v2086 = vpop.f32.mrb[0].mxu0
        %v2087 = vadd.f32 %v1758, %v2086
        %v2088 = vpop.f32.mrb[0].mxu0
        %2089 = vmatprep.mubr.bf16.mxu0 0
        %2090 = vmatmul.mubr.bf16.gmra.mrb[0].mxu0 %v1852
        %v2091 = vpop.f32.mrb[0].mxu0
        %v2092 = vadd.f32 %v1758, %v2091
        %v2093 = vpop.f32.mrb[0].mxu0
        %v2094 = vpop.f32.mrb[0].mxu0
        %v2095 = vadd.f32 %v1758, %v2094
        %v2096 = vpop.f32.mrb[0].mxu0
        %2097 = vmatprep.mubr.bf16.mxu0 0
        %2098 = vmatmul.mubr.bf16.gmra.mrb[0].mxu0 %v1855
        %v2099 = vpop.f32.mrb[0].mxu0
        %v2100 = vadd.f32 %v1758, %v2099
        %v2101 = vpop.f32.mrb[0].mxu0
        %v2102 = vpop.f32.mrb[0].mxu0
        %v2103 = vadd.f32 %v1758, %v2102
        %v2104 = vpop.f32.mrb[0].mxu0
        %2105 = vmatprep.mubr.bf16.mxu0 0
        %2106 = vmatmul.mubr.bf16.gmra.mrb[0].mxu0 %v1858
        %v2107 = vpop.f32.mrb[0].mxu0
        %v2108 = vadd.f32 %v1758, %v2107
        %v2109 = vpop.f32.mrb[0].mxu0
        %v2110 = vpop.f32.mrb[0].mxu0
        %v2111 = vadd.f32 %v1758, %v2110
        %v2112 = vpop.f32.mrb[0].mxu0
        %2113 = vmatprep.mubr.bf16.mxu0 0
        %2114 = vmatmul.mubr.bf16.gmra.mrb[0].mxu0 %v1861
        %v2115 = vpop.f32.mrb[0].mxu0
        %v2116 = vadd.f32 %v1758, %v2115
        %v2117 = vpop.f32.mrb[0].mxu0
        %v2118 = vpop.f32.mrb[0].mxu0
        %v2119 = vadd.f32 %v1758, %v2118
        %v2120 = vpop.f32.mrb[0].mxu0
        %2121 = vmatprep.mubr.bf16.mxu0 0
        %2122 = vmatmul.mubr.bf16.gmra.mrb[0].mxu0 %v1864
        %v2123 = vpop.f32.mrb[0].mxu0
        %v2124 = vadd.f32 %v1758, %v2123
        %v2125 = vpop.f32.mrb[0].mxu0
        %v2126 = vpop.f32.mrb[0].mxu0
        %v2127 = vadd.f32 %v1758, %v2126
        %v2128 = vpop.f32.mrb[0].mxu0
        %2129 = vmatprep.mubr.bf16.mxu0 0
        %2130 = vmatmul.mubr.bf16.gmra.mrb[0].mxu0 %v1867
        %v2131 = vpop.f32.mrb[0].mxu0
        %v2132 = vadd.f32 %v1758, %v2131
        %v2133 = vpop.f32.mrb[0].mxu0
        %v2134 = vpop.f32.mrb[0].mxu0
        %v2135 = vadd.f32 %v1758, %v2134
        %v2136 = vpop.f32.mrb[0].mxu0
        %2137 = vmatprep.mubr.bf16.mxu0 0
        %2138 = vmatmul.mubr.bf16.gmra.mrb[0].mxu0 %v1870
        %v2139 = vpop.f32.mrb[0].mxu0
        %v2140 = vadd.f32 %v1758, %v2139
        %v2141 = vpop.f32.mrb[0].mxu0
        %v2142 = vpop.f32.mrb[0].mxu0
        %v2143 = vadd.f32 %v1758, %v2142
        %v2144 = vpop.f32.mrb[0].mxu0
        %2145 = vmatprep.mubr.bf16.mxu0 0
        %2146 = vmatmul.mubr.bf16.gmra.mrb[0].mxu0 %v1873
        %v2147 = vpop.f32.mrb[0].mxu0
        %v2148 = vadd.f32 %v1758, %v2147
        %v2149 = vpop.f32.mrb[0].mxu0
        %v2150 = vpop.f32.mrb[0].mxu0
        %v2151 = vadd.f32 %v1758, %v2150
        %v2152 = vpop.f32.mrb[0].mxu0
        %2153 = vmatprep.mubr.bf16.mxu0 0
        %2154 = vmatmul.mubr.bf16.gmra.mrb[0].mxu0 %v1876
        %v2155 = vpop.f32.mrb[0].mxu0
        %v2156 = vadd.f32 %v1758, %v2155
        %v2157 = vpop.f32.mrb[0].mxu0
        %v2158 = vpop.f32.mrb[0].mxu0
        %v2159 = vadd.f32 %v1758, %v2158
        %v2160 = vpop.f32.mrb[0].mxu0
        %2161 = vmatprep.mubr.bf16.mxu0 0
        %2162 = vmatmul.mubr.bf16.gmra.mrb[0].mxu0 %v1879
        %v2163 = vpop.f32.mrb[0].mxu0
        %v2164 = vadd.f32 %v1758, %v2163
        %v2165 = vpop.f32.mrb[0].mxu0
        %v2166 = vpop.f32.mrb[0].mxu0
        %v2167 = vadd.f32 %v1758, %v2166
        %v2168 = vpop.f32.mrb[0].mxu0
        %2169 = vdwg.mxu0
        %v2170 = vmax.f32 %v1916, 0.0
        %v2171 = vmax.f32 %v1919, 0.0
        %v2172 = vmax.f32 %v1924, 0.0
        %v2173 = vmax.f32 %v1927, 0.0
        %v2174 = vmax.f32 %v1932, 0.0
        %v2175 = vmax.f32 %v1935, 0.0
        %v2176 = vmax.f32 %v1940, 0.0
        %v2177 = vmax.f32 %v1943, 0.0
        %v2178 = vmax.f32 %v1948, 0.0
        %v2179 = vmax.f32 %v1951, 0.0
        %v2180 = vmax.f32 %v1956, 0.0
        %v2181 = vmax.f32 %v1959, 0.0
        %v2182 = vmax.f32 %v1964, 0.0
        %v2183 = vmax.f32 %v1967, 0.0
        %v2184 = vmax.f32 %v1972, 0.0
        %v2185 = vmax.f32 %v1975, 0.0
        %v2186 = vmax.f32 %v1980, 0.0
        %v2187 = vmax.f32 %v1983, 0.0
        %v2188 = vmax.f32 %v1988, 0.0
        %v2189 = vmax.f32 %v1991, 0.0
        %v2190 = vmax.f32 %v1996, 0.0
        %v2191 = vmax.f32 %v1999, 0.0
        %v2192 = vmax.f32 %v2004, 0.0
        %v2193 = vmax.f32 %v2007, 0.0
        %v2194 = vmax.f32 %v2012, 0.0
        %v2195 = vmax.f32 %v2015, 0.0
        %v2196 = vmax.f32 %v2020, 0.0
        %v2197 = vmax.f32 %v2023, 0.0
        %v2198 = vmax.f32 %v2028, 0.0
        %v2199 = vmax.f32 %v2031, 0.0
        %v2200 = vmax.f32 %v2036, 0.0
        %v2201 = vmax.f32 %v2039, 0.0
        %v2202 = vmax.f32 %v2044, 0.0
        %v2203 = vmax.f32 %v2047, 0.0
        %v2204 = vmax.f32 %v2052, 0.0
        %v2205 = vmax.f32 %v2055, 0.0
        %v2206 = vmax.f32 %v2060, 0.0
        %v2207 = vmax.f32 %v2063, 0.0
        %v2208 = vmax.f32 %v2068, 0.0
        %v2209 = vmax.f32 %v2071, 0.0
        %v2210 = vmax.f32 %v2076, 0.0
        %v2211 = vmax.f32 %v2079, 0.0
        %v2212 = vmax.f32 %v2084, 0.0
        %v2213 = vmax.f32 %v2087, 0.0
        %v2214 = vmax.f32 %v2092, 0.0
        %v2215 = vmax.f32 %v2095, 0.0
        %v2216 = vmax.f32 %v2100, 0.0
        %v2217 = vmax.f32 %v2103, 0.0
        %v2218 = vmax.f32 %v2108, 0.0
        %v2219 = vmax.f32 %v2111, 0.0
        %v2220 = vmax.f32 %v2116, 0.0
        %v2221 = vmax.f32 %v2119, 0.0
        %v2222 = vmax.f32 %v2124, 0.0
        %v2223 = vmax.f32 %v2127, 0.0
        %v2224 = vmax.f32 %v2132, 0.0
        %v2225 = vmax.f32 %v2135, 0.0
        %v2226 = vmax.f32 %v2140, 0.0
        %v2227 = vmax.f32 %v2143, 0.0
        %v2228 = vmax.f32 %v2148, 0.0
        %v2229 = vmax.f32 %v2151, 0.0
        %v2230 = vmax.f32 %v2156, 0.0
        %v2231 = vmax.f32 %v2159, 0.0
        %v2232 = vmax.f32 %v2164, 0.0
        %v2233 = vmax.f32 %v2167, 0.0
        %2234 = vxpose.xlu0.b32.start [1/16] %v2170, 128
        %2235 = vxpose.xlu0.b32.cont [2/16] %v2171, 128
        %2236 = vxpose.xlu0.b32.cont [3/16] %v2172, 128
        %2237 = vxpose.xlu0.b32.cont [4/16] %v2173, 128
        %2238 = vxpose.xlu0.b32.cont [5/16] %v2174, 128
        %2239 = vxpose.xlu0.b32.cont [6/16] %v2175, 128
        %2240 = vxpose.xlu0.b32.cont [7/16] %v2176, 128
        %2241 = vxpose.xlu0.b32.cont [8/16] %v2177, 128
        %2242 = vxpose.xlu0.b32.cont [9/16] %v2178, 128
        %2243 = vxpose.xlu0.b32.cont [10/16] %v2179, 128
        %2244 = vxpose.xlu0.b32.cont [11/16] %v2180, 128
        %2245 = vxpose.xlu0.b32.cont [12/16] %v2181, 128
        %2246 = vxpose.xlu0.b32.cont [13/16] %v2182, 128
        %2247 = vxpose.xlu0.b32.cont [14/16] %v2183, 128
        %2248 = vxpose.xlu0.b32.cont [15/16] %v2184, 128
        %2249 = vxpose.xlu0.b32.end [16/16] %v2185, 128
        %v2250 = vpop.trf.xlu0
        %v2251 = vpop.trf.xlu0
        %v2252 = vpop.trf.xlu0
        %v2253 = vpop.trf.xlu0
        %v2254 = vpop.trf.xlu0
        %v2255 = vpop.trf.xlu0
        %v2256 = vpop.trf.xlu0
        %v2257 = vpop.trf.xlu0
        %v2258 = vpop.trf.xlu0
        %v2259 = vpop.trf.xlu0
        %v2260 = vpop.trf.xlu0
        %v2261 = vpop.trf.xlu0
        %v2262 = vpop.trf.xlu0
        %v2263 = vpop.trf.xlu0
        %v2264 = vpop.trf.xlu0
        %v2265 = vpop.trf.xlu0
        %2266 = vxpose.xlu0.b32.start [1/16] %v2186, 128
        %2267 = vxpose.xlu0.b32.cont [2/16] %v2187, 128
        %2268 = vxpose.xlu0.b32.cont [3/16] %v2188, 128
        %2269 = vxpose.xlu0.b32.cont [4/16] %v2189, 128
        %2270 = vxpose.xlu0.b32.cont [5/16] %v2190, 128
        %2271 = vxpose.xlu0.b32.cont [6/16] %v2191, 128
        %2272 = vxpose.xlu0.b32.cont [7/16] %v2192, 128
        %2273 = vxpose.xlu0.b32.cont [8/16] %v2193, 128
        %2274 = vxpose.xlu0.b32.cont [9/16] %v2194, 128
        %2275 = vxpose.xlu0.b32.cont [10/16] %v2195, 128
        %2276 = vxpose.xlu0.b32.cont [11/16] %v2196, 128
        %2277 = vxpose.xlu0.b32.cont [12/16] %v2197, 128
        %2278 = vxpose.xlu0.b32.cont [13/16] %v2198, 128
        %2279 = vxpose.xlu0.b32.cont [14/16] %v2199, 128
        %2280 = vxpose.xlu0.b32.cont [15/16] %v2200, 128
        %2281 = vxpose.xlu0.b32.end [16/16] %v2201, 128
        %v2282 = vpop.trf.xlu0
        %v2283 = vpop.trf.xlu0
        %v2284 = vpop.trf.xlu0
        %v2285 = vpop.trf.xlu0
        %v2286 = vpop.trf.xlu0
        %v2287 = vpop.trf.xlu0
        %v2288 = vpop.trf.xlu0
        %v2289 = vpop.trf.xlu0
        %v2290 = vpop.trf.xlu0
        %v2291 = vpop.trf.xlu0
        %v2292 = vpop.trf.xlu0
        %v2293 = vpop.trf.xlu0
        %v2294 = vpop.trf.xlu0
        %v2295 = vpop.trf.xlu0
        %v2296 = vpop.trf.xlu0
        %v2297 = vpop.trf.xlu0
        %2298 = vxpose.xlu0.b32.start [1/16] %v2202, 128
        %2299 = vxpose.xlu0.b32.cont [2/16] %v2203, 128
        %2300 = vxpose.xlu0.b32.cont [3/16] %v2204, 128
        %2301 = vxpose.xlu0.b32.cont [4/16] %v2205, 128
        %2302 = vxpose.xlu0.b32.cont [5/16] %v2206, 128
        %2303 = vxpose.xlu0.b32.cont [6/16] %v2207, 128
        %2304 = vxpose.xlu0.b32.cont [7/16] %v2208, 128
        %2305 = vxpose.xlu0.b32.cont [8/16] %v2209, 128
        %2306 = vxpose.xlu0.b32.cont [9/16] %v2210, 128
        %2307 = vxpose.xlu0.b32.cont [10/16] %v2211, 128
        %2308 = vxpose.xlu0.b32.cont [11/16] %v2212, 128
        %2309 = vxpose.xlu0.b32.cont [12/16] %v2213, 128
        %2310 = vxpose.xlu0.b32.cont [13/16] %v2214, 128
        %2311 = vxpose.xlu0.b32.cont [14/16] %v2215, 128
        %2312 = vxpose.xlu0.b32.cont [15/16] %v2216, 128
        %2313 = vxpose.xlu0.b32.end [16/16] %v2217, 128
        %v2314 = vpop.trf.xlu0
        %v2315 = vpop.trf.xlu0
        %v2316 = vpop.trf.xlu0
        %v2317 = vpop.trf.xlu0
        %v2318 = vpop.trf.xlu0
        %v2319 = vpop.trf.xlu0
        %v2320 = vpop.trf.xlu0
        %v2321 = vpop.trf.xlu0
        %v2322 = vpop.trf.xlu0
        %v2323 = vpop.trf.xlu0
        %v2324 = vpop.trf.xlu0
        %v2325 = vpop.trf.xlu0
        %v2326 = vpop.trf.xlu0
        %v2327 = vpop.trf.xlu0
        %v2328 = vpop.trf.xlu0
        %v2329 = vpop.trf.xlu0
        %2330 = vxpose.xlu0.b32.start [1/16] %v2218, 128
        %2331 = vxpose.xlu0.b32.cont [2/16] %v2219, 128
        %2332 = vxpose.xlu0.b32.cont [3/16] %v2220, 128
        %2333 = vxpose.xlu0.b32.cont [4/16] %v2221, 128
        %2334 = vxpose.xlu0.b32.cont [5/16] %v2222, 128
        %2335 = vxpose.xlu0.b32.cont [6/16] %v2223, 128
        %2336 = vxpose.xlu0.b32.cont [7/16] %v2224, 128
        %2337 = vxpose.xlu0.b32.cont [8/16] %v2225, 128
        %2338 = vxpose.xlu0.b32.cont [9/16] %v2226, 128
        %2339 = vxpose.xlu0.b32.cont [10/16] %v2227, 128
        %2340 = vxpose.xlu0.b32.cont [11/16] %v2228, 128
        %2341 = vxpose.xlu0.b32.cont [12/16] %v2229, 128
        %2342 = vxpose.xlu0.b32.cont [13/16] %v2230, 128
        %2343 = vxpose.xlu0.b32.cont [14/16] %v2231, 128
        %2344 = vxpose.xlu0.b32.cont [15/16] %v2232, 128
        %2345 = vxpose.xlu0.b32.end [16/16] %v2233, 128
        %v2346 = vpop.trf.xlu0
        %v2347 = vpop.trf.xlu0
        %v2348 = vpop.trf.xlu0
        %v2349 = vpop.trf.xlu0
        %v2350 = vpop.trf.xlu0
        %v2351 = vpop.trf.xlu0
        %v2352 = vpop.trf.xlu0
        %v2353 = vpop.trf.xlu0
        %v2354 = vpop.trf.xlu0
        %v2355 = vpop.trf.xlu0
        %v2356 = vpop.trf.xlu0
        %v2357 = vpop.trf.xlu0
        %v2358 = vpop.trf.xlu0
        %v2359 = vpop.trf.xlu0
        %v2360 = vpop.trf.xlu0
        %v2361 = vpop.trf.xlu0
        %v2362 = vpack.c.bf16 %v2171, %v2170
        %v2363 = vpack.c.bf16 %v2173, %v2172
        %v2364 = vpack.c.bf16 %v2175, %v2174
        %v2365 = vpack.c.bf16 %v2177, %v2176
        %v2366 = vpack.c.bf16 %v2179, %v2178
        %v2367 = vpack.c.bf16 %v2181, %v2180
        %v2368 = vpack.c.bf16 %v2183, %v2182
        %v2369 = vpack.c.bf16 %v2185, %v2184
        %v2370 = vpack.c.bf16 %v2187, %v2186
        %v2371 = vpack.c.bf16 %v2189, %v2188
        %v2372 = vpack.c.bf16 %v2191, %v2190
        %v2373 = vpack.c.bf16 %v2193, %v2192
        %v2374 = vpack.c.bf16 %v2195, %v2194
        %v2375 = vpack.c.bf16 %v2197, %v2196
        %v2376 = vpack.c.bf16 %v2199, %v2198
        %v2377 = vpack.c.bf16 %v2201, %v2200
        %v2378 = vpack.c.bf16 %v2203, %v2202
        %v2379 = vpack.c.bf16 %v2205, %v2204
        %v2380 = vpack.c.bf16 %v2207, %v2206
        %v2381 = vpack.c.bf16 %v2209, %v2208
        %v2382 = vpack.c.bf16 %v2211, %v2210
        %v2383 = vpack.c.bf16 %v2213, %v2212
        %v2384 = vpack.c.bf16 %v2215, %v2214
        %v2385 = vpack.c.bf16 %v2217, %v2216
        %v2386 = vpack.c.bf16 %v2219, %v2218
        %v2387 = vpack.c.bf16 %v2221, %v2220
        %v2388 = vpack.c.bf16 %v2223, %v2222
        %v2389 = vpack.c.bf16 %v2225, %v2224
        %v2390 = vpack.c.bf16 %v2227, %v2226
        %v2391 = vpack.c.bf16 %v2229, %v2228
        %v2392 = vpack.c.bf16 %v2231, %v2230
        %v2393 = vpack.c.bf16 %v2233, %v2232
        %v2394 = vld [vmem:[%s5] sm:$0xff]
        %v2395 = vld [vmem:[%s5 + $0x8] sm:$0xff]
        %v2396 = vld [vmem:[%s5 + $0x10] sm:$0xff]
        %v2397 = vld [vmem:[%s5 + $0x18] sm:$0xff]
        %v2398 = vld [vmem:[%s5 + $0x20] sm:$0xff]
        %v2399 = vld [vmem:[%s5 + $0x28] sm:$0xff]
        %v2400 = vld [vmem:[%s5 + $0x30] sm:$0xff]
        %v2401 = vld [vmem:[%s5 + $0x38] sm:$0xff]
        %v2402 = vld [vmem:[%s5 + $0x40] sm:$0xff]
        %v2403 = vld [vmem:[%s5 + $0x48] sm:$0xff]
        %v2404 = vld [vmem:[%s5 + $0x50] sm:$0xff]
        %v2405 = vld [vmem:[%s5 + $0x58] sm:$0xff]
        %v2406 = vld [vmem:[%s5 + $0x60] sm:$0xff]
        %v2407 = vld [vmem:[%s5 + $0x68] sm:$0xff]
        %v2408 = vld [vmem:[%s5 + $0x70] sm:$0xff]
        %v2409 = vld [vmem:[%s5 + $0x78] sm:$0xff]
        %v2410 = vld [vmem:[%s5 + $0x80] sm:$0xff]
        %v2411 = vld [vmem:[%s5 + $0x88] sm:$0xff]
        %v2412 = vld [vmem:[%s5 + $0x90] sm:$0xff]
        %v2413 = vld [vmem:[%s5 + $0x98] sm:$0xff]
        %v2414 = vld [vmem:[%s5 + $0xa0] sm:$0xff]
        %v2415 = vld [vmem:[%s5 + $0xa8] sm:$0xff]
        %v2416 = vld [vmem:[%s5 + $0xb0] sm:$0xff]
        %v2417 = vld [vmem:[%s5 + $0xb8] sm:$0xff]
        %v2418 = vld [vmem:[%s5 + $0xc0] sm:$0xff]
        %v2419 = vld [vmem:[%s5 + $0xc8] sm:$0xff]
        %v2420 = vld [vmem:[%s5 + $0xd0] sm:$0xff]
        %v2421 = vld [vmem:[%s5 + $0xd8] sm:$0xff]
        %v2422 = vld [vmem:[%s5 + $0xe0] sm:$0xff]
        %v2423 = vld [vmem:[%s5 + $0xe8] sm:$0xff]
        %v2424 = vld [vmem:[%s5 + $0xf0] sm:$0xff]
        %v2425 = vld [vmem:[%s5 + $0xf8] sm:$0xff]
        %v2426 = vld [vmem:[%s5 + $0x100] sm:$0xff]
        %v2427 = vld [vmem:[%s5 + $0x108] sm:$0xff]
        %v2428 = vld [vmem:[%s5 + $0x110] sm:$0xff]
        %v2429 = vld [vmem:[%s5 + $0x118] sm:$0xff]
        %v2430 = vld [vmem:[%s5 + $0x120] sm:$0xff]
        %v2431 = vld [vmem:[%s5 + $0x128] sm:$0xff]
        %v2432 = vld [vmem:[%s5 + $0x130] sm:$0xff]
        %v2433 = vld [vmem:[%s5 + $0x138] sm:$0xff]
        %v2434 = vld [vmem:[%s5 + $0x140] sm:$0xff]
        %v2435 = vld [vmem:[%s5 + $0x148] sm:$0xff]
        %v2436 = vld [vmem:[%s5 + $0x150] sm:$0xff]
        %v2437 = vld [vmem:[%s5 + $0x158] sm:$0xff]
        %v2438 = vld [vmem:[%s5 + $0x160] sm:$0xff]
        %v2439 = vld [vmem:[%s5 + $0x168] sm:$0xff]
        %v2440 = vld [vmem:[%s5 + $0x170] sm:$0xff]
        %v2441 = vld [vmem:[%s5 + $0x178] sm:$0xff]
        %v2442 = vld [vmem:[%s5 + $0x180] sm:$0xff]
        %v2443 = vld [vmem:[%s5 + $0x188] sm:$0xff]
        %v2444 = vld [vmem:[%s5 + $0x190] sm:$0xff]
        %v2445 = vld [vmem:[%s5 + $0x198] sm:$0xff]
        %v2446 = vld [vmem:[%s5 + $0x1a0] sm:$0xff]
        %v2447 = vld [vmem:[%s5 + $0x1a8] sm:$0xff]
        %v2448 = vld [vmem:[%s5 + $0x1b0] sm:$0xff]
        %v2449 = vld [vmem:[%s5 + $0x1b8] sm:$0xff]
        %v2450 = vld [vmem:[%s5 + $0x1c0] sm:$0xff]
        %v2451 = vld [vmem:[%s5 + $0x1c8] sm:$0xff]
        %v2452 = vld [vmem:[%s5 + $0x1d0] sm:$0xff]
        %v2453 = vld [vmem:[%s5 + $0x1d8] sm:$0xff]
        %v2454 = vld [vmem:[%s5 + $0x1e0] sm:$0xff]
        %v2455 = vld [vmem:[%s5 + $0x1e8] sm:$0xff]
        %v2456 = vld [vmem:[%s5 + $0x1f0] sm:$0xff]
        %v2457 = vld [vmem:[%s5 + $0x1f8] sm:$0xff]
        %v2522 = vunpack.c.l.b16 %v2394
        %v2523 = vunpack.c.h.b16 %v2394
        %v2524 = vunpack.c.l.b16 %v2395
        %v2525 = vunpack.c.h.b16 %v2395
        %v2526 = vunpack.c.l.b16 %v2396
        %v2527 = vunpack.c.h.b16 %v2396
        %v2528 = vunpack.c.l.b16 %v2397
        %v2529 = vunpack.c.h.b16 %v2397
        %v2530 = vunpack.c.l.b16 %v2398
        %v2531 = vunpack.c.h.b16 %v2398
        %v2532 = vunpack.c.l.b16 %v2399
        %v2533 = vunpack.c.h.b16 %v2399
        %v2534 = vunpack.c.l.b16 %v2400
        %v2535 = vunpack.c.h.b16 %v2400
        %v2536 = vunpack.c.l.b16 %v2401
        %v2537 = vunpack.c.h.b16 %v2401
        %v2538 = vunpack.c.l.b16 %v2402
        %v2539 = vunpack.c.h.b16 %v2402
        %v2540 = vunpack.c.l.b16 %v2403
        %v2541 = vunpack.c.h.b16 %v2403
        %v2542 = vunpack.c.l.b16 %v2404
        %v2543 = vunpack.c.h.b16 %v2404
        %v2544 = vunpack.c.l.b16 %v2405
        %v2545 = vunpack.c.h.b16 %v2405
        %v2546 = vunpack.c.l.b16 %v2406
        %v2547 = vunpack.c.h.b16 %v2406
        %v2548 = vunpack.c.l.b16 %v2407
        %v2549 = vunpack.c.h.b16 %v2407
        %v2550 = vunpack.c.l.b16 %v2408
        %v2551 = vunpack.c.h.b16 %v2408
        %v2552 = vunpack.c.l.b16 %v2409
        %v2553 = vunpack.c.h.b16 %v2409
        %v2554 = vunpack.c.l.b16 %v2410
        %v2555 = vunpack.c.h.b16 %v2410
        %v2556 = vunpack.c.l.b16 %v2411
        %v2557 = vunpack.c.h.b16 %v2411
        %v2558 = vunpack.c.l.b16 %v2412
        %v2559 = vunpack.c.h.b16 %v2412
        %v2560 = vunpack.c.l.b16 %v2413
        %v2561 = vunpack.c.h.b16 %v2413
        %v2562 = vunpack.c.l.b16 %v2414
        %v2563 = vunpack.c.h.b16 %v2414
        %v2564 = vunpack.c.l.b16 %v2415
        %v2565 = vunpack.c.h.b16 %v2415
        %v2566 = vunpack.c.l.b16 %v2416
        %v2567 = vunpack.c.h.b16 %v2416
        %v2568 = vunpack.c.l.b16 %v2417
        %v2569 = vunpack.c.h.b16 %v2417
        %v2570 = vunpack.c.l.b16 %v2418
        %v2571 = vunpack.c.h.b16 %v2418
        %v2572 = vunpack.c.l.b16 %v2419
        %v2573 = vunpack.c.h.b16 %v2419
        %v2574 = vunpack.c.l.b16 %v2420
        %v2575 = vunpack.c.h.b16 %v2420
        %v2576 = vunpack.c.l.b16 %v2421
        %v2577 = vunpack.c.h.b16 %v2421
        %v2578 = vunpack.c.l.b16 %v2422
        %v2579 = vunpack.c.h.b16 %v2422
        %v2580 = vunpack.c.l.b16 %v2423
        %v2581 = vunpack.c.h.b16 %v2423
        %v2582 = vunpack.c.l.b16 %v2424
        %v2583 = vunpack.c.h.b16 %v2424
        %v2584 = vunpack.c.l.b16 %v2425
        %v2585 = vunpack.c.h.b16 %v2425
        %v2586 = vunpack.c.l.b16 %v2426
        %v2587 = vunpack.c.h.b16 %v2426
        %v2588 = vunpack.c.l.b16 %v2427
        %v2589 = vunpack.c.h.b16 %v2427
        %v2590 = vunpack.c.l.b16 %v2428
        %v2591 = vunpack.c.h.b16 %v2428
        %v2592 = vunpack.c.l.b16 %v2429
        %v2593 = vunpack.c.h.b16 %v2429
        %v2594 = vunpack.c.l.b16 %v2430
        %v2595 = vunpack.c.h.b16 %v2430
        %v2596 = vunpack.c.l.b16 %v2431
        %v2597 = vunpack.c.h.b16 %v2431
        %v2598 = vunpack.c.l.b16 %v2432
        %v2599 = vunpack.c.h.b16 %v2432
        %v2600 = vunpack.c.l.b16 %v2433
        %v2601 = vunpack.c.h.b16 %v2433
        %v2602 = vunpack.c.l.b16 %v2434
        %v2603 = vunpack.c.h.b16 %v2434
        %v2604 = vunpack.c.l.b16 %v2435
        %v2605 = vunpack.c.h.b16 %v2435
        %v2606 = vunpack.c.l.b16 %v2436
        %v2607 = vunpack.c.h.b16 %v2436
        %v2608 = vunpack.c.l.b16 %v2437
        %v2609 = vunpack.c.h.b16 %v2437
        %v2610 = vunpack.c.l.b16 %v2438
        %v2611 = vunpack.c.h.b16 %v2438
        %v2612 = vunpack.c.l.b16 %v2439
        %v2613 = vunpack.c.h.b16 %v2439
        %v2614 = vunpack.c.l.b16 %v2440
        %v2615 = vunpack.c.h.b16 %v2440
        %v2616 = vunpack.c.l.b16 %v2441
        %v2617 = vunpack.c.h.b16 %v2441
        %v2618 = vunpack.c.l.b16 %v2442
        %v2619 = vunpack.c.h.b16 %v2442
        %v2620 = vunpack.c.l.b16 %v2443
        %v2621 = vunpack.c.h.b16 %v2443
        %v2622 = vunpack.c.l.b16 %v2444
        %v2623 = vunpack.c.h.b16 %v2444
        %v2624 = vunpack.c.l.b16 %v2445
        %v2625 = vunpack.c.h.b16 %v2445
        %v2626 = vunpack.c.l.b16 %v2446
        %v2627 = vunpack.c.h.b16 %v2446
        %v2628 = vunpack.c.l.b16 %v2447
        %v2629 = vunpack.c.h.b16 %v2447
        %v2630 = vunpack.c.l.b16 %v2448
        %v2631 = vunpack.c.h.b16 %v2448
        %v2632 = vunpack.c.l.b16 %v2449
        %v2633 = vunpack.c.h.b16 %v2449
        %v2634 = vunpack.c.l.b16 %v2450
        %v2635 = vunpack.c.h.b16 %v2450
        %v2636 = vunpack.c.l.b16 %v2451
        %v2637 = vunpack.c.h.b16 %v2451
        %v2638 = vunpack.c.l.b16 %v2452
        %v2639 = vunpack.c.h.b16 %v2452
        %v2640 = vunpack.c.l.b16 %v2453
        %v2641 = vunpack.c.h.b16 %v2453
        %v2642 = vunpack.c.l.b16 %v2454
        %v2643 = vunpack.c.h.b16 %v2454
        %v2644 = vunpack.c.l.b16 %v2455
        %v2645 = vunpack.c.h.b16 %v2455
        %v2646 = vunpack.c.l.b16 %v2456
        %v2647 = vunpack.c.h.b16 %v2456
        %v2648 = vunpack.c.l.b16 %v2457
        %v2649 = vunpack.c.h.b16 %v2457
        %v2650 = vpack.c.b16 %v2530, %v2522
        %v2651 = vpack.c.b16 %v2531, %v2523
        %v2652 = vpack.c.b16 %v2532, %v2524
        %v2653 = vpack.c.b16 %v2533, %v2525
        %v2654 = vpack.c.b16 %v2534, %v2526
        %v2655 = vpack.c.b16 %v2535, %v2527
        %v2656 = vpack.c.b16 %v2536, %v2528
        %v2657 = vpack.c.b16 %v2537, %v2529
        %v2658 = vpack.c.b16 %v2546, %v2538
        %v2659 = vpack.c.b16 %v2547, %v2539
        %v2660 = vpack.c.b16 %v2548, %v2540
        %v2661 = vpack.c.b16 %v2549, %v2541
        %v2662 = vpack.c.b16 %v2550, %v2542
        %v2663 = vpack.c.b16 %v2551, %v2543
        %v2664 = vpack.c.b16 %v2552, %v2544
        %v2665 = vpack.c.b16 %v2553, %v2545
        %v2666 = vpack.c.b16 %v2562, %v2554
        %v2667 = vpack.c.b16 %v2563, %v2555
        %v2668 = vpack.c.b16 %v2564, %v2556
        %v2669 = vpack.c.b16 %v2565, %v2557
        %v2670 = vpack.c.b16 %v2566, %v2558
        %v2671 = vpack.c.b16 %v2567, %v2559
        %v2672 = vpack.c.b16 %v2568, %v2560
        %v2673 = vpack.c.b16 %v2569, %v2561
        %v2674 = vpack.c.b16 %v2578, %v2570
        %v2675 = vpack.c.b16 %v2579, %v2571
        %v2676 = vpack.c.b16 %v2580, %v2572
        %v2677 = vpack.c.b16 %v2581, %v2573
        %v2678 = vpack.c.b16 %v2582, %v2574
        %v2679 = vpack.c.b16 %v2583, %v2575
        %v2680 = vpack.c.b16 %v2584, %v2576
        %v2681 = vpack.c.b16 %v2585, %v2577
        %v2682 = vpack.c.b16 %v2594, %v2586
        %v2683 = vpack.c.b16 %v2595, %v2587
        %v2684 = vpack.c.b16 %v2596, %v2588
        %v2685 = vpack.c.b16 %v2597, %v2589
        %v2686 = vpack.c.b16 %v2598, %v2590
        %v2687 = vpack.c.b16 %v2599, %v2591
        %v2688 = vpack.c.b16 %v2600, %v2592
        %v2689 = vpack.c.b16 %v2601, %v2593
        %v2690 = vpack.c.b16 %v2610, %v2602
        %v2691 = vpack.c.b16 %v2611, %v2603
        %v2692 = vpack.c.b16 %v2612, %v2604
        %v2693 = vpack.c.b16 %v2613, %v2605
        %v2694 = vpack.c.b16 %v2614, %v2606
        %v2695 = vpack.c.b16 %v2615, %v2607
        %v2696 = vpack.c.b16 %v2616, %v2608
        %v2697 = vpack.c.b16 %v2617, %v2609
        %v2698 = vpack.c.b16 %v2626, %v2618
        %v2699 = vpack.c.b16 %v2627, %v2619
        %v2700 = vpack.c.b16 %v2628, %v2620
        %v2701 = vpack.c.b16 %v2629, %v2621
        %v2702 = vpack.c.b16 %v2630, %v2622
        %v2703 = vpack.c.b16 %v2631, %v2623
        %v2704 = vpack.c.b16 %v2632, %v2624
        %v2705 = vpack.c.b16 %v2633, %v2625
        %v2706 = vpack.c.b16 %v2642, %v2634
        %v2707 = vpack.c.b16 %v2643, %v2635
        %v2708 = vpack.c.b16 %v2644, %v2636
        %v2709 = vpack.c.b16 %v2645, %v2637
        %v2710 = vpack.c.b16 %v2646, %v2638
        %v2711 = vpack.c.b16 %v2647, %v2639
        %v2712 = vpack.c.b16 %v2648, %v2640
        %v2713 = vpack.c.b16 %v2649, %v2641
        %2778 = vmatprep.subr.bf16.mxu0 %v2651
        %2779 = vmatpush1.bf16.msra.mxu0 %v2650
        %2780 = vmatprep.subr.bf16.mxu0 %v2659
        %2781 = vmatpush1.bf16.msra.mxu0 %v2658
        %2782 = vmatprep.subr.bf16.mxu0 %v2667
        %2783 = vmatpush1.bf16.msra.mxu0 %v2666
        %2784 = vmatprep.subr.bf16.mxu0 %v2675
        %2785 = vmatpush1.bf16.msra.mxu0 %v2674
        %2786 = vmatprep.subr.bf16.mxu0 %v2683
        %2787 = vmatpush1.bf16.msra.mxu0 %v2682
        %2788 = vmatprep.subr.bf16.mxu0 %v2691
        %2789 = vmatpush1.bf16.msra.mxu0 %v2690
        %2790 = vmatprep.subr.bf16.mxu0 %v2699
        %2791 = vmatpush1.bf16.msra.mxu0 %v2698
        %2792 = vmatprep.subr.bf16.mxu0 %v2707
        %2793 = vmatpush1.bf16.msra.mxu0 %v2706
        %2794 = vmatprep.subr.bf16.mxu0 0
        %2795 = vmatpush1.bf16.msra.mxu0 0
        %2796 = vmatprep.subr.bf16.mxu0 0
        %2797 = vmatpush1.bf16.msra.mxu0 0
        %2798 = vmatprep.subr.bf16.mxu0 0
        %2799 = vmatpush1.bf16.msra.mxu0 0
        %2800 = vmatprep.subr.bf16.mxu0 0
        %2801 = vmatpush1.bf16.msra.mxu0 0
        %2802 = vmatprep.subr.bf16.mxu0 0
        %2803 = vmatpush1.bf16.msra.mxu0 0
        %2804 = vmatprep.subr.bf16.mxu0 0
        %2805 = vmatpush1.bf16.msra.mxu0 0
        %2806 = vmatprep.subr.bf16.mxu0 0
        %2807 = vmatpush1.bf16.msra.mxu0 0
        %2808 = vmatprep.subr.bf16.mxu0 0
        %2809 = vmatpush1.bf16.msra.mxu0 0
        %2810 = vmatprep.mubr.bf16.mxu0 0
        %2811 = vmatmul.mubr.bf16.gmra.mrb[0].mxu0 %v2362
        %v2812 = vpop.f32.mrb[0].mxu0
        %v2813 = vadd.f32 0.0, %v2812
        %v2814 = vpop.f32.mrb[0].mxu0
        %v2815 = vadd.f32 0.0, %v2814
        %v2816 = vpop.f32.mrb[0].mxu0
        %v2817 = vadd.f32 0.0, %v2816
        %v2818 = vpop.f32.mrb[0].mxu0
        %v2819 = vadd.f32 0.0, %v2818
        %2820 = vmatprep.mubr.bf16.mxu0 0
        %2821 = vmatmul.mubr.bf16.gmra.mrb[0].mxu0 %v2363
        %v2822 = vpop.f32.mrb[0].mxu0
        %v2823 = vadd.f32 0.0, %v2822
        %v2824 = vpop.f32.mrb[0].mxu0
        %v2825 = vadd.f32 0.0, %v2824
        %v2826 = vpop.f32.mrb[0].mxu0
        %v2827 = vadd.f32 0.0, %v2826
        %v2828 = vpop.f32.mrb[0].mxu0
        %v2829 = vadd.f32 0.0, %v2828
        %2830 = vmatprep.mubr.bf16.mxu0 0
        %2831 = vmatmul.mubr.bf16.gmra.mrb[0].mxu0 %v2364
        %v2832 = vpop.f32.mrb[0].mxu0
        %v2833 = vadd.f32 0.0, %v2832
        %v2834 = vpop.f32.mrb[0].mxu0
        %v2835 = vadd.f32 0.0, %v2834
        %v2836 = vpop.f32.mrb[0].mxu0
        %v2837 = vadd.f32 0.0, %v2836
        %v2838 = vpop.f32.mrb[0].mxu0
        %v2839 = vadd.f32 0.0, %v2838
        %2840 = vmatprep.mubr.bf16.mxu0 0
        %2841 = vmatmul.mubr.bf16.gmra.mrb[0].mxu0 %v2365
        %v2842 = vpop.f32.mrb[0].mxu0
        %v2843 = vadd.f32 0.0, %v2842
        %v2844 = vpop.f32.mrb[0].mxu0
        %v2845 = vadd.f32 0.0, %v2844
        %v2846 = vpop.f32.mrb[0].mxu0
        %v2847 = vadd.f32 0.0, %v2846
        %v2848 = vpop.f32.mrb[0].mxu0
        %v2849 = vadd.f32 0.0, %v2848
        %2850 = vmatprep.mubr.bf16.mxu0 0
        %2851 = vmatmul.mubr.bf16.gmra.mrb[0].mxu0 %v2366
        %v2852 = vpop.f32.mrb[0].mxu0
        %v2853 = vadd.f32 0.0, %v2852
        %v2854 = vpop.f32.mrb[0].mxu0
        %v2855 = vadd.f32 0.0, %v2854
        %v2856 = vpop.f32.mrb[0].mxu0
        %v2857 = vadd.f32 0.0, %v2856
        %v2858 = vpop.f32.mrb[0].mxu0
        %v2859 = vadd.f32 0.0, %v2858
        %2860 = vmatprep.mubr.bf16.mxu0 0
        %2861 = vmatmul.mubr.bf16.gmra.mrb[0].mxu0 %v2367
        %v2862 = vpop.f32.mrb[0].mxu0
        %v2863 = vadd.f32 0.0, %v2862
        %v2864 = vpop.f32.mrb[0].mxu0
        %v2865 = vadd.f32 0.0, %v2864
        %v2866 = vpop.f32.mrb[0].mxu0
        %v2867 = vadd.f32 0.0, %v2866
        %v2868 = vpop.f32.mrb[0].mxu0
        %v2869 = vadd.f32 0.0, %v2868
        %2870 = vmatprep.mubr.bf16.mxu0 0
        %2871 = vmatmul.mubr.bf16.gmra.mrb[0].mxu0 %v2368
        %v2872 = vpop.f32.mrb[0].mxu0
        %v2873 = vadd.f32 0.0, %v2872
        %v2874 = vpop.f32.mrb[0].mxu0
        %v2875 = vadd.f32 0.0, %v2874
        %v2876 = vpop.f32.mrb[0].mxu0
        %v2877 = vadd.f32 0.0, %v2876
        %v2878 = vpop.f32.mrb[0].mxu0
        %v2879 = vadd.f32 0.0, %v2878
        %2880 = vmatprep.mubr.bf16.mxu0 0
        %2881 = vmatmul.mubr.bf16.gmra.mrb[0].mxu0 %v2369
        %v2882 = vpop.f32.mrb[0].mxu0
        %v2883 = vadd.f32 0.0, %v2882
        %v2884 = vpop.f32.mrb[0].mxu0
        %v2885 = vadd.f32 0.0, %v2884
        %v2886 = vpop.f32.mrb[0].mxu0
        %v2887 = vadd.f32 0.0, %v2886
        %v2888 = vpop.f32.mrb[0].mxu0
        %v2889 = vadd.f32 0.0, %v2888
        %2890 = vmatprep.mubr.bf16.mxu0 0
        %2891 = vmatmul.mubr.bf16.gmra.mrb[0].mxu0 %v2370
        %v2892 = vpop.f32.mrb[0].mxu0
        %v2893 = vadd.f32 0.0, %v2892
        %v2894 = vpop.f32.mrb[0].mxu0
        %v2895 = vadd.f32 0.0, %v2894
        %v2896 = vpop.f32.mrb[0].mxu0
        %v2897 = vadd.f32 0.0, %v2896
        %v2898 = vpop.f32.mrb[0].mxu0
        %v2899 = vadd.f32 0.0, %v2898
        %2900 = vmatprep.mubr.bf16.mxu0 0
        %2901 = vmatmul.mubr.bf16.gmra.mrb[0].mxu0 %v2371
        %v2902 = vpop.f32.mrb[0].mxu0
        %v2903 = vadd.f32 0.0, %v2902
        %v2904 = vpop.f32.mrb[0].mxu0
        %v2905 = vadd.f32 0.0, %v2904
        %v2906 = vpop.f32.mrb[0].mxu0
        %v2907 = vadd.f32 0.0, %v2906
        %v2908 = vpop.f32.mrb[0].mxu0
        %v2909 = vadd.f32 0.0, %v2908
        %2910 = vmatprep.mubr.bf16.mxu0 0
        %2911 = vmatmul.mubr.bf16.gmra.mrb[0].mxu0 %v2372
        %v2912 = vpop.f32.mrb[0].mxu0
        %v2913 = vadd.f32 0.0, %v2912
        %v2914 = vpop.f32.mrb[0].mxu0
        %v2915 = vadd.f32 0.0, %v2914
        %v2916 = vpop.f32.mrb[0].mxu0
        %v2917 = vadd.f32 0.0, %v2916
        %v2918 = vpop.f32.mrb[0].mxu0
        %v2919 = vadd.f32 0.0, %v2918
        %2920 = vmatprep.mubr.bf16.mxu0 0
        %2921 = vmatmul.mubr.bf16.gmra.mrb[0].mxu0 %v2373
        %v2922 = vpop.f32.mrb[0].mxu0
        %v2923 = vadd.f32 0.0, %v2922
        %v2924 = vpop.f32.mrb[0].mxu0
        %v2925 = vadd.f32 0.0, %v2924
        %v2926 = vpop.f32.mrb[0].mxu0
        %v2927 = vadd.f32 0.0, %v2926
        %v2928 = vpop.f32.mrb[0].mxu0
        %v2929 = vadd.f32 0.0, %v2928
        %2930 = vmatprep.mubr.bf16.mxu0 0
        %2931 = vmatmul.mubr.bf16.gmra.mrb[0].mxu0 %v2374
        %v2932 = vpop.f32.mrb[0].mxu0
        %v2933 = vadd.f32 0.0, %v2932
        %v2934 = vpop.f32.mrb[0].mxu0
        %v2935 = vadd.f32 0.0, %v2934
        %v2936 = vpop.f32.mrb[0].mxu0
        %v2937 = vadd.f32 0.0, %v2936
        %v2938 = vpop.f32.mrb[0].mxu0
        %v2939 = vadd.f32 0.0, %v2938
        %2940 = vmatprep.mubr.bf16.mxu0 0
        %2941 = vmatmul.mubr.bf16.gmra.mrb[0].mxu0 %v2375
        %v2942 = vpop.f32.mrb[0].mxu0
        %v2943 = vadd.f32 0.0, %v2942
        %v2944 = vpop.f32.mrb[0].mxu0
        %v2945 = vadd.f32 0.0, %v2944
        %v2946 = vpop.f32.mrb[0].mxu0
        %v2947 = vadd.f32 0.0, %v2946
        %v2948 = vpop.f32.mrb[0].mxu0
        %v2949 = vadd.f32 0.0, %v2948
        %2950 = vmatprep.mubr.bf16.mxu0 0
        %2951 = vmatmul.mubr.bf16.gmra.mrb[0].mxu0 %v2376
        %v2952 = vpop.f32.mrb[0].mxu0
        %v2953 = vadd.f32 0.0, %v2952
        %v2954 = vpop.f32.mrb[0].mxu0
        %v2955 = vadd.f32 0.0, %v2954
        %v2956 = vpop.f32.mrb[0].mxu0
        %v2957 = vadd.f32 0.0, %v2956
        %v2958 = vpop.f32.mrb[0].mxu0
        %v2959 = vadd.f32 0.0, %v2958
        %2960 = vmatprep.mubr.bf16.mxu0 0
        %2961 = vmatmul.mubr.bf16.gmra.mrb[0].mxu0 %v2377
        %v2962 = vpop.f32.mrb[0].mxu0
        %v2963 = vadd.f32 0.0, %v2962
        %v2964 = vpop.f32.mrb[0].mxu0
        %v2965 = vadd.f32 0.0, %v2964
        %v2966 = vpop.f32.mrb[0].mxu0
        %v2967 = vadd.f32 0.0, %v2966
        %v2968 = vpop.f32.mrb[0].mxu0
        %v2969 = vadd.f32 0.0, %v2968
        %2970 = vmatprep.mubr.bf16.mxu0 0
        %2971 = vmatmul.mubr.bf16.gmra.mrb[0].mxu0 %v2378
        %v2972 = vpop.f32.mrb[0].mxu0
        %v2973 = vadd.f32 0.0, %v2972
        %v2974 = vpop.f32.mrb[0].mxu0
        %v2975 = vadd.f32 0.0, %v2974
        %v2976 = vpop.f32.mrb[0].mxu0
        %v2977 = vadd.f32 0.0, %v2976
        %v2978 = vpop.f32.mrb[0].mxu0
        %v2979 = vadd.f32 0.0, %v2978
        %2980 = vmatprep.mubr.bf16.mxu0 0
        %2981 = vmatmul.mubr.bf16.gmra.mrb[0].mxu0 %v2379
        %v2982 = vpop.f32.mrb[0].mxu0
        %v2983 = vadd.f32 0.0, %v2982
        %v2984 = vpop.f32.mrb[0].mxu0
        %v2985 = vadd.f32 0.0, %v2984
        %v2986 = vpop.f32.mrb[0].mxu0
        %v2987 = vadd.f32 0.0, %v2986
        %v2988 = vpop.f32.mrb[0].mxu0
        %v2989 = vadd.f32 0.0, %v2988
        %2990 = vmatprep.mubr.bf16.mxu0 0
        %2991 = vmatmul.mubr.bf16.gmra.mrb[0].mxu0 %v2380
        %v2992 = vpop.f32.mrb[0].mxu0
        %v2993 = vadd.f32 0.0, %v2992
        %v2994 = vpop.f32.mrb[0].mxu0
        %v2995 = vadd.f32 0.0, %v2994
        %v2996 = vpop.f32.mrb[0].mxu0
        %v2997 = vadd.f32 0.0, %v2996
        %v2998 = vpop.f32.mrb[0].mxu0
        %v2999 = vadd.f32 0.0, %v2998
        %3000 = vmatprep.mubr.bf16.mxu0 0
        %3001 = vmatmul.mubr.bf16.gmra.mrb[0].mxu0 %v2381
        %v3002 = vpop.f32.mrb[0].mxu0
        %v3003 = vadd.f32 0.0, %v3002
        %v3004 = vpop.f32.mrb[0].mxu0
        %v3005 = vadd.f32 0.0, %v3004
        %v3006 = vpop.f32.mrb[0].mxu0
        %v3007 = vadd.f32 0.0, %v3006
        %v3008 = vpop.f32.mrb[0].mxu0
        %v3009 = vadd.f32 0.0, %v3008
        %3010 = vmatprep.mubr.bf16.mxu0 0
        %3011 = vmatmul.mubr.bf16.gmra.mrb[0].mxu0 %v2382
        %v3012 = vpop.f32.mrb[0].mxu0
        %v3013 = vadd.f32 0.0, %v3012
        %v3014 = vpop.f32.mrb[0].mxu0
        %v3015 = vadd.f32 0.0, %v3014
        %v3016 = vpop.f32.mrb[0].mxu0
        %v3017 = vadd.f32 0.0, %v3016
        %v3018 = vpop.f32.mrb[0].mxu0
        %v3019 = vadd.f32 0.0, %v3018
        %3020 = vmatprep.mubr.bf16.mxu0 0
        %3021 = vmatmul.mubr.bf16.gmra.mrb[0].mxu0 %v2383
        %v3022 = vpop.f32.mrb[0].mxu0
        %v3023 = vadd.f32 0.0, %v3022
        %v3024 = vpop.f32.mrb[0].mxu0
        %v3025 = vadd.f32 0.0, %v3024
        %v3026 = vpop.f32.mrb[0].mxu0
        %v3027 = vadd.f32 0.0, %v3026
        %v3028 = vpop.f32.mrb[0].mxu0
        %v3029 = vadd.f32 0.0, %v3028
        %3030 = vmatprep.mubr.bf16.mxu0 0
        %3031 = vmatmul.mubr.bf16.gmra.mrb[0].mxu0 %v2384
        %v3032 = vpop.f32.mrb[0].mxu0
        %v3033 = vadd.f32 0.0, %v3032
        %v3034 = vpop.f32.mrb[0].mxu0
        %v3035 = vadd.f32 0.0, %v3034
        %v3036 = vpop.f32.mrb[0].mxu0
        %v3037 = vadd.f32 0.0, %v3036
        %v3038 = vpop.f32.mrb[0].mxu0
        %v3039 = vadd.f32 0.0, %v3038
        %3040 = vmatprep.mubr.bf16.mxu0 0
        %3041 = vmatmul.mubr.bf16.gmra.mrb[0].mxu0 %v2385
        %v3042 = vpop.f32.mrb[0].mxu0
        %v3043 = vadd.f32 0.0, %v3042
        %v3044 = vpop.f32.mrb[0].mxu0
        %v3045 = vadd.f32 0.0, %v3044
        %v3046 = vpop.f32.mrb[0].mxu0
        %v3047 = vadd.f32 0.0, %v3046
        %v3048 = vpop.f32.mrb[0].mxu0
        %v3049 = vadd.f32 0.0, %v3048
        %3050 = vmatprep.mubr.bf16.mxu0 0
        %3051 = vmatmul.mubr.bf16.gmra.mrb[0].mxu0 %v2386
        %v3052 = vpop.f32.mrb[0].mxu0
        %v3053 = vadd.f32 0.0, %v3052
        %v3054 = vpop.f32.mrb[0].mxu0
        %v3055 = vadd.f32 0.0, %v3054
        %v3056 = vpop.f32.mrb[0].mxu0
        %v3057 = vadd.f32 0.0, %v3056
        %v3058 = vpop.f32.mrb[0].mxu0
        %v3059 = vadd.f32 0.0, %v3058
        %3060 = vmatprep.mubr.bf16.mxu0 0
        %3061 = vmatmul.mubr.bf16.gmra.mrb[0].mxu0 %v2387
        %v3062 = vpop.f32.mrb[0].mxu0
        %v3063 = vadd.f32 0.0, %v3062
        %v3064 = vpop.f32.mrb[0].mxu0
        %v3065 = vadd.f32 0.0, %v3064
        %v3066 = vpop.f32.mrb[0].mxu0
        %v3067 = vadd.f32 0.0, %v3066
        %v3068 = vpop.f32.mrb[0].mxu0
        %v3069 = vadd.f32 0.0, %v3068
        %3070 = vmatprep.mubr.bf16.mxu0 0
        %3071 = vmatmul.mubr.bf16.gmra.mrb[0].mxu0 %v2388
        %v3072 = vpop.f32.mrb[0].mxu0
        %v3073 = vadd.f32 0.0, %v3072
        %v3074 = vpop.f32.mrb[0].mxu0
        %v3075 = vadd.f32 0.0, %v3074
        %v3076 = vpop.f32.mrb[0].mxu0
        %v3077 = vadd.f32 0.0, %v3076
        %v3078 = vpop.f32.mrb[0].mxu0
        %v3079 = vadd.f32 0.0, %v3078
        %3080 = vmatprep.mubr.bf16.mxu0 0
        %3081 = vmatmul.mubr.bf16.gmra.mrb[0].mxu0 %v2389
        %v3082 = vpop.f32.mrb[0].mxu0
        %v3083 = vadd.f32 0.0, %v3082
        %v3084 = vpop.f32.mrb[0].mxu0
        %v3085 = vadd.f32 0.0, %v3084
        %v3086 = vpop.f32.mrb[0].mxu0
        %v3087 = vadd.f32 0.0, %v3086
        %v3088 = vpop.f32.mrb[0].mxu0
        %v3089 = vadd.f32 0.0, %v3088
        %3090 = vmatprep.mubr.bf16.mxu0 0
        %3091 = vmatmul.mubr.bf16.gmra.mrb[0].mxu0 %v2390
        %v3092 = vpop.f32.mrb[0].mxu0
        %v3093 = vadd.f32 0.0, %v3092
        %v3094 = vpop.f32.mrb[0].mxu0
        %v3095 = vadd.f32 0.0, %v3094
        %v3096 = vpop.f32.mrb[0].mxu0
        %v3097 = vadd.f32 0.0, %v3096
        %v3098 = vpop.f32.mrb[0].mxu0
        %v3099 = vadd.f32 0.0, %v3098
        %3100 = vmatprep.mubr.bf16.mxu0 0
        %3101 = vmatmul.mubr.bf16.gmra.mrb[0].mxu0 %v2391
        %v3102 = vpop.f32.mrb[0].mxu0
        %v3103 = vadd.f32 0.0, %v3102
        %v3104 = vpop.f32.mrb[0].mxu0
        %v3105 = vadd.f32 0.0, %v3104
        %v3106 = vpop.f32.mrb[0].mxu0
        %v3107 = vadd.f32 0.0, %v3106
        %v3108 = vpop.f32.mrb[0].mxu0
        %v3109 = vadd.f32 0.0, %v3108
        %3110 = vmatprep.mubr.bf16.mxu0 0
        %3111 = vmatmul.mubr.bf16.gmra.mrb[0].mxu0 %v2392
        %v3112 = vpop.f32.mrb[0].mxu0
        %v3113 = vadd.f32 0.0, %v3112
        %v3114 = vpop.f32.mrb[0].mxu0
        %v3115 = vadd.f32 0.0, %v3114
        %v3116 = vpop.f32.mrb[0].mxu0
        %v3117 = vadd.f32 0.0, %v3116
        %v3118 = vpop.f32.mrb[0].mxu0
        %v3119 = vadd.f32 0.0, %v3118
        %3120 = vmatprep.mubr.bf16.mxu0 0
        %3121 = vmatmul.mubr.bf16.gmra.mrb[0].mxu0 %v2393
        %v3122 = vpop.f32.mrb[0].mxu0
        %v3123 = vadd.f32 0.0, %v3122
        %v3124 = vpop.f32.mrb[0].mxu0
        %v3125 = vadd.f32 0.0, %v3124
        %v3126 = vpop.f32.mrb[0].mxu0
        %v3127 = vadd.f32 0.0, %v3126
        %v3128 = vpop.f32.mrb[0].mxu0
        %v3129 = vadd.f32 0.0, %v3128
        %3130 = vdwg.mxu0
        %3131 = vmatprep.subr.bf16.mxu0 %v2653
        %3132 = vmatpush1.bf16.msra.mxu0 %v2652
        %3133 = vmatprep.subr.bf16.mxu0 %v2661
        %3134 = vmatpush1.bf16.msra.mxu0 %v2660
        %3135 = vmatprep.subr.bf16.mxu0 %v2669
        %3136 = vmatpush1.bf16.msra.mxu0 %v2668
        %3137 = vmatprep.subr.bf16.mxu0 %v2677
        %3138 = vmatpush1.bf16.msra.mxu0 %v2676
        %3139 = vmatprep.subr.bf16.mxu0 %v2685
        %3140 = vmatpush1.bf16.msra.mxu0 %v2684
        %3141 = vmatprep.subr.bf16.mxu0 %v2693
        %3142 = vmatpush1.bf16.msra.mxu0 %v2692
        %3143 = vmatprep.subr.bf16.mxu0 %v2701
        %3144 = vmatpush1.bf16.msra.mxu0 %v2700
        %3145 = vmatprep.subr.bf16.mxu0 %v2709
        %3146 = vmatpush1.bf16.msra.mxu0 %v2708
        %3147 = vmatprep.subr.bf16.mxu0 0
        %3148 = vmatpush1.bf16.msra.mxu0 0
        %3149 = vmatprep.subr.bf16.mxu0 0
        %3150 = vmatpush1.bf16.msra.mxu0 0
        %3151 = vmatprep.subr.bf16.mxu0 0
        %3152 = vmatpush1.bf16.msra.mxu0 0
        %3153 = vmatprep.subr.bf16.mxu0 0
        %3154 = vmatpush1.bf16.msra.mxu0 0
        %3155 = vmatprep.subr.bf16.mxu0 0
        %3156 = vmatpush1.bf16.msra.mxu0 0
        %3157 = vmatprep.subr.bf16.mxu0 0
        %3158 = vmatpush1.bf16.msra.mxu0 0
        %3159 = vmatprep.subr.bf16.mxu0 0
        %3160 = vmatpush1.bf16.msra.mxu0 0
        %3161 = vmatprep.subr.bf16.mxu0 0
        %3162 = vmatpush1.bf16.msra.mxu0 0
        %3163 = vmatprep.mubr.bf16.mxu0 0
        %3164 = vmatmul.mubr.bf16.gmra.mrb[0].mxu0 %v2362
        %v3165 = vpop.f32.mrb[0].mxu0
        %v3166 = vadd.f32 0.0, %v3165
        %v3167 = vpop.f32.mrb[0].mxu0
        %v3168 = vadd.f32 0.0, %v3167
        %v3169 = vpop.f32.mrb[0].mxu0
        %v3170 = vadd.f32 0.0, %v3169
        %v3171 = vpop.f32.mrb[0].mxu0
        %v3172 = vadd.f32 0.0, %v3171
        %3173 = vmatprep.mubr.bf16.mxu0 0
        %3174 = vmatmul.mubr.bf16.gmra.mrb[0].mxu0 %v2363
        %v3175 = vpop.f32.mrb[0].mxu0
        %v3176 = vadd.f32 0.0, %v3175
        %v3177 = vpop.f32.mrb[0].mxu0
        %v3178 = vadd.f32 0.0, %v3177
        %v3179 = vpop.f32.mrb[0].mxu0
        %v3180 = vadd.f32 0.0, %v3179
        %v3181 = vpop.f32.mrb[0].mxu0
        %v3182 = vadd.f32 0.0, %v3181
        %3183 = vmatprep.mubr.bf16.mxu0 0
        %3184 = vmatmul.mubr.bf16.gmra.mrb[0].mxu0 %v2364
        %v3185 = vpop.f32.mrb[0].mxu0
        %v3186 = vadd.f32 0.0, %v3185
        %v3187 = vpop.f32.mrb[0].mxu0
        %v3188 = vadd.f32 0.0, %v3187
        %v3189 = vpop.f32.mrb[0].mxu0
        %v3190 = vadd.f32 0.0, %v3189
        %v3191 = vpop.f32.mrb[0].mxu0
        %v3192 = vadd.f32 0.0, %v3191
        %3193 = vmatprep.mubr.bf16.mxu0 0
        %3194 = vmatmul.mubr.bf16.gmra.mrb[0].mxu0 %v2365
        %v3195 = vpop.f32.mrb[0].mxu0
        %v3196 = vadd.f32 0.0, %v3195
        %v3197 = vpop.f32.mrb[0].mxu0
        %v3198 = vadd.f32 0.0, %v3197
        %v3199 = vpop.f32.mrb[0].mxu0
        %v3200 = vadd.f32 0.0, %v3199
        %v3201 = vpop.f32.mrb[0].mxu0
        %v3202 = vadd.f32 0.0, %v3201
        %3203 = vmatprep.mubr.bf16.mxu0 0
        %3204 = vmatmul.mubr.bf16.gmra.mrb[0].mxu0 %v2366
        %v3205 = vpop.f32.mrb[0].mxu0
        %v3206 = vadd.f32 0.0, %v3205
        %v3207 = vpop.f32.mrb[0].mxu0
        %v3208 = vadd.f32 0.0, %v3207
        %v3209 = vpop.f32.mrb[0].mxu0
        %v3210 = vadd.f32 0.0, %v3209
        %v3211 = vpop.f32.mrb[0].mxu0
        %v3212 = vadd.f32 0.0, %v3211
        %3213 = vmatprep.mubr.bf16.mxu0 0
        %3214 = vmatmul.mubr.bf16.gmra.mrb[0].mxu0 %v2367
        %v3215 = vpop.f32.mrb[0].mxu0
        %v3216 = vadd.f32 0.0, %v3215
        %v3217 = vpop.f32.mrb[0].mxu0
        %v3218 = vadd.f32 0.0, %v3217
        %v3219 = vpop.f32.mrb[0].mxu0
        %v3220 = vadd.f32 0.0, %v3219
        %v3221 = vpop.f32.mrb[0].mxu0
        %v3222 = vadd.f32 0.0, %v3221
        %3223 = vmatprep.mubr.bf16.mxu0 0
        %3224 = vmatmul.mubr.bf16.gmra.mrb[0].mxu0 %v2368
        %v3225 = vpop.f32.mrb[0].mxu0
        %v3226 = vadd.f32 0.0, %v3225
        %v3227 = vpop.f32.mrb[0].mxu0
        %v3228 = vadd.f32 0.0, %v3227
        %v3229 = vpop.f32.mrb[0].mxu0
        %v3230 = vadd.f32 0.0, %v3229
        %v3231 = vpop.f32.mrb[0].mxu0
        %v3232 = vadd.f32 0.0, %v3231
        %3233 = vmatprep.mubr.bf16.mxu0 0
        %3234 = vmatmul.mubr.bf16.gmra.mrb[0].mxu0 %v2369
        %v3235 = vpop.f32.mrb[0].mxu0
        %v3236 = vadd.f32 0.0, %v3235
        %v3237 = vpop.f32.mrb[0].mxu0
        %v3238 = vadd.f32 0.0, %v3237
        %v3239 = vpop.f32.mrb[0].mxu0
        %v3240 = vadd.f32 0.0, %v3239
        %v3241 = vpop.f32.mrb[0].mxu0
        %v3242 = vadd.f32 0.0, %v3241
        %3243 = vmatprep.mubr.bf16.mxu0 0
        %3244 = vmatmul.mubr.bf16.gmra.mrb[0].mxu0 %v2370
        %v3245 = vpop.f32.mrb[0].mxu0
        %v3246 = vadd.f32 0.0, %v3245
        %v3247 = vpop.f32.mrb[0].mxu0
        %v3248 = vadd.f32 0.0, %v3247
        %v3249 = vpop.f32.mrb[0].mxu0
        %v3250 = vadd.f32 0.0, %v3249
        %v3251 = vpop.f32.mrb[0].mxu0
        %v3252 = vadd.f32 0.0, %v3251
        %3253 = vmatprep.mubr.bf16.mxu0 0
        %3254 = vmatmul.mubr.bf16.gmra.mrb[0].mxu0 %v2371
        %v3255 = vpop.f32.mrb[0].mxu0
        %v3256 = vadd.f32 0.0, %v3255
        %v3257 = vpop.f32.mrb[0].mxu0
        %v3258 = vadd.f32 0.0, %v3257
        %v3259 = vpop.f32.mrb[0].mxu0
        %v3260 = vadd.f32 0.0, %v3259
        %v3261 = vpop.f32.mrb[0].mxu0
        %v3262 = vadd.f32 0.0, %v3261
        %3263 = vmatprep.mubr.bf16.mxu0 0
        %3264 = vmatmul.mubr.bf16.gmra.mrb[0].mxu0 %v2372
        %v3265 = vpop.f32.mrb[0].mxu0
        %v3266 = vadd.f32 0.0, %v3265
        %v3267 = vpop.f32.mrb[0].mxu0
        %v3268 = vadd.f32 0.0, %v3267
        %v3269 = vpop.f32.mrb[0].mxu0
        %v3270 = vadd.f32 0.0, %v3269
        %v3271 = vpop.f32.mrb[0].mxu0
        %v3272 = vadd.f32 0.0, %v3271
        %3273 = vmatprep.mubr.bf16.mxu0 0
        %3274 = vmatmul.mubr.bf16.gmra.mrb[0].mxu0 %v2373
        %v3275 = vpop.f32.mrb[0].mxu0
        %v3276 = vadd.f32 0.0, %v3275
        %v3277 = vpop.f32.mrb[0].mxu0
        %v3278 = vadd.f32 0.0, %v3277
        %v3279 = vpop.f32.mrb[0].mxu0
        %v3280 = vadd.f32 0.0, %v3279
        %v3281 = vpop.f32.mrb[0].mxu0
        %v3282 = vadd.f32 0.0, %v3281
        %3283 = vmatprep.mubr.bf16.mxu0 0
        %3284 = vmatmul.mubr.bf16.gmra.mrb[0].mxu0 %v2374
        %v3285 = vpop.f32.mrb[0].mxu0
        %v3286 = vadd.f32 0.0, %v3285
        %v3287 = vpop.f32.mrb[0].mxu0
        %v3288 = vadd.f32 0.0, %v3287
        %v3289 = vpop.f32.mrb[0].mxu0
        %v3290 = vadd.f32 0.0, %v3289
        %v3291 = vpop.f32.mrb[0].mxu0
        %v3292 = vadd.f32 0.0, %v3291
        %3293 = vmatprep.mubr.bf16.mxu0 0
        %3294 = vmatmul.mubr.bf16.gmra.mrb[0].mxu0 %v2375
        %v3295 = vpop.f32.mrb[0].mxu0
        %v3296 = vadd.f32 0.0, %v3295
        %v3297 = vpop.f32.mrb[0].mxu0
        %v3298 = vadd.f32 0.0, %v3297
        %v3299 = vpop.f32.mrb[0].mxu0
        %v3300 = vadd.f32 0.0, %v3299
        %v3301 = vpop.f32.mrb[0].mxu0
        %v3302 = vadd.f32 0.0, %v3301
        %3303 = vmatprep.mubr.bf16.mxu0 0
        %3304 = vmatmul.mubr.bf16.gmra.mrb[0].mxu0 %v2376
        %v3305 = vpop.f32.mrb[0].mxu0
        %v3306 = vadd.f32 0.0, %v3305
        %v3307 = vpop.f32.mrb[0].mxu0
        %v3308 = vadd.f32 0.0, %v3307
        %v3309 = vpop.f32.mrb[0].mxu0
        %v3310 = vadd.f32 0.0, %v3309
        %v3311 = vpop.f32.mrb[0].mxu0
        %v3312 = vadd.f32 0.0, %v3311
        %3313 = vmatprep.mubr.bf16.mxu0 0
        %3314 = vmatmul.mubr.bf16.gmra.mrb[0].mxu0 %v2377
        %v3315 = vpop.f32.mrb[0].mxu0
        %v3316 = vadd.f32 0.0, %v3315
        %v3317 = vpop.f32.mrb[0].mxu0
        %v3318 = vadd.f32 0.0, %v3317
        %v3319 = vpop.f32.mrb[0].mxu0
        %v3320 = vadd.f32 0.0, %v3319
        %v3321 = vpop.f32.mrb[0].mxu0
        %v3322 = vadd.f32 0.0, %v3321
        %3323 = vmatprep.mubr.bf16.mxu0 0
        %3324 = vmatmul.mubr.bf16.gmra.mrb[0].mxu0 %v2378
        %v3325 = vpop.f32.mrb[0].mxu0
        %v3326 = vadd.f32 0.0, %v3325
        %v3327 = vpop.f32.mrb[0].mxu0
        %v3328 = vadd.f32 0.0, %v3327
        %v3329 = vpop.f32.mrb[0].mxu0
        %v3330 = vadd.f32 0.0, %v3329
        %v3331 = vpop.f32.mrb[0].mxu0
        %v3332 = vadd.f32 0.0, %v3331
        %3333 = vmatprep.mubr.bf16.mxu0 0
        %3334 = vmatmul.mubr.bf16.gmra.mrb[0].mxu0 %v2379
        %v3335 = vpop.f32.mrb[0].mxu0
        %v3336 = vadd.f32 0.0, %v3335
        %v3337 = vpop.f32.mrb[0].mxu0
        %v3338 = vadd.f32 0.0, %v3337
        %v3339 = vpop.f32.mrb[0].mxu0
        %v3340 = vadd.f32 0.0, %v3339
        %v3341 = vpop.f32.mrb[0].mxu0
        %v3342 = vadd.f32 0.0, %v3341
        %3343 = vmatprep.mubr.bf16.mxu0 0
        %3344 = vmatmul.mubr.bf16.gmra.mrb[0].mxu0 %v2380
        %v3345 = vpop.f32.mrb[0].mxu0
        %v3346 = vadd.f32 0.0, %v3345
        %v3347 = vpop.f32.mrb[0].mxu0
        %v3348 = vadd.f32 0.0, %v3347
        %v3349 = vpop.f32.mrb[0].mxu0
        %v3350 = vadd.f32 0.0, %v3349
        %v3351 = vpop.f32.mrb[0].mxu0
        %v3352 = vadd.f32 0.0, %v3351
        %3353 = vmatprep.mubr.bf16.mxu0 0
        %3354 = vmatmul.mubr.bf16.gmra.mrb[0].mxu0 %v2381
        %v3355 = vpop.f32.mrb[0].mxu0
        %v3356 = vadd.f32 0.0, %v3355
        %v3357 = vpop.f32.mrb[0].mxu0
        %v3358 = vadd.f32 0.0, %v3357
        %v3359 = vpop.f32.mrb[0].mxu0
        %v3360 = vadd.f32 0.0, %v3359
        %v3361 = vpop.f32.mrb[0].mxu0
        %v3362 = vadd.f32 0.0, %v3361
        %3363 = vmatprep.mubr.bf16.mxu0 0
        %3364 = vmatmul.mubr.bf16.gmra.mrb[0].mxu0 %v2382
        %v3365 = vpop.f32.mrb[0].mxu0
        %v3366 = vadd.f32 0.0, %v3365
        %v3367 = vpop.f32.mrb[0].mxu0
        %v3368 = vadd.f32 0.0, %v3367
        %v3369 = vpop.f32.mrb[0].mxu0
        %v3370 = vadd.f32 0.0, %v3369
        %v3371 = vpop.f32.mrb[0].mxu0
        %v3372 = vadd.f32 0.0, %v3371
        %3373 = vmatprep.mubr.bf16.mxu0 0
        %3374 = vmatmul.mubr.bf16.gmra.mrb[0].mxu0 %v2383
        %v3375 = vpop.f32.mrb[0].mxu0
        %v3376 = vadd.f32 0.0, %v3375
        %v3377 = vpop.f32.mrb[0].mxu0
        %v3378 = vadd.f32 0.0, %v3377
        %v3379 = vpop.f32.mrb[0].mxu0
        %v3380 = vadd.f32 0.0, %v3379
        %v3381 = vpop.f32.mrb[0].mxu0
        %v3382 = vadd.f32 0.0, %v3381
        %3383 = vmatprep.mubr.bf16.mxu0 0
        %3384 = vmatmul.mubr.bf16.gmra.mrb[0].mxu0 %v2384
        %v3385 = vpop.f32.mrb[0].mxu0
        %v3386 = vadd.f32 0.0, %v3385
        %v3387 = vpop.f32.mrb[0].mxu0
        %v3388 = vadd.f32 0.0, %v3387
        %v3389 = vpop.f32.mrb[0].mxu0
        %v3390 = vadd.f32 0.0, %v3389
        %v3391 = vpop.f32.mrb[0].mxu0
        %v3392 = vadd.f32 0.0, %v3391
        %3393 = vmatprep.mubr.bf16.mxu0 0
        %3394 = vmatmul.mubr.bf16.gmra.mrb[0].mxu0 %v2385
        %v3395 = vpop.f32.mrb[0].mxu0
        %v3396 = vadd.f32 0.0, %v3395
        %v3397 = vpop.f32.mrb[0].mxu0
        %v3398 = vadd.f32 0.0, %v3397
        %v3399 = vpop.f32.mrb[0].mxu0
        %v3400 = vadd.f32 0.0, %v3399
        %v3401 = vpop.f32.mrb[0].mxu0
        %v3402 = vadd.f32 0.0, %v3401
        %3403 = vmatprep.mubr.bf16.mxu0 0
        %3404 = vmatmul.mubr.bf16.gmra.mrb[0].mxu0 %v2386
        %v3405 = vpop.f32.mrb[0].mxu0
        %v3406 = vadd.f32 0.0, %v3405
        %v3407 = vpop.f32.mrb[0].mxu0
        %v3408 = vadd.f32 0.0, %v3407
        %v3409 = vpop.f32.mrb[0].mxu0
        %v3410 = vadd.f32 0.0, %v3409
        %v3411 = vpop.f32.mrb[0].mxu0
        %v3412 = vadd.f32 0.0, %v3411
        %3413 = vmatprep.mubr.bf16.mxu0 0
        %3414 = vmatmul.mubr.bf16.gmra.mrb[0].mxu0 %v2387
        %v3415 = vpop.f32.mrb[0].mxu0
        %v3416 = vadd.f32 0.0, %v3415
        %v3417 = vpop.f32.mrb[0].mxu0
        %v3418 = vadd.f32 0.0, %v3417
        %v3419 = vpop.f32.mrb[0].mxu0
        %v3420 = vadd.f32 0.0, %v3419
        %v3421 = vpop.f32.mrb[0].mxu0
        %v3422 = vadd.f32 0.0, %v3421
        %3423 = vmatprep.mubr.bf16.mxu0 0
        %3424 = vmatmul.mubr.bf16.gmra.mrb[0].mxu0 %v2388
        %v3425 = vpop.f32.mrb[0].mxu0
        %v3426 = vadd.f32 0.0, %v3425
        %v3427 = vpop.f32.mrb[0].mxu0
        %v3428 = vadd.f32 0.0, %v3427
        %v3429 = vpop.f32.mrb[0].mxu0
        %v3430 = vadd.f32 0.0, %v3429
        %v3431 = vpop.f32.mrb[0].mxu0
        %v3432 = vadd.f32 0.0, %v3431
        %3433 = vmatprep.mubr.bf16.mxu0 0
        %3434 = vmatmul.mubr.bf16.gmra.mrb[0].mxu0 %v2389
        %v3435 = vpop.f32.mrb[0].mxu0
        %v3436 = vadd.f32 0.0, %v3435
        %v3437 = vpop.f32.mrb[0].mxu0
        %v3438 = vadd.f32 0.0, %v3437
        %v3439 = vpop.f32.mrb[0].mxu0
        %v3440 = vadd.f32 0.0, %v3439
        %v3441 = vpop.f32.mrb[0].mxu0
        %v3442 = vadd.f32 0.0, %v3441
        %3443 = vmatprep.mubr.bf16.mxu0 0
        %3444 = vmatmul.mubr.bf16.gmra.mrb[0].mxu0 %v2390
        %v3445 = vpop.f32.mrb[0].mxu0
        %v3446 = vadd.f32 0.0, %v3445
        %v3447 = vpop.f32.mrb[0].mxu0
        %v3448 = vadd.f32 0.0, %v3447
        %v3449 = vpop.f32.mrb[0].mxu0
        %v3450 = vadd.f32 0.0, %v3449
        %v3451 = vpop.f32.mrb[0].mxu0
        %v3452 = vadd.f32 0.0, %v3451
        %3453 = vmatprep.mubr.bf16.mxu0 0
        %3454 = vmatmul.mubr.bf16.gmra.mrb[0].mxu0 %v2391
        %v3455 = vpop.f32.mrb[0].mxu0
        %v3456 = vadd.f32 0.0, %v3455
        %v3457 = vpop.f32.mrb[0].mxu0
        %v3458 = vadd.f32 0.0, %v3457
        %v3459 = vpop.f32.mrb[0].mxu0
        %v3460 = vadd.f32 0.0, %v3459
        %v3461 = vpop.f32.mrb[0].mxu0
        %v3462 = vadd.f32 0.0, %v3461
        %3463 = vmatprep.mubr.bf16.mxu0 0
        %3464 = vmatmul.mubr.bf16.gmra.mrb[0].mxu0 %v2392
        %v3465 = vpop.f32.mrb[0].mxu0
        %v3466 = vadd.f32 0.0, %v3465
        %v3467 = vpop.f32.mrb[0].mxu0
        %v3468 = vadd.f32 0.0, %v3467
        %v3469 = vpop.f32.mrb[0].mxu0
        %v3470 = vadd.f32 0.0, %v3469
        %v3471 = vpop.f32.mrb[0].mxu0
        %v3472 = vadd.f32 0.0, %v3471
        %3473 = vmatprep.mubr.bf16.mxu0 0
        %3474 = vmatmul.mubr.bf16.gmra.mrb[0].mxu0 %v2393
        %v3475 = vpop.f32.mrb[0].mxu0
        %v3476 = vadd.f32 0.0, %v3475
        %v3477 = vpop.f32.mrb[0].mxu0
        %v3478 = vadd.f32 0.0, %v3477
        %v3479 = vpop.f32.mrb[0].mxu0
        %v3480 = vadd.f32 0.0, %v3479
        %v3481 = vpop.f32.mrb[0].mxu0
        %v3482 = vadd.f32 0.0, %v3481
        %3483 = vdwg.mxu0
        %3484 = vmatprep.subr.bf16.mxu0 %v2655
        %3485 = vmatpush1.bf16.msra.mxu0 %v2654
        %3486 = vmatprep.subr.bf16.mxu0 %v2663
        %3487 = vmatpush1.bf16.msra.mxu0 %v2662
        %3488 = vmatprep.subr.bf16.mxu0 %v2671
        %3489 = vmatpush1.bf16.msra.mxu0 %v2670
        %3490 = vmatprep.subr.bf16.mxu0 %v2679
        %3491 = vmatpush1.bf16.msra.mxu0 %v2678
        %3492 = vmatprep.subr.bf16.mxu0 %v2687
        %3493 = vmatpush1.bf16.msra.mxu0 %v2686
        %3494 = vmatprep.subr.bf16.mxu0 %v2695
        %3495 = vmatpush1.bf16.msra.mxu0 %v2694
        %3496 = vmatprep.subr.bf16.mxu0 %v2703
        %3497 = vmatpush1.bf16.msra.mxu0 %v2702
        %3498 = vmatprep.subr.bf16.mxu0 %v2711
        %3499 = vmatpush1.bf16.msra.mxu0 %v2710
        %3500 = vmatprep.subr.bf16.mxu0 0
        %3501 = vmatpush1.bf16.msra.mxu0 0
        %3502 = vmatprep.subr.bf16.mxu0 0
        %3503 = vmatpush1.bf16.msra.mxu0 0
        %3504 = vmatprep.subr.bf16.mxu0 0
        %3505 = vmatpush1.bf16.msra.mxu0 0
        %3506 = vmatprep.subr.bf16.mxu0 0
        %3507 = vmatpush1.bf16.msra.mxu0 0
        %3508 = vmatprep.subr.bf16.mxu0 0
        %3509 = vmatpush1.bf16.msra.mxu0 0
        %3510 = vmatprep.subr.bf16.mxu0 0
        %3511 = vmatpush1.bf16.msra.mxu0 0
        %3512 = vmatprep.subr.bf16.mxu0 0
        %3513 = vmatpush1.bf16.msra.mxu0 0
        %3514 = vmatprep.subr.bf16.mxu0 0
        %3515 = vmatpush1.bf16.msra.mxu0 0
        %3516 = vmatprep.mubr.bf16.mxu0 0
        %3517 = vmatmul.mubr.bf16.gmra.mrb[0].mxu0 %v2362
        %v3518 = vpop.f32.mrb[0].mxu0
        %v3519 = vadd.f32 0.0, %v3518
        %v3520 = vpop.f32.mrb[0].mxu0
        %v3521 = vadd.f32 0.0, %v3520
        %v3522 = vpop.f32.mrb[0].mxu0
        %v3523 = vadd.f32 0.0, %v3522
        %v3524 = vpop.f32.mrb[0].mxu0
        %v3525 = vadd.f32 0.0, %v3524
        %3526 = vmatprep.mubr.bf16.mxu0 0
        %3527 = vmatmul.mubr.bf16.gmra.mrb[0].mxu0 %v2363
        %v3528 = vpop.f32.mrb[0].mxu0
        %v3529 = vadd.f32 0.0, %v3528
        %v3530 = vpop.f32.mrb[0].mxu0
        %v3531 = vadd.f32 0.0, %v3530
        %v3532 = vpop.f32.mrb[0].mxu0
        %v3533 = vadd.f32 0.0, %v3532
        %v3534 = vpop.f32.mrb[0].mxu0
        %v3535 = vadd.f32 0.0, %v3534
        %3536 = vmatprep.mubr.bf16.mxu0 0
        %3537 = vmatmul.mubr.bf16.gmra.mrb[0].mxu0 %v2364
        %v3538 = vpop.f32.mrb[0].mxu0
        %v3539 = vadd.f32 0.0, %v3538
        %v3540 = vpop.f32.mrb[0].mxu0
        %v3541 = vadd.f32 0.0, %v3540
        %v3542 = vpop.f32.mrb[0].mxu0
        %v3543 = vadd.f32 0.0, %v3542
        %v3544 = vpop.f32.mrb[0].mxu0
        %v3545 = vadd.f32 0.0, %v3544
        %3546 = vmatprep.mubr.bf16.mxu0 0
        %3547 = vmatmul.mubr.bf16.gmra.mrb[0].mxu0 %v2365
        %v3548 = vpop.f32.mrb[0].mxu0
        %v3549 = vadd.f32 0.0, %v3548
        %v3550 = vpop.f32.mrb[0].mxu0
        %v3551 = vadd.f32 0.0, %v3550
        %v3552 = vpop.f32.mrb[0].mxu0
        %v3553 = vadd.f32 0.0, %v3552
        %v3554 = vpop.f32.mrb[0].mxu0
        %v3555 = vadd.f32 0.0, %v3554
        %3556 = vmatprep.mubr.bf16.mxu0 0
        %3557 = vmatmul.mubr.bf16.gmra.mrb[0].mxu0 %v2366
        %v3558 = vpop.f32.mrb[0].mxu0
        %v3559 = vadd.f32 0.0, %v3558
        %v3560 = vpop.f32.mrb[0].mxu0
        %v3561 = vadd.f32 0.0, %v3560
        %v3562 = vpop.f32.mrb[0].mxu0
        %v3563 = vadd.f32 0.0, %v3562
        %v3564 = vpop.f32.mrb[0].mxu0
        %v3565 = vadd.f32 0.0, %v3564
        %3566 = vmatprep.mubr.bf16.mxu0 0
        %3567 = vmatmul.mubr.bf16.gmra.mrb[0].mxu0 %v2367
        %v3568 = vpop.f32.mrb[0].mxu0
        %v3569 = vadd.f32 0.0, %v3568
        %v3570 = vpop.f32.mrb[0].mxu0
        %v3571 = vadd.f32 0.0, %v3570
        %v3572 = vpop.f32.mrb[0].mxu0
        %v3573 = vadd.f32 0.0, %v3572
        %v3574 = vpop.f32.mrb[0].mxu0
        %v3575 = vadd.f32 0.0, %v3574
        %3576 = vmatprep.mubr.bf16.mxu0 0
        %3577 = vmatmul.mubr.bf16.gmra.mrb[0].mxu0 %v2368
        %v3578 = vpop.f32.mrb[0].mxu0
        %v3579 = vadd.f32 0.0, %v3578
        %v3580 = vpop.f32.mrb[0].mxu0
        %v3581 = vadd.f32 0.0, %v3580
        %v3582 = vpop.f32.mrb[0].mxu0
        %v3583 = vadd.f32 0.0, %v3582
        %v3584 = vpop.f32.mrb[0].mxu0
        %v3585 = vadd.f32 0.0, %v3584
        %3586 = vmatprep.mubr.bf16.mxu0 0
        %3587 = vmatmul.mubr.bf16.gmra.mrb[0].mxu0 %v2369
        %v3588 = vpop.f32.mrb[0].mxu0
        %v3589 = vadd.f32 0.0, %v3588
        %v3590 = vpop.f32.mrb[0].mxu0
        %v3591 = vadd.f32 0.0, %v3590
        %v3592 = vpop.f32.mrb[0].mxu0
        %v3593 = vadd.f32 0.0, %v3592
        %v3594 = vpop.f32.mrb[0].mxu0
        %v3595 = vadd.f32 0.0, %v3594
        %3596 = vmatprep.mubr.bf16.mxu0 0
        %3597 = vmatmul.mubr.bf16.gmra.mrb[0].mxu0 %v2370
        %v3598 = vpop.f32.mrb[0].mxu0
        %v3599 = vadd.f32 0.0, %v3598
        %v3600 = vpop.f32.mrb[0].mxu0
        %v3601 = vadd.f32 0.0, %v3600
        %v3602 = vpop.f32.mrb[0].mxu0
        %v3603 = vadd.f32 0.0, %v3602
        %v3604 = vpop.f32.mrb[0].mxu0
        %v3605 = vadd.f32 0.0, %v3604
        %3606 = vmatprep.mubr.bf16.mxu0 0
        %3607 = vmatmul.mubr.bf16.gmra.mrb[0].mxu0 %v2371
        %v3608 = vpop.f32.mrb[0].mxu0
        %v3609 = vadd.f32 0.0, %v3608
        %v3610 = vpop.f32.mrb[0].mxu0
        %v3611 = vadd.f32 0.0, %v3610
        %v3612 = vpop.f32.mrb[0].mxu0
        %v3613 = vadd.f32 0.0, %v3612
        %v3614 = vpop.f32.mrb[0].mxu0
        %v3615 = vadd.f32 0.0, %v3614
        %3616 = vmatprep.mubr.bf16.mxu0 0
        %3617 = vmatmul.mubr.bf16.gmra.mrb[0].mxu0 %v2372
        %v3618 = vpop.f32.mrb[0].mxu0
        %v3619 = vadd.f32 0.0, %v3618
        %v3620 = vpop.f32.mrb[0].mxu0
        %v3621 = vadd.f32 0.0, %v3620
        %v3622 = vpop.f32.mrb[0].mxu0
        %v3623 = vadd.f32 0.0, %v3622
        %v3624 = vpop.f32.mrb[0].mxu0
        %v3625 = vadd.f32 0.0, %v3624
        %3626 = vmatprep.mubr.bf16.mxu0 0
        %3627 = vmatmul.mubr.bf16.gmra.mrb[0].mxu0 %v2373
        %v3628 = vpop.f32.mrb[0].mxu0
        %v3629 = vadd.f32 0.0, %v3628
        %v3630 = vpop.f32.mrb[0].mxu0
        %v3631 = vadd.f32 0.0, %v3630
        %v3632 = vpop.f32.mrb[0].mxu0
        %v3633 = vadd.f32 0.0, %v3632
        %v3634 = vpop.f32.mrb[0].mxu0
        %v3635 = vadd.f32 0.0, %v3634
        %3636 = vmatprep.mubr.bf16.mxu0 0
        %3637 = vmatmul.mubr.bf16.gmra.mrb[0].mxu0 %v2374
        %v3638 = vpop.f32.mrb[0].mxu0
        %v3639 = vadd.f32 0.0, %v3638
        %v3640 = vpop.f32.mrb[0].mxu0
        %v3641 = vadd.f32 0.0, %v3640
        %v3642 = vpop.f32.mrb[0].mxu0
        %v3643 = vadd.f32 0.0, %v3642
        %v3644 = vpop.f32.mrb[0].mxu0
        %v3645 = vadd.f32 0.0, %v3644
        %3646 = vmatprep.mubr.bf16.mxu0 0
        %3647 = vmatmul.mubr.bf16.gmra.mrb[0].mxu0 %v2375
        %v3648 = vpop.f32.mrb[0].mxu0
        %v3649 = vadd.f32 0.0, %v3648
        %v3650 = vpop.f32.mrb[0].mxu0
        %v3651 = vadd.f32 0.0, %v3650
        %v3652 = vpop.f32.mrb[0].mxu0
        %v3653 = vadd.f32 0.0, %v3652
        %v3654 = vpop.f32.mrb[0].mxu0
        %v3655 = vadd.f32 0.0, %v3654
        %3656 = vmatprep.mubr.bf16.mxu0 0
        %3657 = vmatmul.mubr.bf16.gmra.mrb[0].mxu0 %v2376
        %v3658 = vpop.f32.mrb[0].mxu0
        %v3659 = vadd.f32 0.0, %v3658
        %v3660 = vpop.f32.mrb[0].mxu0
        %v3661 = vadd.f32 0.0, %v3660
        %v3662 = vpop.f32.mrb[0].mxu0
        %v3663 = vadd.f32 0.0, %v3662
        %v3664 = vpop.f32.mrb[0].mxu0
        %v3665 = vadd.f32 0.0, %v3664
        %3666 = vmatprep.mubr.bf16.mxu0 0
        %3667 = vmatmul.mubr.bf16.gmra.mrb[0].mxu0 %v2377
        %v3668 = vpop.f32.mrb[0].mxu0
        %v3669 = vadd.f32 0.0, %v3668
        %v3670 = vpop.f32.mrb[0].mxu0
        %v3671 = vadd.f32 0.0, %v3670
        %v3672 = vpop.f32.mrb[0].mxu0
        %v3673 = vadd.f32 0.0, %v3672
        %v3674 = vpop.f32.mrb[0].mxu0
        %v3675 = vadd.f32 0.0, %v3674
        %3676 = vmatprep.mubr.bf16.mxu0 0
        %3677 = vmatmul.mubr.bf16.gmra.mrb[0].mxu0 %v2378
        %v3678 = vpop.f32.mrb[0].mxu0
        %v3679 = vadd.f32 0.0, %v3678
        %v3680 = vpop.f32.mrb[0].mxu0
        %v3681 = vadd.f32 0.0, %v3680
        %v3682 = vpop.f32.mrb[0].mxu0
        %v3683 = vadd.f32 0.0, %v3682
        %v3684 = vpop.f32.mrb[0].mxu0
        %v3685 = vadd.f32 0.0, %v3684
        %3686 = vmatprep.mubr.bf16.mxu0 0
        %3687 = vmatmul.mubr.bf16.gmra.mrb[0].mxu0 %v2379
        %v3688 = vpop.f32.mrb[0].mxu0
        %v3689 = vadd.f32 0.0, %v3688
        %v3690 = vpop.f32.mrb[0].mxu0
        %v3691 = vadd.f32 0.0, %v3690
        %v3692 = vpop.f32.mrb[0].mxu0
        %v3693 = vadd.f32 0.0, %v3692
        %v3694 = vpop.f32.mrb[0].mxu0
        %v3695 = vadd.f32 0.0, %v3694
        %3696 = vmatprep.mubr.bf16.mxu0 0
        %3697 = vmatmul.mubr.bf16.gmra.mrb[0].mxu0 %v2380
        %v3698 = vpop.f32.mrb[0].mxu0
        %v3699 = vadd.f32 0.0, %v3698
        %v3700 = vpop.f32.mrb[0].mxu0
        %v3701 = vadd.f32 0.0, %v3700
        %v3702 = vpop.f32.mrb[0].mxu0
        %v3703 = vadd.f32 0.0, %v3702
        %v3704 = vpop.f32.mrb[0].mxu0
        %v3705 = vadd.f32 0.0, %v3704
        %3706 = vmatprep.mubr.bf16.mxu0 0
        %3707 = vmatmul.mubr.bf16.gmra.mrb[0].mxu0 %v2381
        %v3708 = vpop.f32.mrb[0].mxu0
        %v3709 = vadd.f32 0.0, %v3708
        %v3710 = vpop.f32.mrb[0].mxu0
        %v3711 = vadd.f32 0.0, %v3710
        %v3712 = vpop.f32.mrb[0].mxu0
        %v3713 = vadd.f32 0.0, %v3712
        %v3714 = vpop.f32.mrb[0].mxu0
        %v3715 = vadd.f32 0.0, %v3714
        %3716 = vmatprep.mubr.bf16.mxu0 0
        %3717 = vmatmul.mubr.bf16.gmra.mrb[0].mxu0 %v2382
        %v3718 = vpop.f32.mrb[0].mxu0
        %v3719 = vadd.f32 0.0, %v3718
        %v3720 = vpop.f32.mrb[0].mxu0
        %v3721 = vadd.f32 0.0, %v3720
        %v3722 = vpop.f32.mrb[0].mxu0
        %v3723 = vadd.f32 0.0, %v3722
        %v3724 = vpop.f32.mrb[0].mxu0
        %v3725 = vadd.f32 0.0, %v3724
        %3726 = vmatprep.mubr.bf16.mxu0 0
        %3727 = vmatmul.mubr.bf16.gmra.mrb[0].mxu0 %v2383
        %v3728 = vpop.f32.mrb[0].mxu0
        %v3729 = vadd.f32 0.0, %v3728
        %v3730 = vpop.f32.mrb[0].mxu0
        %v3731 = vadd.f32 0.0, %v3730
        %v3732 = vpop.f32.mrb[0].mxu0
        %v3733 = vadd.f32 0.0, %v3732
        %v3734 = vpop.f32.mrb[0].mxu0
        %v3735 = vadd.f32 0.0, %v3734
        %3736 = vmatprep.mubr.bf16.mxu0 0
        %3737 = vmatmul.mubr.bf16.gmra.mrb[0].mxu0 %v2384
        %v3738 = vpop.f32.mrb[0].mxu0
        %v3739 = vadd.f32 0.0, %v3738
        %v3740 = vpop.f32.mrb[0].mxu0
        %v3741 = vadd.f32 0.0, %v3740
        %v3742 = vpop.f32.mrb[0].mxu0
        %v3743 = vadd.f32 0.0, %v3742
        %v3744 = vpop.f32.mrb[0].mxu0
        %v3745 = vadd.f32 0.0, %v3744
        %3746 = vmatprep.mubr.bf16.mxu0 0
        %3747 = vmatmul.mubr.bf16.gmra.mrb[0].mxu0 %v2385
        %v3748 = vpop.f32.mrb[0].mxu0
        %v3749 = vadd.f32 0.0, %v3748
        %v3750 = vpop.f32.mrb[0].mxu0
        %v3751 = vadd.f32 0.0, %v3750
        %v3752 = vpop.f32.mrb[0].mxu0
        %v3753 = vadd.f32 0.0, %v3752
        %v3754 = vpop.f32.mrb[0].mxu0
        %v3755 = vadd.f32 0.0, %v3754
        %3756 = vmatprep.mubr.bf16.mxu0 0
        %3757 = vmatmul.mubr.bf16.gmra.mrb[0].mxu0 %v2386
        %v3758 = vpop.f32.mrb[0].mxu0
        %v3759 = vadd.f32 0.0, %v3758
        %v3760 = vpop.f32.mrb[0].mxu0
        %v3761 = vadd.f32 0.0, %v3760
        %v3762 = vpop.f32.mrb[0].mxu0
        %v3763 = vadd.f32 0.0, %v3762
        %v3764 = vpop.f32.mrb[0].mxu0
        %v3765 = vadd.f32 0.0, %v3764
        %3766 = vmatprep.mubr.bf16.mxu0 0
        %3767 = vmatmul.mubr.bf16.gmra.mrb[0].mxu0 %v2387
        %v3768 = vpop.f32.mrb[0].mxu0
        %v3769 = vadd.f32 0.0, %v3768
        %v3770 = vpop.f32.mrb[0].mxu0
        %v3771 = vadd.f32 0.0, %v3770
        %v3772 = vpop.f32.mrb[0].mxu0
        %v3773 = vadd.f32 0.0, %v3772
        %v3774 = vpop.f32.mrb[0].mxu0
        %v3775 = vadd.f32 0.0, %v3774
        %3776 = vmatprep.mubr.bf16.mxu0 0
        %3777 = vmatmul.mubr.bf16.gmra.mrb[0].mxu0 %v2388
        %v3778 = vpop.f32.mrb[0].mxu0
        %v3779 = vadd.f32 0.0, %v3778
        %v3780 = vpop.f32.mrb[0].mxu0
        %v3781 = vadd.f32 0.0, %v3780
        %v3782 = vpop.f32.mrb[0].mxu0
        %v3783 = vadd.f32 0.0, %v3782
        %v3784 = vpop.f32.mrb[0].mxu0
        %v3785 = vadd.f32 0.0, %v3784
        %3786 = vmatprep.mubr.bf16.mxu0 0
        %3787 = vmatmul.mubr.bf16.gmra.mrb[0].mxu0 %v2389
        %v3788 = vpop.f32.mrb[0].mxu0
        %v3789 = vadd.f32 0.0, %v3788
        %v3790 = vpop.f32.mrb[0].mxu0
        %v3791 = vadd.f32 0.0, %v3790
        %v3792 = vpop.f32.mrb[0].mxu0
        %v3793 = vadd.f32 0.0, %v3792
        %v3794 = vpop.f32.mrb[0].mxu0
        %v3795 = vadd.f32 0.0, %v3794
        %3796 = vmatprep.mubr.bf16.mxu0 0
        %3797 = vmatmul.mubr.bf16.gmra.mrb[0].mxu0 %v2390
        %v3798 = vpop.f32.mrb[0].mxu0
        %v3799 = vadd.f32 0.0, %v3798
        %v3800 = vpop.f32.mrb[0].mxu0
        %v3801 = vadd.f32 0.0, %v3800
        %v3802 = vpop.f32.mrb[0].mxu0
        %v3803 = vadd.f32 0.0, %v3802
        %v3804 = vpop.f32.mrb[0].mxu0
        %v3805 = vadd.f32 0.0, %v3804
        %3806 = vmatprep.mubr.bf16.mxu0 0
        %3807 = vmatmul.mubr.bf16.gmra.mrb[0].mxu0 %v2391
        %v3808 = vpop.f32.mrb[0].mxu0
        %v3809 = vadd.f32 0.0, %v3808
        %v3810 = vpop.f32.mrb[0].mxu0
        %v3811 = vadd.f32 0.0, %v3810
        %v3812 = vpop.f32.mrb[0].mxu0
        %v3813 = vadd.f32 0.0, %v3812
        %v3814 = vpop.f32.mrb[0].mxu0
        %v3815 = vadd.f32 0.0, %v3814
        %3816 = vmatprep.mubr.bf16.mxu0 0
        %3817 = vmatmul.mubr.bf16.gmra.mrb[0].mxu0 %v2392
        %v3818 = vpop.f32.mrb[0].mxu0
        %v3819 = vadd.f32 0.0, %v3818
        %v3820 = vpop.f32.mrb[0].mxu0
        %v3821 = vadd.f32 0.0, %v3820
        %v3822 = vpop.f32.mrb[0].mxu0
        %v3823 = vadd.f32 0.0, %v3822
        %v3824 = vpop.f32.mrb[0].mxu0
        %v3825 = vadd.f32 0.0, %v3824
        %3826 = vmatprep.mubr.bf16.mxu0 0
        %3827 = vmatmul.mubr.bf16.gmra.mrb[0].mxu0 %v2393
        %v3828 = vpop.f32.mrb[0].mxu0
        %v3829 = vadd.f32 0.0, %v3828
        %v3830 = vpop.f32.mrb[0].mxu0
        %v3831 = vadd.f32 0.0, %v3830
        %v3832 = vpop.f32.mrb[0].mxu0
        %v3833 = vadd.f32 0.0, %v3832
        %v3834 = vpop.f32.mrb[0].mxu0
        %v3835 = vadd.f32 0.0, %v3834
        %3836 = vdwg.mxu0
        %3837 = vmatprep.subr.bf16.mxu0 %v2657
        %3838 = vmatpush1.bf16.msra.mxu0 %v2656
        %3839 = vmatprep.subr.bf16.mxu0 %v2665
        %3840 = vmatpush1.bf16.msra.mxu0 %v2664
        %3841 = vmatprep.subr.bf16.mxu0 %v2673
        %3842 = vmatpush1.bf16.msra.mxu0 %v2672
        %3843 = vmatprep.subr.bf16.mxu0 %v2681
        %3844 = vmatpush1.bf16.msra.mxu0 %v2680
        %3845 = vmatprep.subr.bf16.mxu0 %v2689
        %3846 = vmatpush1.bf16.msra.mxu0 %v2688
        %3847 = vmatprep.subr.bf16.mxu0 %v2697
        %3848 = vmatpush1.bf16.msra.mxu0 %v2696
        %3849 = vmatprep.subr.bf16.mxu0 %v2705
        %3850 = vmatpush1.bf16.msra.mxu0 %v2704
        %3851 = vmatprep.subr.bf16.mxu0 %v2713
        %3852 = vmatpush1.bf16.msra.mxu0 %v2712
        %3853 = vmatprep.subr.bf16.mxu0 0
        %3854 = vmatpush1.bf16.msra.mxu0 0
        %3855 = vmatprep.subr.bf16.mxu0 0
        %3856 = vmatpush1.bf16.msra.mxu0 0
        %3857 = vmatprep.subr.bf16.mxu0 0
        %3858 = vmatpush1.bf16.msra.mxu0 0
        %3859 = vmatprep.subr.bf16.mxu0 0
        %3860 = vmatpush1.bf16.msra.mxu0 0
        %3861 = vmatprep.subr.bf16.mxu0 0
        %3862 = vmatpush1.bf16.msra.mxu0 0
        %3863 = vmatprep.subr.bf16.mxu0 0
        %3864 = vmatpush1.bf16.msra.mxu0 0
        %3865 = vmatprep.subr.bf16.mxu0 0
        %3866 = vmatpush1.bf16.msra.mxu0 0
        %3867 = vmatprep.subr.bf16.mxu0 0
        %3868 = vmatpush1.bf16.msra.mxu0 0
        %3869 = vmatprep.mubr.bf16.mxu0 0
        %3870 = vmatmul.mubr.bf16.gmra.mrb[0].mxu0 %v2362
        %v3871 = vpop.f32.mrb[0].mxu0
        %v3872 = vadd.f32 0.0, %v3871
        %v3873 = vpop.f32.mrb[0].mxu0
        %v3874 = vadd.f32 0.0, %v3873
        %v3875 = vpop.f32.mrb[0].mxu0
        %v3876 = vadd.f32 0.0, %v3875
        %v3877 = vpop.f32.mrb[0].mxu0
        %v3878 = vadd.f32 0.0, %v3877
        %3879 = vmatprep.mubr.bf16.mxu0 0
        %3880 = vmatmul.mubr.bf16.gmra.mrb[0].mxu0 %v2363
        %v3881 = vpop.f32.mrb[0].mxu0
        %v3882 = vadd.f32 0.0, %v3881
        %v3883 = vpop.f32.mrb[0].mxu0
        %v3884 = vadd.f32 0.0, %v3883
        %v3885 = vpop.f32.mrb[0].mxu0
        %v3886 = vadd.f32 0.0, %v3885
        %v3887 = vpop.f32.mrb[0].mxu0
        %v3888 = vadd.f32 0.0, %v3887
        %3889 = vmatprep.mubr.bf16.mxu0 0
        %3890 = vmatmul.mubr.bf16.gmra.mrb[0].mxu0 %v2364
        %v3891 = vpop.f32.mrb[0].mxu0
        %v3892 = vadd.f32 0.0, %v3891
        %v3893 = vpop.f32.mrb[0].mxu0
        %v3894 = vadd.f32 0.0, %v3893
        %v3895 = vpop.f32.mrb[0].mxu0
        %v3896 = vadd.f32 0.0, %v3895
        %v3897 = vpop.f32.mrb[0].mxu0
        %v3898 = vadd.f32 0.0, %v3897
        %3899 = vmatprep.mubr.bf16.mxu0 0
        %3900 = vmatmul.mubr.bf16.gmra.mrb[0].mxu0 %v2365
        %v3901 = vpop.f32.mrb[0].mxu0
        %v3902 = vadd.f32 0.0, %v3901
        %v3903 = vpop.f32.mrb[0].mxu0
        %v3904 = vadd.f32 0.0, %v3903
        %v3905 = vpop.f32.mrb[0].mxu0
        %v3906 = vadd.f32 0.0, %v3905
        %v3907 = vpop.f32.mrb[0].mxu0
        %v3908 = vadd.f32 0.0, %v3907
        %3909 = vmatprep.mubr.bf16.mxu0 0
        %3910 = vmatmul.mubr.bf16.gmra.mrb[0].mxu0 %v2366
        %v3911 = vpop.f32.mrb[0].mxu0
        %v3912 = vadd.f32 0.0, %v3911
        %v3913 = vpop.f32.mrb[0].mxu0
        %v3914 = vadd.f32 0.0, %v3913
        %v3915 = vpop.f32.mrb[0].mxu0
        %v3916 = vadd.f32 0.0, %v3915
        %v3917 = vpop.f32.mrb[0].mxu0
        %v3918 = vadd.f32 0.0, %v3917
        %3919 = vmatprep.mubr.bf16.mxu0 0
        %3920 = vmatmul.mubr.bf16.gmra.mrb[0].mxu0 %v2367
        %v3921 = vpop.f32.mrb[0].mxu0
        %v3922 = vadd.f32 0.0, %v3921
        %v3923 = vpop.f32.mrb[0].mxu0
        %v3924 = vadd.f32 0.0, %v3923
        %v3925 = vpop.f32.mrb[0].mxu0
        %v3926 = vadd.f32 0.0, %v3925
        %v3927 = vpop.f32.mrb[0].mxu0
        %v3928 = vadd.f32 0.0, %v3927
        %3929 = vmatprep.mubr.bf16.mxu0 0
        %3930 = vmatmul.mubr.bf16.gmra.mrb[0].mxu0 %v2368
        %v3931 = vpop.f32.mrb[0].mxu0
        %v3932 = vadd.f32 0.0, %v3931
        %v3933 = vpop.f32.mrb[0].mxu0
        %v3934 = vadd.f32 0.0, %v3933
        %v3935 = vpop.f32.mrb[0].mxu0
        %v3936 = vadd.f32 0.0, %v3935
        %v3937 = vpop.f32.mrb[0].mxu0
        %v3938 = vadd.f32 0.0, %v3937
        %3939 = vmatprep.mubr.bf16.mxu0 0
        %3940 = vmatmul.mubr.bf16.gmra.mrb[0].mxu0 %v2369
        %v3941 = vpop.f32.mrb[0].mxu0
        %v3942 = vadd.f32 0.0, %v3941
        %v3943 = vpop.f32.mrb[0].mxu0
        %v3944 = vadd.f32 0.0, %v3943
        %v3945 = vpop.f32.mrb[0].mxu0
        %v3946 = vadd.f32 0.0, %v3945
        %v3947 = vpop.f32.mrb[0].mxu0
        %v3948 = vadd.f32 0.0, %v3947
        %3949 = vmatprep.mubr.bf16.mxu0 0
        %3950 = vmatmul.mubr.bf16.gmra.mrb[0].mxu0 %v2370
        %v3951 = vpop.f32.mrb[0].mxu0
        %v3952 = vadd.f32 0.0, %v3951
        %v3953 = vpop.f32.mrb[0].mxu0
        %v3954 = vadd.f32 0.0, %v3953
        %v3955 = vpop.f32.mrb[0].mxu0
        %v3956 = vadd.f32 0.0, %v3955
        %v3957 = vpop.f32.mrb[0].mxu0
        %v3958 = vadd.f32 0.0, %v3957
        %3959 = vmatprep.mubr.bf16.mxu0 0
        %3960 = vmatmul.mubr.bf16.gmra.mrb[0].mxu0 %v2371
        %v3961 = vpop.f32.mrb[0].mxu0
        %v3962 = vadd.f32 0.0, %v3961
        %v3963 = vpop.f32.mrb[0].mxu0
        %v3964 = vadd.f32 0.0, %v3963
        %v3965 = vpop.f32.mrb[0].mxu0
        %v3966 = vadd.f32 0.0, %v3965
        %v3967 = vpop.f32.mrb[0].mxu0
        %v3968 = vadd.f32 0.0, %v3967
        %3969 = vmatprep.mubr.bf16.mxu0 0
        %3970 = vmatmul.mubr.bf16.gmra.mrb[0].mxu0 %v2372
        %v3971 = vpop.f32.mrb[0].mxu0
        %v3972 = vadd.f32 0.0, %v3971
        %v3973 = vpop.f32.mrb[0].mxu0
        %v3974 = vadd.f32 0.0, %v3973
        %v3975 = vpop.f32.mrb[0].mxu0
        %v3976 = vadd.f32 0.0, %v3975
        %v3977 = vpop.f32.mrb[0].mxu0
        %v3978 = vadd.f32 0.0, %v3977
        %3979 = vmatprep.mubr.bf16.mxu0 0
        %3980 = vmatmul.mubr.bf16.gmra.mrb[0].mxu0 %v2373
        %v3981 = vpop.f32.mrb[0].mxu0
        %v3982 = vadd.f32 0.0, %v3981
        %v3983 = vpop.f32.mrb[0].mxu0
        %v3984 = vadd.f32 0.0, %v3983
        %v3985 = vpop.f32.mrb[0].mxu0
        %v3986 = vadd.f32 0.0, %v3985
        %v3987 = vpop.f32.mrb[0].mxu0
        %v3988 = vadd.f32 0.0, %v3987
        %3989 = vmatprep.mubr.bf16.mxu0 0
        %3990 = vmatmul.mubr.bf16.gmra.mrb[0].mxu0 %v2374
        %v3991 = vpop.f32.mrb[0].mxu0
        %v3992 = vadd.f32 0.0, %v3991
        %v3993 = vpop.f32.mrb[0].mxu0
        %v3994 = vadd.f32 0.0, %v3993
        %v3995 = vpop.f32.mrb[0].mxu0
        %v3996 = vadd.f32 0.0, %v3995
        %v3997 = vpop.f32.mrb[0].mxu0
        %v3998 = vadd.f32 0.0, %v3997
        %3999 = vmatprep.mubr.bf16.mxu0 0
        %4000 = vmatmul.mubr.bf16.gmra.mrb[0].mxu0 %v2375
        %v4001 = vpop.f32.mrb[0].mxu0
        %v4002 = vadd.f32 0.0, %v4001
        %v4003 = vpop.f32.mrb[0].mxu0
        %v4004 = vadd.f32 0.0, %v4003
        %v4005 = vpop.f32.mrb[0].mxu0
        %v4006 = vadd.f32 0.0, %v4005
        %v4007 = vpop.f32.mrb[0].mxu0
        %v4008 = vadd.f32 0.0, %v4007
        %4009 = vmatprep.mubr.bf16.mxu0 0
        %4010 = vmatmul.mubr.bf16.gmra.mrb[0].mxu0 %v2376
        %v4011 = vpop.f32.mrb[0].mxu0
        %v4012 = vadd.f32 0.0, %v4011
        %v4013 = vpop.f32.mrb[0].mxu0
        %v4014 = vadd.f32 0.0, %v4013
        %v4015 = vpop.f32.mrb[0].mxu0
        %v4016 = vadd.f32 0.0, %v4015
        %v4017 = vpop.f32.mrb[0].mxu0
        %v4018 = vadd.f32 0.0, %v4017
        %4019 = vmatprep.mubr.bf16.mxu0 0
        %4020 = vmatmul.mubr.bf16.gmra.mrb[0].mxu0 %v2377
        %v4021 = vpop.f32.mrb[0].mxu0
        %v4022 = vadd.f32 0.0, %v4021
        %v4023 = vpop.f32.mrb[0].mxu0
        %v4024 = vadd.f32 0.0, %v4023
        %v4025 = vpop.f32.mrb[0].mxu0
        %v4026 = vadd.f32 0.0, %v4025
        %v4027 = vpop.f32.mrb[0].mxu0
        %v4028 = vadd.f32 0.0, %v4027
        %4029 = vmatprep.mubr.bf16.mxu0 0
        %4030 = vmatmul.mubr.bf16.gmra.mrb[0].mxu0 %v2378
        %v4031 = vpop.f32.mrb[0].mxu0
        %v4032 = vadd.f32 0.0, %v4031
        %v4033 = vpop.f32.mrb[0].mxu0
        %v4034 = vadd.f32 0.0, %v4033
        %v4035 = vpop.f32.mrb[0].mxu0
        %v4036 = vadd.f32 0.0, %v4035
        %v4037 = vpop.f32.mrb[0].mxu0
        %v4038 = vadd.f32 0.0, %v4037
        %4039 = vmatprep.mubr.bf16.mxu0 0
        %4040 = vmatmul.mubr.bf16.gmra.mrb[0].mxu0 %v2379
        %v4041 = vpop.f32.mrb[0].mxu0
        %v4042 = vadd.f32 0.0, %v4041
        %v4043 = vpop.f32.mrb[0].mxu0
        %v4044 = vadd.f32 0.0, %v4043
        %v4045 = vpop.f32.mrb[0].mxu0
        %v4046 = vadd.f32 0.0, %v4045
        %v4047 = vpop.f32.mrb[0].mxu0
        %v4048 = vadd.f32 0.0, %v4047
        %4049 = vmatprep.mubr.bf16.mxu0 0
        %4050 = vmatmul.mubr.bf16.gmra.mrb[0].mxu0 %v2380
        %v4051 = vpop.f32.mrb[0].mxu0
        %v4052 = vadd.f32 0.0, %v4051
        %v4053 = vpop.f32.mrb[0].mxu0
        %v4054 = vadd.f32 0.0, %v4053
        %v4055 = vpop.f32.mrb[0].mxu0
        %v4056 = vadd.f32 0.0, %v4055
        %v4057 = vpop.f32.mrb[0].mxu0
        %v4058 = vadd.f32 0.0, %v4057
        %4059 = vmatprep.mubr.bf16.mxu0 0
        %4060 = vmatmul.mubr.bf16.gmra.mrb[0].mxu0 %v2381
        %v4061 = vpop.f32.mrb[0].mxu0
        %v4062 = vadd.f32 0.0, %v4061
        %v4063 = vpop.f32.mrb[0].mxu0
        %v4064 = vadd.f32 0.0, %v4063
        %v4065 = vpop.f32.mrb[0].mxu0
        %v4066 = vadd.f32 0.0, %v4065
        %v4067 = vpop.f32.mrb[0].mxu0
        %v4068 = vadd.f32 0.0, %v4067
        %4069 = vmatprep.mubr.bf16.mxu0 0
        %4070 = vmatmul.mubr.bf16.gmra.mrb[0].mxu0 %v2382
        %v4071 = vpop.f32.mrb[0].mxu0
        %v4072 = vadd.f32 0.0, %v4071
        %v4073 = vpop.f32.mrb[0].mxu0
        %v4074 = vadd.f32 0.0, %v4073
        %v4075 = vpop.f32.mrb[0].mxu0
        %v4076 = vadd.f32 0.0, %v4075
        %v4077 = vpop.f32.mrb[0].mxu0
        %v4078 = vadd.f32 0.0, %v4077
        %4079 = vmatprep.mubr.bf16.mxu0 0
        %4080 = vmatmul.mubr.bf16.gmra.mrb[0].mxu0 %v2383
        %v4081 = vpop.f32.mrb[0].mxu0
        %v4082 = vadd.f32 0.0, %v4081
        %v4083 = vpop.f32.mrb[0].mxu0
        %v4084 = vadd.f32 0.0, %v4083
        %v4085 = vpop.f32.mrb[0].mxu0
        %v4086 = vadd.f32 0.0, %v4085
        %v4087 = vpop.f32.mrb[0].mxu0
        %v4088 = vadd.f32 0.0, %v4087
        %4089 = vmatprep.mubr.bf16.mxu0 0
        %4090 = vmatmul.mubr.bf16.gmra.mrb[0].mxu0 %v2384
        %v4091 = vpop.f32.mrb[0].mxu0
        %v4092 = vadd.f32 0.0, %v4091
        %v4093 = vpop.f32.mrb[0].mxu0
        %v4094 = vadd.f32 0.0, %v4093
        %v4095 = vpop.f32.mrb[0].mxu0
        %v4096 = vadd.f32 0.0, %v4095
        %v4097 = vpop.f32.mrb[0].mxu0
        %v4098 = vadd.f32 0.0, %v4097
        %4099 = vmatprep.mubr.bf16.mxu0 0
        %4100 = vmatmul.mubr.bf16.gmra.mrb[0].mxu0 %v2385
        %v4101 = vpop.f32.mrb[0].mxu0
        %v4102 = vadd.f32 0.0, %v4101
        %v4103 = vpop.f32.mrb[0].mxu0
        %v4104 = vadd.f32 0.0, %v4103
        %v4105 = vpop.f32.mrb[0].mxu0
        %v4106 = vadd.f32 0.0, %v4105
        %v4107 = vpop.f32.mrb[0].mxu0
        %v4108 = vadd.f32 0.0, %v4107
        %4109 = vmatprep.mubr.bf16.mxu0 0
        %4110 = vmatmul.mubr.bf16.gmra.mrb[0].mxu0 %v2386
        %v4111 = vpop.f32.mrb[0].mxu0
        %v4112 = vadd.f32 0.0, %v4111
        %v4113 = vpop.f32.mrb[0].mxu0
        %v4114 = vadd.f32 0.0, %v4113
        %v4115 = vpop.f32.mrb[0].mxu0
        %v4116 = vadd.f32 0.0, %v4115
        %v4117 = vpop.f32.mrb[0].mxu0
        %v4118 = vadd.f32 0.0, %v4117
        %4119 = vmatprep.mubr.bf16.mxu0 0
        %4120 = vmatmul.mubr.bf16.gmra.mrb[0].mxu0 %v2387
        %v4121 = vpop.f32.mrb[0].mxu0
        %v4122 = vadd.f32 0.0, %v4121
        %v4123 = vpop.f32.mrb[0].mxu0
        %v4124 = vadd.f32 0.0, %v4123
        %v4125 = vpop.f32.mrb[0].mxu0
        %v4126 = vadd.f32 0.0, %v4125
        %v4127 = vpop.f32.mrb[0].mxu0
        %v4128 = vadd.f32 0.0, %v4127
        %4129 = vmatprep.mubr.bf16.mxu0 0
        %4130 = vmatmul.mubr.bf16.gmra.mrb[0].mxu0 %v2388
        %v4131 = vpop.f32.mrb[0].mxu0
        %v4132 = vadd.f32 0.0, %v4131
        %v4133 = vpop.f32.mrb[0].mxu0
        %v4134 = vadd.f32 0.0, %v4133
        %v4135 = vpop.f32.mrb[0].mxu0
        %v4136 = vadd.f32 0.0, %v4135
        %v4137 = vpop.f32.mrb[0].mxu0
        %v4138 = vadd.f32 0.0, %v4137
        %4139 = vmatprep.mubr.bf16.mxu0 0
        %4140 = vmatmul.mubr.bf16.gmra.mrb[0].mxu0 %v2389
        %v4141 = vpop.f32.mrb[0].mxu0
        %v4142 = vadd.f32 0.0, %v4141
        %v4143 = vpop.f32.mrb[0].mxu0
        %v4144 = vadd.f32 0.0, %v4143
        %v4145 = vpop.f32.mrb[0].mxu0
        %v4146 = vadd.f32 0.0, %v4145
        %v4147 = vpop.f32.mrb[0].mxu0
        %v4148 = vadd.f32 0.0, %v4147
        %4149 = vmatprep.mubr.bf16.mxu0 0
        %4150 = vmatmul.mubr.bf16.gmra.mrb[0].mxu0 %v2390
        %v4151 = vpop.f32.mrb[0].mxu0
        %v4152 = vadd.f32 0.0, %v4151
        %v4153 = vpop.f32.mrb[0].mxu0
        %v4154 = vadd.f32 0.0, %v4153
        %v4155 = vpop.f32.mrb[0].mxu0
        %v4156 = vadd.f32 0.0, %v4155
        %v4157 = vpop.f32.mrb[0].mxu0
        %v4158 = vadd.f32 0.0, %v4157
        %4159 = vmatprep.mubr.bf16.mxu0 0
        %4160 = vmatmul.mubr.bf16.gmra.mrb[0].mxu0 %v2391
        %v4161 = vpop.f32.mrb[0].mxu0
        %v4162 = vadd.f32 0.0, %v4161
        %v4163 = vpop.f32.mrb[0].mxu0
        %v4164 = vadd.f32 0.0, %v4163
        %v4165 = vpop.f32.mrb[0].mxu0
        %v4166 = vadd.f32 0.0, %v4165
        %v4167 = vpop.f32.mrb[0].mxu0
        %v4168 = vadd.f32 0.0, %v4167
        %4169 = vmatprep.mubr.bf16.mxu0 0
        %4170 = vmatmul.mubr.bf16.gmra.mrb[0].mxu0 %v2392
        %v4171 = vpop.f32.mrb[0].mxu0
        %v4172 = vadd.f32 0.0, %v4171
        %v4173 = vpop.f32.mrb[0].mxu0
        %v4174 = vadd.f32 0.0, %v4173
        %v4175 = vpop.f32.mrb[0].mxu0
        %v4176 = vadd.f32 0.0, %v4175
        %v4177 = vpop.f32.mrb[0].mxu0
        %v4178 = vadd.f32 0.0, %v4177
        %4179 = vmatprep.mubr.bf16.mxu0 0
        %4180 = vmatmul.mubr.bf16.gmra.mrb[0].mxu0 %v2393
        %v4181 = vpop.f32.mrb[0].mxu0
        %v4182 = vadd.f32 0.0, %v4181
        %v4183 = vpop.f32.mrb[0].mxu0
        %v4184 = vadd.f32 0.0, %v4183
        %v4185 = vpop.f32.mrb[0].mxu0
        %v4186 = vadd.f32 0.0, %v4185
        %v4187 = vpop.f32.mrb[0].mxu0
        %v4188 = vadd.f32 0.0, %v4187
        %4189 = vdwg.mxu0
        %p4190 = scmp.eq.s32.totalorder %s28, 0
        // Predicated region
        $region49: #{pointnetfeat_return2.1} parent=47 // pred_check
          %p4191 = pneg %p4190
        $region50: #{pointnetfeat_return2.1} parent=47 // pred_check_branch
          %4193 = sbr.rel (%p4191) target = $region52
        $region51: #{pointnetfeat_return2.1} parent=47 // pred_region
          %4194 = vst [vmem:[%s344] sm:$0xff] -inf
        $region52: #{pointnetfeat_return2.1} parent=47 // pred_fallthru
          _
        %v4195 = vld [vmem:[%s344] sm:$0xff]
        %v4196 = vmax.f32 %v2813, %v2817
        %v4197 = vmax.f32 %v4196, %v2823
        %v4198 = vmax.f32 %v4197, %v2827
        %v4199 = vmax.f32 %v4198, %v2833
        %v4200 = vmax.f32 %v4199, %v2837
        %v4201 = vmax.f32 %v4200, %v2843
        %v4202 = vmax.f32 %v4201, %v2847
        %v4203 = vmax.f32 %v4202, %v2853
        %v4204 = vmax.f32 %v4203, %v2857
        %v4205 = vmax.f32 %v4204, %v2863
        %v4206 = vmax.f32 %v4205, %v2867
        %v4207 = vmax.f32 %v4206, %v2873
        %v4208 = vmax.f32 %v4207, %v2877
        %v4209 = vmax.f32 %v4208, %v2883
        %v4210 = vmax.f32 %v4209, %v2887
        %v4211 = vmax.f32 %v4210, %v2893
        %v4212 = vmax.f32 %v4211, %v2897
        %v4213 = vmax.f32 %v4212, %v2903
        %v4214 = vmax.f32 %v4213, %v2907
        %v4215 = vmax.f32 %v4214, %v2913
        %v4216 = vmax.f32 %v4215, %v2917
        %v4217 = vmax.f32 %v4216, %v2923
        %v4218 = vmax.f32 %v4217, %v2927
        %v4219 = vmax.f32 %v4218, %v2933
        %v4220 = vmax.f32 %v4219, %v2937
        %v4221 = vmax.f32 %v4220, %v2943
        %v4222 = vmax.f32 %v4221, %v2947
        %v4223 = vmax.f32 %v4222, %v2953
        %v4224 = vmax.f32 %v4223, %v2957
        %v4225 = vmax.f32 %v4224, %v2963
        %v4226 = vmax.f32 %v4225, %v2967
        %v4227 = vmax.f32 %v4226, %v2973
        %v4228 = vmax.f32 %v4227, %v2977
        %v4229 = vmax.f32 %v4228, %v2983
        %v4230 = vmax.f32 %v4229, %v2987
        %v4231 = vmax.f32 %v4230, %v2993
        %v4232 = vmax.f32 %v4231, %v2997
        %v4233 = vmax.f32 %v4232, %v3003
        %v4234 = vmax.f32 %v4233, %v3007
        %v4235 = vmax.f32 %v4234, %v3013
        %v4236 = vmax.f32 %v4235, %v3017
        %v4237 = vmax.f32 %v4236, %v3023
        %v4238 = vmax.f32 %v4237, %v3027
        %v4239 = vmax.f32 %v4238, %v3033
        %v4240 = vmax.f32 %v4239, %v3037
        %v4241 = vmax.f32 %v4240, %v3043
        %v4242 = vmax.f32 %v4241, %v3047
        %v4243 = vmax.f32 %v4242, %v3053
        %v4244 = vmax.f32 %v4243, %v3057
        %v4245 = vmax.f32 %v4244, %v3063
        %v4246 = vmax.f32 %v4245, %v3067
        %v4247 = vmax.f32 %v4246, %v3073
        %v4248 = vmax.f32 %v4247, %v3077
        %v4249 = vmax.f32 %v4248, %v3083
        %v4250 = vmax.f32 %v4249, %v3087
        %v4251 = vmax.f32 %v4250, %v3093
        %v4252 = vmax.f32 %v4251, %v3097
        %v4253 = vmax.f32 %v4252, %v3103
        %v4254 = vmax.f32 %v4253, %v3107
        %v4255 = vmax.f32 %v4254, %v3113
        %v4256 = vmax.f32 %v4255, %v3117
        %v4257 = vmax.f32 %v4256, %v3123
        %v4258 = vmax.f32 %v4257, %v3127
        %v4259 = vrot.slane %v4258, 4
        %v4260 = vmax.f32 %v4258, %v4259
        %v4261 = vrot.slane %v4260, 2
        %v4262 = vmax.f32 %v4260, %v4261
        %v4263 = vrot.slane %v4262, 1
        %v4264 = vmax.f32 %v4262, %v4263
        %v4265 = vmax.f32 %v2815, %v2819
        %v4266 = vmax.f32 %v4265, %v2825
        %v4267 = vmax.f32 %v4266, %v2829
        %v4268 = vmax.f32 %v4267, %v2835
        %v4269 = vmax.f32 %v4268, %v2839
        %v4270 = vmax.f32 %v4269, %v2845
        %v4271 = vmax.f32 %v4270, %v2849
        %v4272 = vmax.f32 %v4271, %v2855
        %v4273 = vmax.f32 %v4272, %v2859
        %v4274 = vmax.f32 %v4273, %v2865
        %v4275 = vmax.f32 %v4274, %v2869
        %v4276 = vmax.f32 %v4275, %v2875
        %v4277 = vmax.f32 %v4276, %v2879
        %v4278 = vmax.f32 %v4277, %v2885
        %v4279 = vmax.f32 %v4278, %v2889
        %v4280 = vmax.f32 %v4279, %v2895
        %v4281 = vmax.f32 %v4280, %v2899
        %v4282 = vmax.f32 %v4281, %v2905
        %v4283 = vmax.f32 %v4282, %v2909
        %v4284 = vmax.f32 %v4283, %v2915
        %v4285 = vmax.f32 %v4284, %v2919
        %v4286 = vmax.f32 %v4285, %v2925
        %v4287 = vmax.f32 %v4286, %v2929
        %v4288 = vmax.f32 %v4287, %v2935
        %v4289 = vmax.f32 %v4288, %v2939
        %v4290 = vmax.f32 %v4289, %v2945
        %v4291 = vmax.f32 %v4290, %v2949
        %v4292 = vmax.f32 %v4291, %v2955
        %v4293 = vmax.f32 %v4292, %v2959
        %v4294 = vmax.f32 %v4293, %v2965
        %v4295 = vmax.f32 %v4294, %v2969
        %v4296 = vmax.f32 %v4295, %v2975
        %v4297 = vmax.f32 %v4296, %v2979
        %v4298 = vmax.f32 %v4297, %v2985
        %v4299 = vmax.f32 %v4298, %v2989
        %v4300 = vmax.f32 %v4299, %v2995
        %v4301 = vmax.f32 %v4300, %v2999
        %v4302 = vmax.f32 %v4301, %v3005
        %v4303 = vmax.f32 %v4302, %v3009
        %v4304 = vmax.f32 %v4303, %v3015
        %v4305 = vmax.f32 %v4304, %v3019
        %v4306 = vmax.f32 %v4305, %v3025
        %v4307 = vmax.f32 %v4306, %v3029
        %v4308 = vmax.f32 %v4307, %v3035
        %v4309 = vmax.f32 %v4308, %v3039
        %v4310 = vmax.f32 %v4309, %v3045
        %v4311 = vmax.f32 %v4310, %v3049
        %v4312 = vmax.f32 %v4311, %v3055
        %v4313 = vmax.f32 %v4312, %v3059
        %v4314 = vmax.f32 %v4313, %v3065
        %v4315 = vmax.f32 %v4314, %v3069
        %v4316 = vmax.f32 %v4315, %v3075
        %v4317 = vmax.f32 %v4316, %v3079
        %v4318 = vmax.f32 %v4317, %v3085
        %v4319 = vmax.f32 %v4318, %v3089
        %v4320 = vmax.f32 %v4319, %v3095
        %v4321 = vmax.f32 %v4320, %v3099
        %v4322 = vmax.f32 %v4321, %v3105
        %v4323 = vmax.f32 %v4322, %v3109
        %v4324 = vmax.f32 %v4323, %v3115
        %v4325 = vmax.f32 %v4324, %v3119
        %v4326 = vmax.f32 %v4325, %v3125
        %v4327 = vmax.f32 %v4326, %v3129
        %v4328 = vrot.slane %v4327, 4
        %v4329 = vmax.f32 %v4327, %v4328
        %v4330 = vrot.slane %v4329, 2
        %v4331 = vmax.f32 %v4329, %v4330
        %v4332 = vrot.slane %v4331, 1
        %v4333 = vmax.f32 %v4331, %v4332
        %v4334 = vmax.f32 %v3166, %v3170
        %v4335 = vmax.f32 %v4334, %v3176
        %v4336 = vmax.f32 %v4335, %v3180
        %v4337 = vmax.f32 %v4336, %v3186
        %v4338 = vmax.f32 %v4337, %v3190
        %v4339 = vmax.f32 %v4338, %v3196
        %v4340 = vmax.f32 %v4339, %v3200
        %v4341 = vmax.f32 %v4340, %v3206
        %v4342 = vmax.f32 %v4341, %v3210
        %v4343 = vmax.f32 %v4342, %v3216
        %v4344 = vmax.f32 %v4343, %v3220
        %v4345 = vmax.f32 %v4344, %v3226
        %v4346 = vmax.f32 %v4345, %v3230
        %v4347 = vmax.f32 %v4346, %v3236
        %v4348 = vmax.f32 %v4347, %v3240
        %v4349 = vmax.f32 %v4348, %v3246
        %v4350 = vmax.f32 %v4349, %v3250
        %v4351 = vmax.f32 %v4350, %v3256
        %v4352 = vmax.f32 %v4351, %v3260
        %v4353 = vmax.f32 %v4352, %v3266
        %v4354 = vmax.f32 %v4353, %v3270
        %v4355 = vmax.f32 %v4354, %v3276
        %v4356 = vmax.f32 %v4355, %v3280
        %v4357 = vmax.f32 %v4356, %v3286
        %v4358 = vmax.f32 %v4357, %v3290
        %v4359 = vmax.f32 %v4358, %v3296
        %v4360 = vmax.f32 %v4359, %v3300
        %v4361 = vmax.f32 %v4360, %v3306
        %v4362 = vmax.f32 %v4361, %v3310
        %v4363 = vmax.f32 %v4362, %v3316
        %v4364 = vmax.f32 %v4363, %v3320
        %v4365 = vmax.f32 %v4364, %v3326
        %v4366 = vmax.f32 %v4365, %v3330
        %v4367 = vmax.f32 %v4366, %v3336
        %v4368 = vmax.f32 %v4367, %v3340
        %v4369 = vmax.f32 %v4368, %v3346
        %v4370 = vmax.f32 %v4369, %v3350
        %v4371 = vmax.f32 %v4370, %v3356
        %v4372 = vmax.f32 %v4371, %v3360
        %v4373 = vmax.f32 %v4372, %v3366
        %v4374 = vmax.f32 %v4373, %v3370
        %v4375 = vmax.f32 %v4374, %v3376
        %v4376 = vmax.f32 %v4375, %v3380
        %v4377 = vmax.f32 %v4376, %v3386
        %v4378 = vmax.f32 %v4377, %v3390
        %v4379 = vmax.f32 %v4378, %v3396
        %v4380 = vmax.f32 %v4379, %v3400
        %v4381 = vmax.f32 %v4380, %v3406
        %v4382 = vmax.f32 %v4381, %v3410
        %v4383 = vmax.f32 %v4382, %v3416
        %v4384 = vmax.f32 %v4383, %v3420
        %v4385 = vmax.f32 %v4384, %v3426
        %v4386 = vmax.f32 %v4385, %v3430
        %v4387 = vmax.f32 %v4386, %v3436
        %v4388 = vmax.f32 %v4387, %v3440
        %v4389 = vmax.f32 %v4388, %v3446
        %v4390 = vmax.f32 %v4389, %v3450
        %v4391 = vmax.f32 %v4390, %v3456
        %v4392 = vmax.f32 %v4391, %v3460
        %v4393 = vmax.f32 %v4392, %v3466
        %v4394 = vmax.f32 %v4393, %v3470
        %v4395 = vmax.f32 %v4394, %v3476
        %v4396 = vmax.f32 %v4395, %v3480
        %v4397 = vrot.slane %v4396, 4
        %v4398 = vmax.f32 %v4396, %v4397
        %v4399 = vrot.slane %v4398, 2
        %v4400 = vmax.f32 %v4398, %v4399
        %v4401 = vrot.slane %v4400, 1
        %v4402 = vmax.f32 %v4400, %v4401
        %v4403 = vmax.f32 %v3168, %v3172
        %v4404 = vmax.f32 %v4403, %v3178
        %v4405 = vmax.f32 %v4404, %v3182
        %v4406 = vmax.f32 %v4405, %v3188
        %v4407 = vmax.f32 %v4406, %v3192
        %v4408 = vmax.f32 %v4407, %v3198
        %v4409 = vmax.f32 %v4408, %v3202
        %v4410 = vmax.f32 %v4409, %v3208
        %v4411 = vmax.f32 %v4410, %v3212
        %v4412 = vmax.f32 %v4411, %v3218
        %v4413 = vmax.f32 %v4412, %v3222
        %v4414 = vmax.f32 %v4413, %v3228
        %v4415 = vmax.f32 %v4414, %v3232
        %v4416 = vmax.f32 %v4415, %v3238
        %v4417 = vmax.f32 %v4416, %v3242
        %v4418 = vmax.f32 %v4417, %v3248
        %v4419 = vmax.f32 %v4418, %v3252
        %v4420 = vmax.f32 %v4419, %v3258
        %v4421 = vmax.f32 %v4420, %v3262
        %v4422 = vmax.f32 %v4421, %v3268
        %v4423 = vmax.f32 %v4422, %v3272
        %v4424 = vmax.f32 %v4423, %v3278
        %v4425 = vmax.f32 %v4424, %v3282
        %v4426 = vmax.f32 %v4425, %v3288
        %v4427 = vmax.f32 %v4426, %v3292
        %v4428 = vmax.f32 %v4427, %v3298
        %v4429 = vmax.f32 %v4428, %v3302
        %v4430 = vmax.f32 %v4429, %v3308
        %v4431 = vmax.f32 %v4430, %v3312
        %v4432 = vmax.f32 %v4431, %v3318
        %v4433 = vmax.f32 %v4432, %v3322
        %v4434 = vmax.f32 %v4433, %v3328
        %v4435 = vmax.f32 %v4434, %v3332
        %v4436 = vmax.f32 %v4435, %v3338
        %v4437 = vmax.f32 %v4436, %v3342
        %v4438 = vmax.f32 %v4437, %v3348
        %v4439 = vmax.f32 %v4438, %v3352
        %v4440 = vmax.f32 %v4439, %v3358
        %v4441 = vmax.f32 %v4440, %v3362
        %v4442 = vmax.f32 %v4441, %v3368
        %v4443 = vmax.f32 %v4442, %v3372
        %v4444 = vmax.f32 %v4443, %v3378
        %v4445 = vmax.f32 %v4444, %v3382
        %v4446 = vmax.f32 %v4445, %v3388
        %v4447 = vmax.f32 %v4446, %v3392
        %v4448 = vmax.f32 %v4447, %v3398
        %v4449 = vmax.f32 %v4448, %v3402
        %v4450 = vmax.f32 %v4449, %v3408
        %v4451 = vmax.f32 %v4450, %v3412
        %v4452 = vmax.f32 %v4451, %v3418
        %v4453 = vmax.f32 %v4452, %v3422
        %v4454 = vmax.f32 %v4453, %v3428
        %v4455 = vmax.f32 %v4454, %v3432
        %v4456 = vmax.f32 %v4455, %v3438
        %v4457 = vmax.f32 %v4456, %v3442
        %v4458 = vmax.f32 %v4457, %v3448
        %v4459 = vmax.f32 %v4458, %v3452
        %v4460 = vmax.f32 %v4459, %v3458
        %v4461 = vmax.f32 %v4460, %v3462
        %v4462 = vmax.f32 %v4461, %v3468
        %v4463 = vmax.f32 %v4462, %v3472
        %v4464 = vmax.f32 %v4463, %v3478
        %v4465 = vmax.f32 %v4464, %v3482
        %v4466 = vrot.slane %v4465, 4
        %v4467 = vmax.f32 %v4465, %v4466
        %v4468 = vrot.slane %v4467, 2
        %v4469 = vmax.f32 %v4467, %v4468
        %v4470 = vrot.slane %v4469, 1
        %v4471 = vmax.f32 %v4469, %v4470
        %v4472 = vmax.f32 %v3519, %v3523
        %v4473 = vmax.f32 %v4472, %v3529
        %v4474 = vmax.f32 %v4473, %v3533
        %v4475 = vmax.f32 %v4474, %v3539
        %v4476 = vmax.f32 %v4475, %v3543
        %v4477 = vmax.f32 %v4476, %v3549
        %v4478 = vmax.f32 %v4477, %v3553
        %v4479 = vmax.f32 %v4478, %v3559
        %v4480 = vmax.f32 %v4479, %v3563
        %v4481 = vmax.f32 %v4480, %v3569
        %v4482 = vmax.f32 %v4481, %v3573
        %v4483 = vmax.f32 %v4482, %v3579
        %v4484 = vmax.f32 %v4483, %v3583
        %v4485 = vmax.f32 %v4484, %v3589
        %v4486 = vmax.f32 %v4485, %v3593
        %v4487 = vmax.f32 %v4486, %v3599
        %v4488 = vmax.f32 %v4487, %v3603
        %v4489 = vmax.f32 %v4488, %v3609
        %v4490 = vmax.f32 %v4489, %v3613
        %v4491 = vmax.f32 %v4490, %v3619
        %v4492 = vmax.f32 %v4491, %v3623
        %v4493 = vmax.f32 %v4492, %v3629
        %v4494 = vmax.f32 %v4493, %v3633
        %v4495 = vmax.f32 %v4494, %v3639
        %v4496 = vmax.f32 %v4495, %v3643
        %v4497 = vmax.f32 %v4496, %v3649
        %v4498 = vmax.f32 %v4497, %v3653
        %v4499 = vmax.f32 %v4498, %v3659
        %v4500 = vmax.f32 %v4499, %v3663
        %v4501 = vmax.f32 %v4500, %v3669
        %v4502 = vmax.f32 %v4501, %v3673
        %v4503 = vmax.f32 %v4502, %v3679
        %v4504 = vmax.f32 %v4503, %v3683
        %v4505 = vmax.f32 %v4504, %v3689
        %v4506 = vmax.f32 %v4505, %v3693
        %v4507 = vmax.f32 %v4506, %v3699
        %v4508 = vmax.f32 %v4507, %v3703
        %v4509 = vmax.f32 %v4508, %v3709
        %v4510 = vmax.f32 %v4509, %v3713
        %v4511 = vmax.f32 %v4510, %v3719
        %v4512 = vmax.f32 %v4511, %v3723
        %v4513 = vmax.f32 %v4512, %v3729
        %v4514 = vmax.f32 %v4513, %v3733
        %v4515 = vmax.f32 %v4514, %v3739
        %v4516 = vmax.f32 %v4515, %v3743
        %v4517 = vmax.f32 %v4516, %v3749
        %v4518 = vmax.f32 %v4517, %v3753
        %v4519 = vmax.f32 %v4518, %v3759
        %v4520 = vmax.f32 %v4519, %v3763
        %v4521 = vmax.f32 %v4520, %v3769
        %v4522 = vmax.f32 %v4521, %v3773
        %v4523 = vmax.f32 %v4522, %v3779
        %v4524 = vmax.f32 %v4523, %v3783
        %v4525 = vmax.f32 %v4524, %v3789
        %v4526 = vmax.f32 %v4525, %v3793
        %v4527 = vmax.f32 %v4526, %v3799
        %v4528 = vmax.f32 %v4527, %v3803
        %v4529 = vmax.f32 %v4528, %v3809
        %v4530 = vmax.f32 %v4529, %v3813
        %v4531 = vmax.f32 %v4530, %v3819
        %v4532 = vmax.f32 %v4531, %v3823
        %v4533 = vmax.f32 %v4532, %v3829
        %v4534 = vmax.f32 %v4533, %v3833
        %v4535 = vrot.slane %v4534, 4
        %v4536 = vmax.f32 %v4534, %v4535
        %v4537 = vrot.slane %v4536, 2
        %v4538 = vmax.f32 %v4536, %v4537
        %v4539 = vrot.slane %v4538, 1
        %v4540 = vmax.f32 %v4538, %v4539
        %v4541 = vmax.f32 %v3521, %v3525
        %v4542 = vmax.f32 %v4541, %v3531
        %v4543 = vmax.f32 %v4542, %v3535
        %v4544 = vmax.f32 %v4543, %v3541
        %v4545 = vmax.f32 %v4544, %v3545
        %v4546 = vmax.f32 %v4545, %v3551
        %v4547 = vmax.f32 %v4546, %v3555
        %v4548 = vmax.f32 %v4547, %v3561
        %v4549 = vmax.f32 %v4548, %v3565
        %v4550 = vmax.f32 %v4549, %v3571
        %v4551 = vmax.f32 %v4550, %v3575
        %v4552 = vmax.f32 %v4551, %v3581
        %v4553 = vmax.f32 %v4552, %v3585
        %v4554 = vmax.f32 %v4553, %v3591
        %v4555 = vmax.f32 %v4554, %v3595
        %v4556 = vmax.f32 %v4555, %v3601
        %v4557 = vmax.f32 %v4556, %v3605
        %v4558 = vmax.f32 %v4557, %v3611
        %v4559 = vmax.f32 %v4558, %v3615
        %v4560 = vmax.f32 %v4559, %v3621
        %v4561 = vmax.f32 %v4560, %v3625
        %v4562 = vmax.f32 %v4561, %v3631
        %v4563 = vmax.f32 %v4562, %v3635
        %v4564 = vmax.f32 %v4563, %v3641
        %v4565 = vmax.f32 %v4564, %v3645
        %v4566 = vmax.f32 %v4565, %v3651
        %v4567 = vmax.f32 %v4566, %v3655
        %v4568 = vmax.f32 %v4567, %v3661
        %v4569 = vmax.f32 %v4568, %v3665
        %v4570 = vmax.f32 %v4569, %v3671
        %v4571 = vmax.f32 %v4570, %v3675
        %v4572 = vmax.f32 %v4571, %v3681
        %v4573 = vmax.f32 %v4572, %v3685
        %v4574 = vmax.f32 %v4573, %v3691
        %v4575 = vmax.f32 %v4574, %v3695
        %v4576 = vmax.f32 %v4575, %v3701
        %v4577 = vmax.f32 %v4576, %v3705
        %v4578 = vmax.f32 %v4577, %v3711
        %v4579 = vmax.f32 %v4578, %v3715
        %v4580 = vmax.f32 %v4579, %v3721
        %v4581 = vmax.f32 %v4580, %v3725
        %v4582 = vmax.f32 %v4581, %v3731
        %v4583 = vmax.f32 %v4582, %v3735
        %v4584 = vmax.f32 %v4583, %v3741
        %v4585 = vmax.f32 %v4584, %v3745
        %v4586 = vmax.f32 %v4585, %v3751
        %v4587 = vmax.f32 %v4586, %v3755
        %v4588 = vmax.f32 %v4587, %v3761
        %v4589 = vmax.f32 %v4588, %v3765
        %v4590 = vmax.f32 %v4589, %v3771
        %v4591 = vmax.f32 %v4590, %v3775
        %v4592 = vmax.f32 %v4591, %v3781
        %v4593 = vmax.f32 %v4592, %v3785
        %v4594 = vmax.f32 %v4593, %v3791
        %v4595 = vmax.f32 %v4594, %v3795
        %v4596 = vmax.f32 %v4595, %v3801
        %v4597 = vmax.f32 %v4596, %v3805
        %v4598 = vmax.f32 %v4597, %v3811
        %v4599 = vmax.f32 %v4598, %v3815
        %v4600 = vmax.f32 %v4599, %v3821
        %v4601 = vmax.f32 %v4600, %v3825
        %v4602 = vmax.f32 %v4601, %v3831
        %v4603 = vmax.f32 %v4602, %v3835
        %v4604 = vrot.slane %v4603, 4
        %v4605 = vmax.f32 %v4603, %v4604
        %v4606 = vrot.slane %v4605, 2
        %v4607 = vmax.f32 %v4605, %v4606
        %v4608 = vrot.slane %v4607, 1
        %v4609 = vmax.f32 %v4607, %v4608
        %v4610 = vmax.f32 %v3872, %v3876
        %v4611 = vmax.f32 %v4610, %v3882
        %v4612 = vmax.f32 %v4611, %v3886
        %v4613 = vmax.f32 %v4612, %v3892
        %v4614 = vmax.f32 %v4613, %v3896
        %v4615 = vmax.f32 %v4614, %v3902
        %v4616 = vmax.f32 %v4615, %v3906
        %v4617 = vmax.f32 %v4616, %v3912
        %v4618 = vmax.f32 %v4617, %v3916
        %v4619 = vmax.f32 %v4618, %v3922
        %v4620 = vmax.f32 %v4619, %v3926
        %v4621 = vmax.f32 %v4620, %v3932
        %v4622 = vmax.f32 %v4621, %v3936
        %v4623 = vmax.f32 %v4622, %v3942
        %v4624 = vmax.f32 %v4623, %v3946
        %v4625 = vmax.f32 %v4624, %v3952
        %v4626 = vmax.f32 %v4625, %v3956
        %v4627 = vmax.f32 %v4626, %v3962
        %v4628 = vmax.f32 %v4627, %v3966
        %v4629 = vmax.f32 %v4628, %v3972
        %v4630 = vmax.f32 %v4629, %v3976
        %v4631 = vmax.f32 %v4630, %v3982
        %v4632 = vmax.f32 %v4631, %v3986
        %v4633 = vmax.f32 %v4632, %v3992
        %v4634 = vmax.f32 %v4633, %v3996
        %v4635 = vmax.f32 %v4634, %v4002
        %v4636 = vmax.f32 %v4635, %v4006
        %v4637 = vmax.f32 %v4636, %v4012
        %v4638 = vmax.f32 %v4637, %v4016
        %v4639 = vmax.f32 %v4638, %v4022
        %v4640 = vmax.f32 %v4639, %v4026
        %v4641 = vmax.f32 %v4640, %v4032
        %v4642 = vmax.f32 %v4641, %v4036
        %v4643 = vmax.f32 %v4642, %v4042
        %v4644 = vmax.f32 %v4643, %v4046
        %v4645 = vmax.f32 %v4644, %v4052
        %v4646 = vmax.f32 %v4645, %v4056
        %v4647 = vmax.f32 %v4646, %v4062
        %v4648 = vmax.f32 %v4647, %v4066
        %v4649 = vmax.f32 %v4648, %v4072
        %v4650 = vmax.f32 %v4649, %v4076
        %v4651 = vmax.f32 %v4650, %v4082
        %v4652 = vmax.f32 %v4651, %v4086
        %v4653 = vmax.f32 %v4652, %v4092
        %v4654 = vmax.f32 %v4653, %v4096
        %v4655 = vmax.f32 %v4654, %v4102
        %v4656 = vmax.f32 %v4655, %v4106
        %v4657 = vmax.f32 %v4656, %v4112
        %v4658 = vmax.f32 %v4657, %v4116
        %v4659 = vmax.f32 %v4658, %v4122
        %v4660 = vmax.f32 %v4659, %v4126
        %v4661 = vmax.f32 %v4660, %v4132
        %v4662 = vmax.f32 %v4661, %v4136
        %v4663 = vmax.f32 %v4662, %v4142
        %v4664 = vmax.f32 %v4663, %v4146
        %v4665 = vmax.f32 %v4664, %v4152
        %v4666 = vmax.f32 %v4665, %v4156
        %v4667 = vmax.f32 %v4666, %v4162
        %v4668 = vmax.f32 %v4667, %v4166
        %v4669 = vmax.f32 %v4668, %v4172
        %v4670 = vmax.f32 %v4669, %v4176
        %v4671 = vmax.f32 %v4670, %v4182
        %v4672 = vmax.f32 %v4671, %v4186
        %v4673 = vrot.slane %v4672, 4
        %v4674 = vmax.f32 %v4672, %v4673
        %v4675 = vrot.slane %v4674, 2
        %v4676 = vmax.f32 %v4674, %v4675
        %v4677 = vrot.slane %v4676, 1
        %v4678 = vmax.f32 %v4676, %v4677
        %v4679 = vmax.f32 %v3874, %v3878
        %v4680 = vmax.f32 %v4679, %v3884
        %v4681 = vmax.f32 %v4680, %v3888
        %v4682 = vmax.f32 %v4681, %v3894
        %v4683 = vmax.f32 %v4682, %v3898
        %v4684 = vmax.f32 %v4683, %v3904
        %v4685 = vmax.f32 %v4684, %v3908
        %v4686 = vmax.f32 %v4685, %v3914
        %v4687 = vmax.f32 %v4686, %v3918
        %v4688 = vmax.f32 %v4687, %v3924
        %v4689 = vmax.f32 %v4688, %v3928
        %v4690 = vmax.f32 %v4689, %v3934
        %v4691 = vmax.f32 %v4690, %v3938
        %v4692 = vmax.f32 %v4691, %v3944
        %v4693 = vmax.f32 %v4692, %v3948
        %v4694 = vmax.f32 %v4693, %v3954
        %v4695 = vmax.f32 %v4694, %v3958
        %v4696 = vmax.f32 %v4695, %v3964
        %v4697 = vmax.f32 %v4696, %v3968
        %v4698 = vmax.f32 %v4697, %v3974
        %v4699 = vmax.f32 %v4698, %v3978
        %v4700 = vmax.f32 %v4699, %v3984
        %v4701 = vmax.f32 %v4700, %v3988
        %v4702 = vmax.f32 %v4701, %v3994
        %v4703 = vmax.f32 %v4702, %v3998
        %v4704 = vmax.f32 %v4703, %v4004
        %v4705 = vmax.f32 %v4704, %v4008
        %v4706 = vmax.f32 %v4705, %v4014
        %v4707 = vmax.f32 %v4706, %v4018
        %v4708 = vmax.f32 %v4707, %v4024
        %v4709 = vmax.f32 %v4708, %v4028
        %v4710 = vmax.f32 %v4709, %v4034
        %v4711 = vmax.f32 %v4710, %v4038
        %v4712 = vmax.f32 %v4711, %v4044
        %v4713 = vmax.f32 %v4712, %v4048
        %v4714 = vmax.f32 %v4713, %v4054
        %v4715 = vmax.f32 %v4714, %v4058
        %v4716 = vmax.f32 %v4715, %v4064
        %v4717 = vmax.f32 %v4716, %v4068
        %v4718 = vmax.f32 %v4717, %v4074
        %v4719 = vmax.f32 %v4718, %v4078
        %v4720 = vmax.f32 %v4719, %v4084
        %v4721 = vmax.f32 %v4720, %v4088
        %v4722 = vmax.f32 %v4721, %v4094
        %v4723 = vmax.f32 %v4722, %v4098
        %v4724 = vmax.f32 %v4723, %v4104
        %v4725 = vmax.f32 %v4724, %v4108
        %v4726 = vmax.f32 %v4725, %v4114
        %v4727 = vmax.f32 %v4726, %v4118
        %v4728 = vmax.f32 %v4727, %v4124
        %v4729 = vmax.f32 %v4728, %v4128
        %v4730 = vmax.f32 %v4729, %v4134
        %v4731 = vmax.f32 %v4730, %v4138
        %v4732 = vmax.f32 %v4731, %v4144
        %v4733 = vmax.f32 %v4732, %v4148
        %v4734 = vmax.f32 %v4733, %v4154
        %v4735 = vmax.f32 %v4734, %v4158
        %v4736 = vmax.f32 %v4735, %v4164
        %v4737 = vmax.f32 %v4736, %v4168
        %v4738 = vmax.f32 %v4737, %v4174
        %v4739 = vmax.f32 %v4738, %v4178
        %v4740 = vmax.f32 %v4739, %v4184
        %v4741 = vmax.f32 %v4740, %v4188
        %v4742 = vrot.slane %v4741, 4
        %v4743 = vmax.f32 %v4741, %v4742
        %v4744 = vrot.slane %v4743, 2
        %v4745 = vmax.f32 %v4743, %v4744
        %v4746 = vrot.slane %v4745, 1
        %v4747 = vmax.f32 %v4745, %v4746
        %v4756 = vcombine.low %v4264, %v4333
        %v4757 = vcombine.low %v4402, %v4471
        %v4758 = vcombine.low %v4540, %v4609
        %v4759 = vcombine.low %v4678, %v4747
        %v4761 = vunpack.c.l.s4 1966171168
        %v4762 = vunpack.c.0.s8 %v4761
        %v4763 = vlaneseq
        %v4764 = vshrl.u32 %v4763, 7
        %v4765 = vsub.s32 %v4762, %v4764
        %v4766 = vrot.slane %v4756, %v4765
        %v4768 = vunpack.c.l.s4 1966171168
        %v4769 = vunpack.c.0.s8 %v4768
        %v4770 = vlaneseq
        %v4771 = vshrl.u32 %v4770, 7
        %v4772 = vsub.s32 %v4769, %v4771
        %v4773 = vrot.slane %v4757, %v4772
        %v4775 = vunpack.c.l.s4 1966171168
        %v4776 = vunpack.c.0.s8 %v4775
        %v4777 = vlaneseq
        %v4778 = vshrl.u32 %v4777, 7
        %v4779 = vsub.s32 %v4776, %v4778
        %v4780 = vrot.slane %v4758, %v4779
        %v4782 = vunpack.c.l.s4 1966171168
        %v4783 = vunpack.c.0.s8 %v4782
        %v4784 = vlaneseq
        %v4785 = vshrl.u32 %v4784, 7
        %v4786 = vsub.s32 %v4783, %v4785
        %v4787 = vrot.slane %v4759, %v4786
        %v4788 = vcombine.low %v4766, %v4773
        %v4789 = vcombine.low %v4780, %v4787
        %v4791 = vunpack.c.l.s4 1966171168
        %v4792 = vunpack.c.0.s8 %v4791
        %v4793 = vlaneseq
        %v4794 = vshrl.u32 %v4793, 7
        %v4795 = vsub.s32 %v4792, %v4794
        %v4796 = vrot.slane %v4788, %v4795
        %v4798 = vunpack.c.l.s4 1966171168
        %v4799 = vunpack.c.0.s8 %v4798
        %v4800 = vlaneseq
        %v4801 = vshrl.u32 %v4800, 7
        %v4802 = vsub.s32 %v4799, %v4801
        %v4803 = vrot.slane %v4789, %v4802
        %v4804 = vcombine.low %v4796, %v4803
        %v4806 = vmax.f32 %v4195, %v4804
        %4807 = vst [vmem:[%s344] sm:$0xff] %v4806
        %4808 = vst [vmem:[%s330] sm:$0xff] %v2250
        %4809 = vst [vmem:[%s330 + $0x8] sm:$0xff] %v2282
        %4810 = vst [vmem:[%s330 + $0x10] sm:$0xff] %v2314
        %4811 = vst [vmem:[%s330 + $0x18] sm:$0xff] %v2346
        %4812 = vst [vmem:[%s330 + $0x20] sm:$0xff] %v2251
        %4813 = vst [vmem:[%s330 + $0x28] sm:$0xff] %v2283
        %4814 = vst [vmem:[%s330 + $0x30] sm:$0xff] %v2315
        %4815 = vst [vmem:[%s330 + $0x38] sm:$0xff] %v2347
        %4816 = vst [vmem:[%s330 + $0x40] sm:$0xff] %v2252
        %4817 = vst [vmem:[%s330 + $0x48] sm:$0xff] %v2284
        %4818 = vst [vmem:[%s330 + $0x50] sm:$0xff] %v2316
        %4819 = vst [vmem:[%s330 + $0x58] sm:$0xff] %v2348
        %4820 = vst [vmem:[%s330 + $0x60] sm:$0xff] %v2253
        %4821 = vst [vmem:[%s330 + $0x68] sm:$0xff] %v2285
        %4822 = vst [vmem:[%s330 + $0x70] sm:$0xff] %v2317
        %4823 = vst [vmem:[%s330 + $0x78] sm:$0xff] %v2349
        %4824 = vst [vmem:[%s330 + $0x80] sm:$0xff] %v2254
        %4825 = vst [vmem:[%s330 + $0x88] sm:$0xff] %v2286
        %4826 = vst [vmem:[%s330 + $0x90] sm:$0xff] %v2318
        %4827 = vst [vmem:[%s330 + $0x98] sm:$0xff] %v2350
        %4828 = vst [vmem:[%s330 + $0xa0] sm:$0xff] %v2255
        %4829 = vst [vmem:[%s330 + $0xa8] sm:$0xff] %v2287
        %4830 = vst [vmem:[%s330 + $0xb0] sm:$0xff] %v2319
        %4831 = vst [vmem:[%s330 + $0xb8] sm:$0xff] %v2351
        %4832 = vst [vmem:[%s330 + $0xc0] sm:$0xff] %v2256
        %4833 = vst [vmem:[%s330 + $0xc8] sm:$0xff] %v2288
        %4834 = vst [vmem:[%s330 + $0xd0] sm:$0xff] %v2320
        %4835 = vst [vmem:[%s330 + $0xd8] sm:$0xff] %v2352
        %4836 = vst [vmem:[%s330 + $0xe0] sm:$0xff] %v2257
        %4837 = vst [vmem:[%s330 + $0xe8] sm:$0xff] %v2289
        %4838 = vst [vmem:[%s330 + $0xf0] sm:$0xff] %v2321
        %4839 = vst [vmem:[%s330 + $0xf8] sm:$0xff] %v2353
        %4840 = vst [vmem:[%s330 + $0x100] sm:$0xff] %v2258
        %4841 = vst [vmem:[%s330 + $0x108] sm:$0xff] %v2290
        %4842 = vst [vmem:[%s330 + $0x110] sm:$0xff] %v2322
        %4843 = vst [vmem:[%s330 + $0x118] sm:$0xff] %v2354
        %4844 = vst [vmem:[%s330 + $0x120] sm:$0xff] %v2259
        %4845 = vst [vmem:[%s330 + $0x128] sm:$0xff] %v2291
        %4846 = vst [vmem:[%s330 + $0x130] sm:$0xff] %v2323
        %4847 = vst [vmem:[%s330 + $0x138] sm:$0xff] %v2355
        %4848 = vst [vmem:[%s330 + $0x140] sm:$0xff] %v2260
        %4849 = vst [vmem:[%s330 + $0x148] sm:$0xff] %v2292
        %4850 = vst [vmem:[%s330 + $0x150] sm:$0xff] %v2324
        %4851 = vst [vmem:[%s330 + $0x158] sm:$0xff] %v2356
        %4852 = vst [vmem:[%s330 + $0x160] sm:$0xff] %v2261
        %4853 = vst [vmem:[%s330 + $0x168] sm:$0xff] %v2293
        %4854 = vst [vmem:[%s330 + $0x170] sm:$0xff] %v2325
        %4855 = vst [vmem:[%s330 + $0x178] sm:$0xff] %v2357
        %4856 = vst [vmem:[%s330 + $0x180] sm:$0xff] %v2262
        %4857 = vst [vmem:[%s330 + $0x188] sm:$0xff] %v2294
        %4858 = vst [vmem:[%s330 + $0x190] sm:$0xff] %v2326
        %4859 = vst [vmem:[%s330 + $0x198] sm:$0xff] %v2358
        %4860 = vst [vmem:[%s330 + $0x1a0] sm:$0xff] %v2263
        %4861 = vst [vmem:[%s330 + $0x1a8] sm:$0xff] %v2295
        %4862 = vst [vmem:[%s330 + $0x1b0] sm:$0xff] %v2327
        %4863 = vst [vmem:[%s330 + $0x1b8] sm:$0xff] %v2359
        %4864 = vst [vmem:[%s330 + $0x1c0] sm:$0xff] %v2264
        %4865 = vst [vmem:[%s330 + $0x1c8] sm:$0xff] %v2296
        %4866 = vst [vmem:[%s330 + $0x1d0] sm:$0xff] %v2328
        %4867 = vst [vmem:[%s330 + $0x1d8] sm:$0xff] %v2360
        %4868 = vst [vmem:[%s330 + $0x1e0] sm:$0xff] %v2265
        %4869 = vst [vmem:[%s330 + $0x1e8] sm:$0xff] %v2297
        %4870 = vst [vmem:[%s330 + $0x1f0] sm:$0xff] %v2329
        %4871 = vst [vmem:[%s330 + $0x1f8] sm:$0xff] %v2361
        // Predicated region
        $region53: #{pointnetfeat_return2.1} parent=47 // pred_check
          %p4872 = pneg %p4190
        $region54: #{pointnetfeat_return2.1} parent=47 // pred_check_branch
          %4874 = sbr.rel (%p4872) target = $region56
        $region55: #{pointnetfeat_return2.1} parent=47 // pred_region
          %v4875 = vld [vmem:[%s344] sm:$0xff]
          %v4876 = vld [vmem:[%s6] sm:$0xff]
          %v4877 = vadd.f32 %v4875, %v4876
          %4878 = vst [vmem:[%s344] sm:$0xff] %v4877
        $region56: #{pointnetfeat_return2.1} parent=47 // pred_fallthru
          _
        %p4879 = scmp.lt.s32.totalorder %s27, 1
        %s4880 = scalar_select %p4879, %s27, 1
        %s4881 = smul.addr %s4880, 8
        %s4882 = scalar_lea.vmem %s7, %s4881
        %s4883 = sand.u32 %s225, 1
        %s4884 = scalar_lea.sflag [#allocation3], %s4883
        %s4885 = sand.u32 %s225, 1
        %s4886 = smul.addr %s4885, 512
        %s4887 = scalar_lea.vmem [#allocation2], %s4886
        // Predicated region
        $region57: #{pointnetfeat_return2.1} parent=47 // pred_check
          %p4888 = pneg %p207
        $region58: #{pointnetfeat_return2.1} parent=47 // pred_check_branch
          %4890 = sbr.rel (%p4888) target = $region60
        $region59: #{pointnetfeat_return2.1} parent=47 // pred_region
          _
        $region60: #{pointnetfeat_return2.1} parent=47 // pred_fallthru
          _
        // Predicated region
        $region61: #{pointnetfeat_return2.1} parent=47 // pred_check
          %p4891 = pneg %p235
        $region62: #{pointnetfeat_return2.1} parent=47 // pred_check_branch
          %4893 = sbr.rel (%p4891) target = $region64
        $region63: #{pointnetfeat_return2.1} parent=47 // pred_region
          %s4894 = smul.u32 4, %s28
          %s4896 = ssub.s32 8192, 8192
          %4897 = vsyncadd %s4884, %s4896
          %s4898 = smul.addr %s27, 64
          %s4899 = sadd.s32 %s4894, %s4898
          %s4900 = smul.addr %s4899, 128
          %s4901 = scalar_lea.hbm %s8, %s4900
          %s4902 = sshll.u32 %s4887, 4
          %s4903 = int_to_ptr.vmem [resolvable:$true] %s4902
          %4908 = dma.vmem_to_hbm [thread:$0]  %s4903, 8192, %s4901, %s4884, 512, 512, 32
        $region64: #{pointnetfeat_return2.1} parent=47 // pred_fallthru
          _
      $region48: #{pointnetfeat_return2.1} parent=5 // pred_fallthru
        _
      %p4909 = scmp.le.s32.totalorder 2, %s18
      // Predicated region
      $region65: #{pointnetfeat_return2.1} parent=5 // pred_check
        %p4910 = pneg %p4909
      $region66: #{pointnetfeat_return2.1} parent=5 // pred_check_branch
        %4912 = sbr.rel (%p4910) target = $region68
      $region67: #{pointnetfeat_return2.1} parent=5 // pred_region
        %s4913 = ssub.s32 %s18, 2
        // Predicated region
        $region69: #{pointnetfeat_return2.1} parent=67 // pred_check
          %p4914 = pneg %p213
        $region70: #{pointnetfeat_return2.1} parent=67 // pred_check_branch
          %4916 = sbr.rel (%p4914) target = $region72
        $region71: #{pointnetfeat_return2.1} parent=67 // pred_region
          %p4917 = scmp.lt.s32.totalorder %s29, 1
          %s4918 = scalar_select %p4917, %s29, 1
          %s4919 = smul.addr %s4918, 8
          %s4920 = scalar_lea.vmem %s7, %s4919
        $region72: #{pointnetfeat_return2.1} parent=67 // pred_fallthru
          _
        // Predicated region
        $region73: #{pointnetfeat_return2.1} parent=67 // pred_check
          %p4921 = pneg %p241
        $region74: #{pointnetfeat_return2.1} parent=67 // pred_check_branch
          %4923 = sbr.rel (%p4921) target = $region76
        $region75: #{pointnetfeat_return2.1} parent=67 // pred_region
          %s4924 = sand.u32 %s226, 1
          %s4925 = scalar_lea.sflag [#allocation3], %s4924
          %s4926 = sand.u32 %s226, 1
          %s4927 = smul.addr %s4926, 512
          %s4928 = scalar_lea.vmem [#allocation2], %s4927
          %4929 = dma.done %s4925, 8192
        $region76: #{pointnetfeat_return2.1} parent=67 // pred_fallthru
          _
      $region68: #{pointnetfeat_return2.1} parent=5 // pred_fallthru
        _
    $region6: #{pointnetfeat_return2.1} parent=1 // loop_footer
      %s22 = sadd.s32 1, %s18
    $region7: #{pointnetfeat_return2.1} parent=1 // loop_footer_branch
      %17 = sbr.rel target = $region3
    $region8: #{pointnetfeat_return2.1} parent=1 // loop_exit
      _
    %4930 = vsyncpa [#allocation3], 1
    %s4931 = scalar_lea.sflag [#allocation3], 1
    %4932 = vsyncpa %s4931, 1

</llo_original>
